<compile_context>
chip_gen: v6e
topology: v6e:2x2x1
jax: 0.10.0
libtpu: 0.0.40
codegen_flags: <defaults>
</compile_context>

<pallas_src>
import functools

import jax
import jax.numpy as jnp
from jax.experimental import pallas as pl
from jax.experimental.pallas import tpu as pltpu


# ---------------------------------------------------------------------------
# small helpers
# ---------------------------------------------------------------------------
def _round_up(x, m):
    return ((x + m - 1) // m) * m


def _pick_tile(d, pref, base):
    """Largest tile <= pref that divides d (d is pre-padded to a multiple of base)."""
    if d <= pref:
        return d
    t = (pref // base) * base
    while t >= base:
        if d % t == 0:
            return t
        t -= base
    return d


# ---------------------------------------------------------------------------
# generic tiled matmul kernel (hoisted projections + readout)
# ---------------------------------------------------------------------------
def _matmul_kernel(a_ref, b_ref, o_ref, acc_ref):
    @pl.when(pl.program_id(2) == 0)
    def _():
        acc_ref[...] = jnp.zeros_like(acc_ref)

    acc_ref[...] += jnp.dot(a_ref[...], b_ref[...],
                            preferred_element_type=jnp.float32)

    @pl.when(pl.program_id(2) == pl.num_programs(2) - 1)
    def _():
        o_ref[...] = acc_ref[...]


def matmul_pallas(a, b):
    M, K = a.shape
    _, N = b.shape
    tm = _pick_tile(M, 256, 8)
    tn = _pick_tile(N, 512, 128)
    tk = _pick_tile(K, 512, 128)
    return pl.pallas_call(
        _matmul_kernel,
        out_shape=jax.ShapeDtypeStruct((M, N), jnp.float32),
        grid_spec=pltpu.PrefetchScalarGridSpec(
            num_scalar_prefetch=0,
            grid=(M // tm, N // tn, K // tk),
            in_specs=[pl.BlockSpec((tm, tk), lambda i, j, k: (i, k)),
                      pl.BlockSpec((tk, tn), lambda i, j, k: (k, j))],
            out_specs=pl.BlockSpec((tm, tn), lambda i, j, k: (i, j)),
            scratch_shapes=[pltpu.VMEM((tm, tn), jnp.float32)]),
        compiler_params=pltpu.CompilerParams(
            dimension_semantics=("parallel", "parallel", "arbitrary")),
    )(a, b)


# ---------------------------------------------------------------------------
# fused bidirectional encoder LSTM: one kernel, grid over time
# ---------------------------------------------------------------------------
def _bilstm_kernel(Hp, xf_ref, xb_ref, whhf_ref, whhb_ref,
                   fh_ref, bh_ref, cff_ref, cbf_ref,
                   hf_s, cf_s, hb_s, cb_s):
    t = pl.program_id(0)

    @pl.when(t == 0)
    def _():
        hf_s[...] = jnp.zeros_like(hf_s)
        cf_s[...] = jnp.zeros_like(cf_s)
        hb_s[...] = jnp.zeros_like(hb_s)
        cb_s[...] = jnp.zeros_like(cb_s)

    def step(xproj, h, c, whh_ref):
        gates = xproj + jnp.dot(h, whh_ref[...],
                                preferred_element_type=jnp.float32)
        i = jax.nn.sigmoid(gates[:, 0:Hp])
        f = jax.nn.sigmoid(gates[:, Hp:2 * Hp])
        g = jnp.tanh(gates[:, 2 * Hp:3 * Hp])
        o = jax.nn.sigmoid(gates[:, 3 * Hp:4 * Hp])
        c_new = f * c + i * g
        h_new = o * jnp.tanh(c_new)
        return h_new, c_new

    hf, cf = step(xf_ref[0], hf_s[...], cf_s[...], whhf_ref)
    hb, cb = step(xb_ref[0], hb_s[...], cb_s[...], whhb_ref)

    hf_s[...] = hf; cf_s[...] = cf
    hb_s[...] = hb; cb_s[...] = cb

    fh_ref[0] = hf                 # hidden state at source position t
    bh_ref[0] = hb                 # hidden state at source position L-1-t
    cff_ref[...] = cf              # last write (t = L-1) is the final fwd cell
    cbf_ref[...] = cb              # last write (source pos 0) is the final bwd cell


def bilstm_pallas(xproj_f, xproj_b, whh_f, whh_b, Hp):
    L, Bp, fourHp = xproj_f.shape
    return pl.pallas_call(
        functools.partial(_bilstm_kernel, Hp),
        out_shape=(jax.ShapeDtypeStruct((L, Bp, Hp), jnp.float32),
                   jax.ShapeDtypeStruct((L, Bp, Hp), jnp.float32),
                   jax.ShapeDtypeStruct((Bp, Hp), jnp.float32),
                   jax.ShapeDtypeStruct((Bp, Hp), jnp.float32)),
        grid_spec=pltpu.PrefetchScalarGridSpec(
            num_scalar_prefetch=0,
            grid=(L,),
            in_specs=[
                pl.BlockSpec((1, Bp, fourHp), lambda t: (t, 0, 0)),
                pl.BlockSpec((1, Bp, fourHp), lambda t: (L - 1 - t, 0, 0)),
                pl.BlockSpec((Hp, fourHp), lambda t: (0, 0)),      # resident
                pl.BlockSpec((Hp, fourHp), lambda t: (0, 0)),      # resident
            ],
            out_specs=(
                pl.BlockSpec((1, Bp, Hp), lambda t: (t, 0, 0)),
                pl.BlockSpec((1, Bp, Hp), lambda t: (L - 1 - t, 0, 0)),
                pl.BlockSpec((Bp, Hp), lambda t: (0, 0)),
                pl.BlockSpec((Bp, Hp), lambda t: (0, 0)),
            ),
            scratch_shapes=[pltpu.VMEM((Bp, Hp), jnp.float32)
                            for _ in range(4)]),
        compiler_params=pltpu.CompilerParams(
            dimension_semantics=("arbitrary",)),
    )(xproj_f, xproj_b, whh_f, whh_b)


# ---------------------------------------------------------------------------
# decoder_cell_init (single small kernel, one launch total)
# ---------------------------------------------------------------------------
def _cell_init_kernel(cf_ref, cb_ref, wf_ref, wb_ref, b_ref,
                      cell_ref, state_ref):
    cell = (jnp.dot(cf_ref[...], wf_ref[...], preferred_element_type=jnp.float32)
            + jnp.dot(cb_ref[...], wb_ref[...], preferred_element_type=jnp.float32)
            + b_ref[...])
    cell_ref[...] = cell
    state_ref[...] = jnp.tanh(cell)


def cell_init_pallas(c_fwd, c_bwd, w_f, w_b, b):
    Bp, Hp = c_fwd.shape
    vmem = lambda: pl.BlockSpec(memory_space=pltpu.MemorySpace.VMEM)
    return pl.pallas_call(
        _cell_init_kernel,
        out_shape=(jax.ShapeDtypeStruct((Bp, Hp), jnp.float32),
                   jax.ShapeDtypeStruct((Bp, Hp), jnp.float32)),
        in_specs=[vmem() for _ in range(5)],
        out_specs=(vmem(), vmem()),
    )(c_fwd, c_bwd, w_f, w_b, b)


# ---------------------------------------------------------------------------
# fused decoder: LSTMCell + dot-product attention, grid over target time
# (readout matmul hoisted out; att_t stacked over T is the only output)
# ---------------------------------------------------------------------------
def _decoder_kernel(Hp, yproj_ref, wa_ref, whh_ref, senc_ref, sencatt_ref,
                    wavh_ref, wavc_ref, h0_ref, c0_ref,
                    att_out_ref, h_s, c_s, a_s):
    t = pl.program_id(0)

    @pl.when(t == 0)
    def _():
        h_s[...] = h0_ref[...]
        c_s[...] = c0_ref[...]
        a_s[...] = jnp.zeros_like(a_s)

    # LSTMCell with input cat([y_embed, att_tm1]); the y_embed @ W part (and
    # bias) is precomputed in yproj, only the recurrent matmuls stay here.
    gates = (yproj_ref[0]
             + jnp.dot(a_s[...], wa_ref[...], preferred_element_type=jnp.float32)
             + jnp.dot(h_s[...], whh_ref[...], preferred_element_type=jnp.float32))
    i = jax.nn.sigmoid(gates[:, 0:Hp])
    f = jax.nn.sigmoid(gates[:, Hp:2 * Hp])
    g = jnp.tanh(gates[:, 2 * Hp:3 * Hp])
    o = jax.nn.sigmoid(gates[:, 3 * Hp:4 * Hp])
    c_t = f * c_s[...] + i * g
    h_t = o * jnp.tanh(c_t)

    # dot-product attention on the MXU (batched dot_general, q = 1)
    att_w = jnp.einsum('bqh,blh->bql', h_t[:, None, :], sencatt_ref[...],
                       preferred_element_type=jnp.float32)           # (B,1,L)
    att_w = att_w - jnp.max(att_w, axis=-1, keepdims=True)
    e = jnp.exp(att_w)
    alpha = e * pl.reciprocal(jnp.sum(e, axis=-1, keepdims=True), approx=True)
    ctx = jnp.einsum('bql,blh->bqh', alpha, senc_ref[...],
                     preferred_element_type=jnp.float32)[:, 0, :]     # (B,2H)

    att_t = jnp.tanh(
        jnp.dot(h_t, wavh_ref[...], preferred_element_type=jnp.float32)
        + jnp.dot(ctx, wavc_ref[...], preferred_element_type=jnp.float32))

    h_s[...] = h_t
    c_s[...] = c_t
    a_s[...] = att_t
    att_out_ref[0] = att_t


def decoder_pallas(yproj, wih_a, whh, senc, sencatt, w_av_h, w_av_c, h0, c0, Hp):
    T, Bp, fourHp = yproj.shape
    Lsrc = senc.shape[1]
    return pl.pallas_call(
        functools.partial(_decoder_kernel, Hp),
        out_shape=jax.ShapeDtypeStruct((T, Bp, Hp), jnp.float32),
        grid_spec=pltpu.PrefetchScalarGridSpec(
            num_scalar_prefetch=0,
            grid=(T,),
            in_specs=[
                pl.BlockSpec((1, Bp, fourHp), lambda t: (t, 0, 0)),        # yproj
                pl.BlockSpec((Hp, fourHp), lambda t: (0, 0)),              # wih_a
                pl.BlockSpec((Hp, fourHp), lambda t: (0, 0)),              # whh
                pl.BlockSpec((Bp, Lsrc, 2 * Hp), lambda t: (0, 0, 0)),     # senc
                pl.BlockSpec((Bp, Lsrc, Hp), lambda t: (0, 0, 0)),         # sencatt
                pl.BlockSpec((Hp, Hp), lambda t: (0, 0)),                  # W_av_h
                pl.BlockSpec((2 * Hp, Hp), lambda t: (0, 0)),              # W_av_c
                pl.BlockSpec((Bp, Hp), lambda t: (0, 0)),                  # h0
                pl.BlockSpec((Bp, Hp), lambda t: (0, 0)),                  # c0
            ],
            out_specs=pl.BlockSpec((1, Bp, Hp), lambda t: (t, 0, 0)),
            scratch_shapes=[pltpu.VMEM((Bp, Hp), jnp.float32)
                            for _ in range(3)]),
        compiler_params=pltpu.CompilerParams(
            dimension_semantics=("arbitrary",)),
    )(yproj, wih_a, whh, senc, sencatt, w_av_h, w_av_c, h0, c0)


# ---------------------------------------------------------------------------
# padding of parameters to (8,128)-aligned shapes (zeros => exact math)
# ---------------------------------------------------------------------------
def _pad2(w, r, c):
    return jnp.pad(w, ((0, r - w.shape[0]), (0, c - w.shape[1])))


def _pad_gates(w, in_pad, H, Hp):
    d, fourH = w.shape
    w = w.reshape(d, 4, H)
    w = jnp.pad(w, ((0, in_pad - d), (0, 0), (0, Hp - H)))
    return w.reshape(in_pad, 4 * Hp)


def _pad_gate_bias(b, H, Hp):
    b = b.reshape(1, 4, H)
    b = jnp.pad(b, ((0, 0), (0, 0), (0, Hp - H)))
    return b.reshape(1, 4 * Hp)


def _pad_cat2(w, H, Hp, out, out_p):
    # (2H, out) -> (2Hp, out_p) keeping the [first-half ; second-half] layout
    w = w.reshape(2, H, out)
    w = jnp.pad(w, ((0, 0), (0, Hp - H), (0, out_p - out)))
    return w.reshape(2 * Hp, out_p)


def _pad_params(p, E, H, V, Ep, Hp, Vp):
    return dict(
        src_embed=jnp.pad(p['src_embed'], ((0, 0), (0, Ep - E))),
        tgt_embed=jnp.pad(p['tgt_embed'], ((0, 0), (0, Ep - E))),
        enc_wih_f=_pad_gates(p['enc_wih_f'], Ep, H, Hp),
        enc_whh_f=_pad_gates(p['enc_whh_f'], Hp, H, Hp),
        enc_b_f=_pad_gate_bias(p['enc_b_f'], H, Hp),
        enc_wih_b=_pad_gates(p['enc_wih_b'], Ep, H, Hp),
        enc_whh_b=_pad_gates(p['enc_whh_b'], Hp, H, Hp),
        enc_b_b=_pad_gate_bias(p['enc_b_b'], H, Hp),
        dec_wih_e=_pad_gates(p['dec_wih_e'], Ep, H, Hp),
        dec_wih_a=_pad_gates(p['dec_wih_a'], Hp, H, Hp),
        dec_whh=_pad_gates(p['dec_whh'], Hp, H, Hp),
        dec_b=_pad_gate_bias(p['dec_b'], H, Hp),
        W_att_src=_pad_cat2(p['W_att_src'], H, Hp, H, Hp),
        W_av_h=_pad2(p['W_av_h'], Hp, Hp),
        W_av_c=_pad_cat2(p['W_av_c'], H, Hp, H, Hp),
        W_read=_pad2(p['W_read'], Hp, Vp),
        W_ci_f=_pad2(p['W_ci_f'], Hp, Hp),
        W_ci_b=_pad2(p['W_ci_b'], Hp, Hp),
        b_ci=jnp.pad(p['b_ci'], ((0, 0), (0, Hp - H))),
    )


# ---------------------------------------------------------------------------
# full NMT forward (Pallas path)
# ---------------------------------------------------------------------------
def nmt_forward_pallas(params, src_sents, tgt_sents):
    E = params['embed_size']
    H = params['hidden_size']
    V = params['W_read'].shape[1]
    L, B = src_sents.shape
    T = tgt_sents.shape[0]

    Bp = _round_up(B, 8)
    Hp = _round_up(H, 128)
    Ep = _round_up(E, 128)
    Vp = _round_up(V, 128)

    p = _pad_params(params, E, H, V, Ep, Hp, Vp)

    # pad batch with <pad>=0 tokens (zero embedding row -> benign extra rows)
    src_p = jnp.pad(src_sents, ((0, 0), (0, Bp - B)))
    tgt_p = jnp.pad(tgt_sents, ((0, 0), (0, Bp - B)))

    src_emb = jnp.take(p['src_embed'], src_p, axis=0)                 # (L,Bp,Ep)
    tgt_emb = jnp.take(p['tgt_embed'], tgt_p, axis=0)                 # (T,Bp,Ep)

    # ---- encode: hoisted input projections + fused bidirectional LSTM ----
    src_flat = src_emb.reshape(L * Bp, Ep)
    xproj_f = (matmul_pallas(src_flat, p['enc_wih_f'])
               + p['enc_b_f']).reshape(L, Bp, 4 * Hp)
    xproj_b = (matmul_pallas(src_flat, p['enc_wih_b'])
               + p['enc_b_b']).reshape(L, Bp, 4 * Hp)

    fwd_h, bwd_h, c_fwd_fin, c_bwd_fin = bilstm_pallas(
        xproj_f, xproj_b, p['enc_whh_f'], p['enc_whh_b'], Hp)

    # src_encodings (batch-major) and their attention projection
    senc = jnp.transpose(jnp.concatenate([fwd_h, bwd_h], axis=-1),
                         (1, 0, 2))                                   # (Bp,L,2Hp)
    sencatt = matmul_pallas(senc.reshape(Bp * L, 2 * Hp),
                            p['W_att_src']).reshape(Bp, L, Hp)

    dec_init_cell, dec_init_state = cell_init_pallas(
        c_fwd_fin, c_bwd_fin, p['W_ci_f'], p['W_ci_b'], p['b_ci'])

    # ---- decode: hoisted input projection + fused recurrent kernel ----
    yproj = (matmul_pallas(tgt_emb.reshape(T * Bp, Ep), p['dec_wih_e'])
             + p['dec_b']).reshape(T, Bp, 4 * Hp)

    att_all = decoder_pallas(yproj, p['dec_wih_a'], p['dec_whh'],
                             senc, sencatt, p['W_av_h'], p['W_av_c'],
                             dec_init_state, dec_init_cell, Hp)       # (T,Bp,Hp)

    # readout hoisted out of the recurrence: one big (T*Bp,Hp)@(Hp,Vp) matmul
    scores = matmul_pallas(att_all.reshape(T * Bp, Hp),
                           p['W_read']).reshape(T, Bp, Vp)
    return scores[:, :B, :V]


# ---------------------------------------------------------------------------
# pure-JAX reference (unpadded) for numerical verification
# ---------------------------------------------------------------------------
def nmt_forward_ref(params, src_sents, tgt_sents):
    H = params['hidden_size']
    L, B = src_sents.shape
    T = tgt_sents.shape[0]

    def lstm_step(x, h, c, wih, whh, b):
        gates = x @ wih + h @ whh + b
        i = jax.nn.sigmoid(gates[:, 0:H])
        f = jax.nn.sigmoid(gates[:, H:2 * H])
        g = jnp.tanh(gates[:, 2 * H:3 * H])
        o = jax.nn.sigmoid(gates[:, 3 * H:4 * H])
        c2 = f * c + i * g
        return o * jnp.tanh(c2), c2

    src_emb = jnp.take(params['src_embed'], src_sents, axis=0)
    h = c = jnp.zeros((B, H), jnp.float32)
    fwd = []
    for t in range(L):
        h, c = lstm_step(src_emb[t], h, c, params['enc_wih_f'],
                         params['enc_whh_f'], params['enc_b_f'])
        fwd.append(h)
    c_fwd = c
    h = c = jnp.zeros((B, H), jnp.float32)
    bwd = [None] * L
    for t in range(L - 1, -1, -1):
        h, c = lstm_step(src_emb[t], h, c, params['enc_wih_b'],
                         params['enc_whh_b'], params['enc_b_b'])
        bwd[t] = h
    c_bwd = c

    senc = jnp.stack([jnp.concatenate([fwd[t], bwd[t]], 1) for t in range(L)], 0)
    senc_b = jnp.transpose(senc, (1, 0, 2))                            # (B,L,2H)
    sencatt = senc_b @ params['W_att_src']                             # (B,L,H)

    cell = c_fwd @ params['W_ci_f'] + c_bwd @ params['W_ci_b'] + params['b_ci']
    h_dec, c_dec = jnp.tanh(cell), cell

    tgt_emb = jnp.take(params['tgt_embed'], tgt_sents, axis=0)
    att = jnp.zeros((B, H), jnp.float32)
    scores = []
    for t in range(T):
        gates = (tgt_emb[t] @ params['dec_wih_e'] + att @ params['dec_wih_a']
                 + h_dec @ params['dec_whh'] + params['dec_b'])
        i = jax.nn.sigmoid(gates[:, 0:H])
        f = jax.nn.sigmoid(gates[:, H:2 * H])
        g = jnp.tanh(gates[:, 2 * H:3 * H])
        o = jax.nn.sigmoid(gates[:, 3 * H:4 * H])
        c_dec = f * c_dec + i * g
        h_dec = o * jnp.tanh(c_dec)
        att_w = jnp.einsum('blh,bh->bl', sencatt, h_dec)
        alpha = jax.nn.softmax(att_w, axis=-1)
        ctx = jnp.einsum('bl,blh->bh', alpha, senc_b)
        att = jnp.tanh(h_dec @ params['W_av_h'] + ctx @ params['W_av_c'])
        scores.append(att @ params['W_read'])
    return jnp.stack(scores, axis=0)


# ---------------------------------------------------------------------------
# deterministic parameter init (shapes as implied by NMT.__init__)
# ---------------------------------------------------------------------------
def init_params(key, V_src, V_tgt, E, H):
    ks = jax.random.split(key, 19)
    u = lambda k, shape: jax.random.uniform(k, shape, jnp.float32, -0.1, 0.1)
    src_embed = u(ks[0], (V_src, E)).at[0].set(0.0)   # padding_idx = <pad> = 0
    tgt_embed = u(ks[1], (V_tgt, E)).at[0].set(0.0)
    return dict(
        embed_size=E, hidden_size=H,
        src_embed=src_embed, tgt_embed=tgt_embed,
        # encoder bidirectional LSTM (weights pre-transposed, biases combined)
        enc_wih_f=u(ks[2], (E, 4 * H)), enc_whh_f=u(ks[3], (H, 4 * H)),
        enc_b_f=u(ks[4], (1, 4 * H)),
        enc_wih_b=u(ks[5], (E, 4 * H)), enc_whh_b=u(ks[6], (H, 4 * H)),
        enc_b_b=u(ks[7], (1, 4 * H)),
        # decoder LSTMCell (input = cat([embed, att]) -> split weight)
        dec_wih_e=u(ks[8], (E, 4 * H)), dec_wih_a=u(ks[9], (H, 4 * H)),
        dec_whh=u(ks[10], (H, 4 * H)), dec_b=u(ks[11], (1, 4 * H)),
        # att_src_linear (2H -> H, no bias)
        W_att_src=u(ks[12], (2 * H, H)),
        # att_vec_linear (3H -> H, no bias), split for cat([h, ctx])
        W_av_h=u(ks[13], (H, H)), W_av_c=u(ks[14], (2 * H, H)),
        # readout (H -> V_tgt, no bias)
        W_read=u(ks[15], (H, V_tgt)),
        # decoder_cell_init (2H -> H, with bias), split for cat([c_fwd, c_bwd])
        W_ci_f=u(ks[16], (H, H)), W_ci_b=u(ks[17], (H, H)),
        b_ci=u(ks[18], (1, H)),
    )


if __name__ == "__main__":
    V_src, V_tgt = 16, 16
    E, H = 32, 32
    L, T, B = 8, 8, 2

    key = jax.random.PRNGKey(0)
    pkey, skey, tkey = jax.random.split(key, 3)
    params = init_params(pkey, V_src, V_tgt, E, H)

    src_sents = jax.random.randint(skey, (L, B), 1, V_src, dtype=jnp.int32)
    tgt_sents = jax.random.randint(tkey, (T, B), 1, V_tgt, dtype=jnp.int32)

    fwd = jax.jit(lambda s, t: nmt_forward_pallas(params, s, t))
    scores = jax.block_until_ready(fwd(src_sents, tgt_sents))

    ref_scores = nmt_forward_ref(params, src_sents, tgt_sents)

    assert scores.shape == (T, B, V_tgt), scores.shape
    max_err = float(jnp.max(jnp.abs(scores - ref_scores)))
    # 5e-3 tolerance: approx-reciprocal softmax + MXU f32 accumulation paths.
    assert jnp.allclose(scores, ref_scores, atol=5e-3, rtol=5e-3), max_err

    print("KERNEL_OK")
</pallas_src>

<mosaic_0001>
module attributes {stable_mosaic.version = 11 : i64} {
  func.func @_matmul_kernel(%arg0: i32, %arg1: i32, %arg2: i32, %arg3: memref<64x128xf32, #tpu.memory_space<vmem>>, %arg4: memref<128x512xf32, #tpu.memory_space<vmem>>, %arg5: memref<64x512xf32, #tpu.memory_space<vmem>>, %arg6: memref<64x512xf32, #tpu.memory_space<vmem>>) attributes {dimension_semantics = [#tpu.dimension_semantics<parallel>, #tpu.dimension_semantics<parallel>, #tpu.dimension_semantics<arbitrary>], iteration_bounds = array<i64: 1, 1, 1>, scalar_prefetch = 0 : i64, scratch_operands = 1 : i64, tpu.core_type = #tpu.core_type<tc>, window_params = [{transform_indices = @transform_0, window_bounds = array<i64: 64, 128>}, {transform_indices = @transform_1, window_bounds = array<i64: 128, 512>}, {transform_indices = @transform_2, window_bounds = array<i64: 64, 512>}]} {
    %c0_i32 = arith.constant 0 : i32
    %0 = arith.cmpi eq, %arg2, %c0_i32 : i32
    %1 = arith.extui %0 : i1 to i32
    %c0_i32_0 = arith.constant 0 : i32
    %2 = arith.cmpi ne, %1, %c0_i32_0 : i32
    scf.if %2 {
      %cst_10 = arith.constant 0.000000e+00 : f32
      %12 = vector.broadcast %cst_10 : f32 to vector<64x512xf32>
      %c0_11 = arith.constant 0 : index
      %c0_12 = arith.constant 0 : index
      %13 = vector.load %arg6[%c0_11, %c0_12] : memref<64x512xf32, #tpu.memory_space<vmem>>, vector<64x512xf32>
      tpu.vector_store %arg6[%c0_11, %c0_12], %12 {strides = array<i32>} : memref<64x512xf32, #tpu.memory_space<vmem>>, vector<64x512xf32>,
    } else {
    }
    %c0 = arith.constant 0 : index
    %c0_1 = arith.constant 0 : index
    %3 = vector.load %arg6[%c0, %c0_1] : memref<64x512xf32, #tpu.memory_space<vmem>>, vector<64x512xf32>
    %c0_2 = arith.constant 0 : index
    %c0_3 = arith.constant 0 : index
    %4 = vector.load %arg3[%c0_2, %c0_3] : memref<64x128xf32, #tpu.memory_space<vmem>>, vector<64x128xf32>
    %c0_4 = arith.constant 0 : index
    %c0_5 = arith.constant 0 : index
    %5 = vector.load %arg4[%c0_4, %c0_5] : memref<128x512xf32, #tpu.memory_space<vmem>>, vector<128x512xf32>
    %cst = arith.constant dense<0.000000e+00> : vector<64x512xf32>
    %6 = tpu.matmul %4, %5, %cst {dimension_numbers = #tpu.dot_dimension_numbers<[1], [0], [0], [1], [0, 0, 1, 1], [], []>} : vector<64x128xf32>, vector<128x512xf32>, vector<64x512xf32> -> vector<64x512xf32>
    %7 = arith.addf %3, %6 : vector<64x512xf32>
    %c0_6 = arith.constant 0 : index
    %c0_7 = arith.constant 0 : index
    %8 = vector.load %arg6[%c0_6, %c0_7] : memref<64x512xf32, #tpu.memory_space<vmem>>, vector<64x512xf32>
    tpu.vector_store %arg6[%c0_6, %c0_7], %7 {strides = array<i32>} : memref<64x512xf32, #tpu.memory_space<vmem>>, vector<64x512xf32>,
    %c0_i32_8 = arith.constant 0 : i32
    %9 = arith.cmpi eq, %arg2, %c0_i32_8 : i32
    %10 = arith.extui %9 : i1 to i32
    %c0_i32_9 = arith.constant 0 : i32
    %11 = arith.cmpi ne, %10, %c0_i32_9 : i32
    scf.if %11 {
      %c0_10 = arith.constant 0 : index
      %c0_11 = arith.constant 0 : index
      %12 = vector.load %arg6[%c0_10, %c0_11] : memref<64x512xf32, #tpu.memory_space<vmem>>, vector<64x512xf32>
      %c0_12 = arith.constant 0 : index
      %c0_13 = arith.constant 0 : index
      %13 = vector.load %arg5[%c0_12, %c0_13] : memref<64x512xf32, #tpu.memory_space<vmem>>, vector<64x512xf32>
      tpu.vector_store %arg5[%c0_12, %c0_13], %12 {strides = array<i32>} : memref<64x512xf32, #tpu.memory_space<vmem>>, vector<64x512xf32>,
    } else {
    }
    return
  }
  func.func @transform_0(%arg0: i32, %arg1: i32, %arg2: i32) -> (i32, i32) {
    %c0_i32 = arith.constant 0 : i32
    return %arg0, %arg2 : i32, i32
  }
  func.func @transform_1(%arg0: i32, %arg1: i32, %arg2: i32) -> (i32, i32) {
    %c0_i32 = arith.constant 0 : i32
    return %arg2, %arg1 : i32, i32
  }
  func.func @transform_2(%arg0: i32, %arg1: i32, %arg2: i32) -> (i32, i32) {
    %c0_i32 = arith.constant 0 : i32
    return %arg0, %arg1 : i32, i32
  }
}

module attributes {stable_mosaic.version = 11 : i64} {
  func.func @_cell_init_kernel(%arg0: memref<8x128xf32, #tpu.memory_space<vmem>>, %arg1: memref<8x128xf32, #tpu.memory_space<vmem>>, %arg2: memref<128x128xf32, #tpu.memory_space<vmem>>, %arg3: memref<128x128xf32, #tpu.memory_space<vmem>>, %arg4: memref<1x128xf32, #tpu.memory_space<vmem>>, %arg5: memref<8x128xf32, #tpu.memory_space<vmem>>, %arg6: memref<8x128xf32, #tpu.memory_space<vmem>>) attributes {dimension_semantics = [], scalar_prefetch = 0 : i64, scratch_operands = 0 : i64, tpu.core_type = #tpu.core_type<tc>} {
    %c0 = arith.constant 0 : index
    %c0_0 = arith.constant 0 : index
    %0 = vector.load %arg0[%c0, %c0_0] : memref<8x128xf32, #tpu.memory_space<vmem>>, vector<8x128xf32>
    %c0_1 = arith.constant 0 : index
    %c0_2 = arith.constant 0 : index
    %1 = vector.load %arg2[%c0_1, %c0_2] : memref<128x128xf32, #tpu.memory_space<vmem>>, vector<128x128xf32>
    %cst = arith.constant dense<0.000000e+00> : vector<8x128xf32>
    %2 = tpu.matmul %0, %1, %cst {dimension_numbers = #tpu.dot_dimension_numbers<[1], [0], [0], [1], [0, 0, 1, 1], [], []>} : vector<8x128xf32>, vector<128x128xf32>, vector<8x128xf32> -> vector<8x128xf32>
    %c0_3 = arith.constant 0 : index
    %c0_4 = arith.constant 0 : index
    %3 = vector.load %arg1[%c0_3, %c0_4] : memref<8x128xf32, #tpu.memory_space<vmem>>, vector<8x128xf32>
    %c0_5 = arith.constant 0 : index
    %c0_6 = arith.constant 0 : index
    %4 = vector.load %arg3[%c0_5, %c0_6] : memref<128x128xf32, #tpu.memory_space<vmem>>, vector<128x128xf32>
    %cst_7 = arith.constant dense<0.000000e+00> : vector<8x128xf32>
    %5 = tpu.matmul %3, %4, %cst_7 {dimension_numbers = #tpu.dot_dimension_numbers<[1], [0], [0], [1], [0, 0, 1, 1], [], []>} : vector<8x128xf32>, vector<128x128xf32>, vector<8x128xf32> -> vector<8x128xf32>
    %6 = arith.addf %2, %5 : vector<8x128xf32>
    %c0_8 = arith.constant 0 : index
    %c0_9 = arith.constant 0 : index
    %7 = vector.load %arg4[%c0_8, %c0_9] : memref<1x128xf32, #tpu.memory_space<vmem>>, vector<1x128xf32>
    %8 = vector.broadcast %7 : vector<1x128xf32> to vector<8x128xf32>
    %9 = arith.addf %6, %8 : vector<8x128xf32>
    %c0_10 = arith.constant 0 : index
    %c0_11 = arith.constant 0 : index
    %10 = vector.load %arg5[%c0_10, %c0_11] : memref<8x128xf32, #tpu.memory_space<vmem>>, vector<8x128xf32>
    tpu.vector_store %arg5[%c0_10, %c0_11], %9 {strides = array<i32>} : memref<8x128xf32, #tpu.memory_space<vmem>>, vector<8x128xf32>,
    %11 = math.tanh %9 : vector<8x128xf32>
    %c0_12 = arith.constant 0 : index
    %c0_13 = arith.constant 0 : index
    %12 = vector.load %arg6[%c0_12, %c0_13] : memref<8x128xf32, #tpu.memory_space<vmem>>, vector<8x128xf32>
    tpu.vector_store %arg6[%c0_12, %c0_13], %11 {strides = array<i32>} : memref<8x128xf32, #tpu.memory_space<vmem>>, vector<8x128xf32>,
    return
  }
}

module attributes {stable_mosaic.version = 11 : i64} {
  func.func @_bilstm_kernel(%arg0: i32, %arg1: memref<1x8x512xf32, #tpu.memory_space<vmem>>, %arg2: memref<1x8x512xf32, #tpu.memory_space<vmem>>, %arg3: memref<128x512xf32, #tpu.memory_space<vmem>>, %arg4: memref<128x512xf32, #tpu.memory_space<vmem>>, %arg5: memref<1x8x128xf32, #tpu.memory_space<vmem>>, %arg6: memref<1x8x128xf32, #tpu.memory_space<vmem>>, %arg7: memref<8x128xf32, #tpu.memory_space<vmem>>, %arg8: memref<8x128xf32, #tpu.memory_space<vmem>>, %arg9: memref<8x128xf32, #tpu.memory_space<vmem>>, %arg10: memref<8x128xf32, #tpu.memory_space<vmem>>, %arg11: memref<8x128xf32, #tpu.memory_space<vmem>>, %arg12: memref<8x128xf32, #tpu.memory_space<vmem>>) attributes {dimension_semantics = [#tpu.dimension_semantics<arbitrary>], iteration_bounds = array<i64: 8>, scalar_prefetch = 0 : i64, scratch_operands = 4 : i64, tpu.core_type = #tpu.core_type<tc>, window_params = [{transform_indices = @transform_0, window_bounds = array<i64: 1, 8, 512>}, {transform_indices = @transform_1, window_bounds = array<i64: 1, 8, 512>}, {pipeline_mode = #tpu.pipeline_mode<synchronous>, transform_indices = @transform_2, window_bounds = array<i64: 128, 512>}, {pipeline_mode = #tpu.pipeline_mode<synchronous>, transform_indices = @transform_3, window_bounds = array<i64: 128, 512>}, {transform_indices = @transform_4, window_bounds = array<i64: 1, 8, 128>}, {transform_indices = @transform_5, window_bounds = array<i64: 1, 8, 128>}, {pipeline_mode = #tpu.pipeline_mode<synchronous>, transform_indices = @transform_6, window_bounds = array<i64: 8, 128>}, {pipeline_mode = #tpu.pipeline_mode<synchronous>, transform_indices = @transform_7, window_bounds = array<i64: 8, 128>}]} {
    %c0_i32 = arith.constant 0 : i32
    %0 = arith.cmpi eq, %arg0, %c0_i32 : i32
    %1 = arith.extui %0 : i1 to i32
    %c0_i32_0 = arith.constant 0 : i32
    %2 = arith.cmpi ne, %1, %c0_i32_0 : i32
    scf.if %2 {
      %cst_43 = arith.constant 0.000000e+00 : f32
      %79 = vector.broadcast %cst_43 : f32 to vector<8x128xf32>
      %c0_44 = arith.constant 0 : index
      %c0_45 = arith.constant 0 : index
      %80 = vector.load %arg9[%c0_44, %c0_45] : memref<8x128xf32, #tpu.memory_space<vmem>>, vector<8x128xf32>
      tpu.vector_store %arg9[%c0_44, %c0_45], %79 {strides = array<i32>} : memref<8x128xf32, #tpu.memory_space<vmem>>, vector<8x128xf32>,
      %cst_46 = arith.constant 0.000000e+00 : f32
      %81 = vector.broadcast %cst_46 : f32 to vector<8x128xf32>
      %c0_47 = arith.constant 0 : index
      %c0_48 = arith.constant 0 : index
      %82 = vector.load %arg10[%c0_47, %c0_48] : memref<8x128xf32, #tpu.memory_space<vmem>>, vector<8x128xf32>
      tpu.vector_store %arg10[%c0_47, %c0_48], %81 {strides = array<i32>} : memref<8x128xf32, #tpu.memory_space<vmem>>, vector<8x128xf32>,
      %cst_49 = arith.constant 0.000000e+00 : f32
      %83 = vector.broadcast %cst_49 : f32 to vector<8x128xf32>
      %c0_50 = arith.constant 0 : index
      %c0_51 = arith.constant 0 : index
      %84 = vector.load %arg11[%c0_50, %c0_51] : memref<8x128xf32, #tpu.memory_space<vmem>>, vector<8x128xf32>
      tpu.vector_store %arg11[%c0_50, %c0_51], %83 {strides = array<i32>} : memref<8x128xf32, #tpu.memory_space<vmem>>, vector<8x128xf32>,
      %cst_52 = arith.constant 0.000000e+00 : f32
      %85 = vector.broadcast %cst_52 : f32 to vector<8x128xf32>
      %c0_53 = arith.constant 0 : index
      %c0_54 = arith.constant 0 : index
      %86 = vector.load %arg12[%c0_53, %c0_54] : memref<8x128xf32, #tpu.memory_space<vmem>>, vector<8x128xf32>
      tpu.vector_store %arg12[%c0_53, %c0_54], %85 {strides = array<i32>} : memref<8x128xf32, #tpu.memory_space<vmem>>, vector<8x128xf32>,
    } else {
    }
    %c0 = arith.constant 0 : index
    %c0_1 = arith.constant 0 : index
    %c0_2 = arith.constant 0 : index
    %3 = vector.load %arg1[%c0, %c0_1, %c0_2] : memref<1x8x512xf32, #tpu.memory_space<vmem>>, vector<1x8x512xf32>
    %4 = vector.shape_cast %3 : vector<1x8x512xf32> to vector<8x512xf32>
    %c0_3 = arith.constant 0 : index
    %c0_4 = arith.constant 0 : index
    %5 = vector.load %arg9[%c0_3, %c0_4] : memref<8x128xf32, #tpu.memory_space<vmem>>, vector<8x128xf32>
    %c0_5 = arith.constant 0 : index
    %c0_6 = arith.constant 0 : index
    %6 = vector.load %arg10[%c0_5, %c0_6] : memref<8x128xf32, #tpu.memory_space<vmem>>, vector<8x128xf32>
    %c0_7 = arith.constant 0 : index
    %c0_8 = arith.constant 0 : index
    %7 = vector.load %arg3[%c0_7, %c0_8] : memref<128x512xf32, #tpu.memory_space<vmem>>, vector<128x512xf32>
    %cst = arith.constant dense<0.000000e+00> : vector<8x512xf32>
    %8 = tpu.matmul %5, %7, %cst {dimension_numbers = #tpu.dot_dimension_numbers<[1], [0], [0], [1], [0, 0, 1, 1], [], []>} : vector<8x128xf32>, vector<128x512xf32>, vector<8x512xf32> -> vector<8x512xf32>
    %9 = arith.addf %4, %8 : vector<8x512xf32>
    %10 = vector.extract_strided_slice %9 {offsets = [0, 0], sizes = [8, 128], strides = [1, 1]} : vector<8x512xf32> to vector<8x128xf32>
    %11 = arith.negf %10 : vector<8x128xf32>
    %12 = math.exp %11 : vector<8x128xf32>
    %cst_9 = arith.constant 1.000000e+00 : f32
    %13 = vector.broadcast %cst_9 : f32 to vector<8x128xf32>
    %14 = arith.addf %13, %12 : vector<8x128xf32>
    %15 = arith.divf %13, %14 : vector<8x128xf32>
    %16 = vector.extract_strided_slice %9 {offsets = [0, 128], sizes = [8, 128], strides = [1, 1]} : vector<8x512xf32> to vector<8x128xf32>
    %17 = arith.negf %16 : vector<8x128xf32>
    %18 = math.exp %17 : vector<8x128xf32>
    %cst_10 = arith.constant 1.000000e+00 : f32
    %19 = vector.broadcast %cst_10 : f32 to vector<8x128xf32>
    %20 = arith.addf %19, %18 : vector<8x128xf32>
    %21 = arith.divf %19, %20 : vector<8x128xf32>
    %22 = vector.extract_strided_slice %9 {offsets = [0, 256], sizes = [8, 128], strides = [1, 1]} : vector<8x512xf32> to vector<8x128xf32>
    %23 = math.tanh %22 : vector<8x128xf32>
    %24 = vector.extract_strided_slice %9 {offsets = [0, 384], sizes = [8, 128], strides = [1, 1]} : vector<8x512xf32> to vector<8x128xf32>
    %25 = arith.negf %24 : vector<8x128xf32>
    %26 = math.exp %25 : vector<8x128xf32>
    %cst_11 = arith.constant 1.000000e+00 : f32
    %27 = vector.broadcast %cst_11 : f32 to vector<8x128xf32>
    %28 = arith.addf %27, %26 : vector<8x128xf32>
    %29 = arith.divf %27, %28 : vector<8x128xf32>
    %30 = arith.mulf %21, %6 : vector<8x128xf32>
    %31 = arith.mulf %15, %23 : vector<8x128xf32>
    %32 = arith.addf %30, %31 : vector<8x128xf32>
    %33 = math.tanh %32 : vector<8x128xf32>
    %34 = arith.mulf %29, %33 : vector<8x128xf32>
    %c0_12 = arith.constant 0 : index
    %c0_13 = arith.constant 0 : index
    %c0_14 = arith.constant 0 : index
    %35 = vector.load %arg2[%c0_12, %c0_13, %c0_14] : memref<1x8x512xf32, #tpu.memory_space<vmem>>, vector<1x8x512xf32>
    %36 = vector.shape_cast %35 : vector<1x8x512xf32> to vector<8x512xf32>
    %c0_15 = arith.constant 0 : index
    %c0_16 = arith.constant 0 : index
    %37 = vector.load %arg11[%c0_15, %c0_16] : memref<8x128xf32, #tpu.memory_space<vmem>>, vector<8x128xf32>
    %c0_17 = arith.constant 0 : index
    %c0_18 = arith.constant 0 : index
    %38 = vector.load %arg12[%c0_17, %c0_18] : memref<8x128xf32, #tpu.memory_space<vmem>>, vector<8x128xf32>
    %c0_19 = arith.constant 0 : index
    %c0_20 = arith.constant 0 : index
    %39 = vector.load %arg4[%c0_19, %c0_20] : memref<128x512xf32, #tpu.memory_space<vmem>>, vector<128x512xf32>
    %cst_21 = arith.constant dense<0.000000e+00> : vector<8x512xf32>
    %40 = tpu.matmul %37, %39, %cst_21 {dimension_numbers = #tpu.dot_dimension_numbers<[1], [0], [0], [1], [0, 0, 1, 1], [], []>} : vector<8x128xf32>, vector<128x512xf32>, vector<8x512xf32> -> vector<8x512xf32>
    %41 = arith.addf %36, %40 : vector<8x512xf32>
    %42 = vector.extract_strided_slice %41 {offsets = [0, 0], sizes = [8, 128], strides = [1, 1]} : vector<8x512xf32> to vector<8x128xf32>
    %43 = arith.negf %42 : vector<8x128xf32>
    %44 = math.exp %43 : vector<8x128xf32>
    %cst_22 = arith.constant 1.000000e+00 : f32
    %45 = vector.broadcast %cst_22 : f32 to vector<8x128xf32>
    %46 = arith.addf %45, %44 : vector<8x128xf32>
    %47 = arith.divf %45, %46 : vector<8x128xf32>
    %48 = vector.extract_strided_slice %41 {offsets = [0, 128], sizes = [8, 128], strides = [1, 1]} : vector<8x512xf32> to vector<8x128xf32>
    %49 = arith.negf %48 : vector<8x128xf32>
    %50 = math.exp %49 : vector<8x128xf32>
    %cst_23 = arith.constant 1.000000e+00 : f32
    %51 = vector.broadcast %cst_23 : f32 to vector<8x128xf32>
    %52 = arith.addf %51, %50 : vector<8x128xf32>
    %53 = arith.divf %51, %52 : vector<8x128xf32>
    %54 = vector.extract_strided_slice %41 {offsets = [0, 256], sizes = [8, 128], strides = [1, 1]} : vector<8x512xf32> to vector<8x128xf32>
    %55 = math.tanh %54 : vector<8x128xf32>
    %56 = vector.extract_strided_slice %41 {offsets = [0, 384], sizes = [8, 128], strides = [1, 1]} : vector<8x512xf32> to vector<8x128xf32>
    %57 = arith.negf %56 : vector<8x128xf32>
    %58 = math.exp %57 : vector<8x128xf32>
    %cst_24 = arith.constant 1.000000e+00 : f32
    %59 = vector.broadcast %cst_24 : f32 to vector<8x128xf32>
    %60 = arith.addf %59, %58 : vector<8x128xf32>
    %61 = arith.divf %59, %60 : vector<8x128xf32>
    %62 = arith.mulf %53, %38 : vector<8x128xf32>
    %63 = arith.mulf %47, %55 : vector<8x128xf32>
    %64 = arith.addf %62, %63 : vector<8x128xf32>
    %65 = math.tanh %64 : vector<8x128xf32>
    %66 = arith.mulf %61, %65 : vector<8x128xf32>
    %c0_25 = arith.constant 0 : index
    %c0_26 = arith.constant 0 : index
    %67 = vector.load %arg9[%c0_25, %c0_26] : memref<8x128xf32, #tpu.memory_space<vmem>>, vector<8x128xf32>
    tpu.vector_store %arg9[%c0_25, %c0_26], %34 {strides = array<i32>} : memref<8x128xf32, #tpu.memory_space<vmem>>, vector<8x128xf32>,
    %c0_27 = arith.constant 0 : index
    %c0_28 = arith.constant 0 : index
    %68 = vector.load %arg10[%c0_27, %c0_28] : memref<8x128xf32, #tpu.memory_space<vmem>>, vector<8x128xf32>
    tpu.vector_store %arg10[%c0_27, %c0_28], %32 {strides = array<i32>} : memref<8x128xf32, #tpu.memory_space<vmem>>, vector<8x128xf32>,
    %c0_29 = arith.constant 0 : index
    %c0_30 = arith.constant 0 : index
    %69 = vector.load %arg11[%c0_29, %c0_30] : memref<8x128xf32, #tpu.memory_space<vmem>>, vector<8x128xf32>
    tpu.vector_store %arg11[%c0_29, %c0_30], %66 {strides = array<i32>} : memref<8x128xf32, #tpu.memory_space<vmem>>, vector<8x128xf32>,
    %c0_31 = arith.constant 0 : index
    %c0_32 = arith.constant 0 : index
    %70 = vector.load %arg12[%c0_31, %c0_32] : memref<8x128xf32, #tpu.memory_space<vmem>>, vector<8x128xf32>
    tpu.vector_store %arg12[%c0_31, %c0_32], %64 {strides = array<i32>} : memref<8x128xf32, #tpu.memory_space<vmem>>, vector<8x128xf32>,
    %c0_33 = arith.constant 0 : index
    %c0_34 = arith.constant 0 : index
    %c0_35 = arith.constant 0 : index
    %71 = vector.load %arg5[%c0_33, %c0_34, %c0_35] : memref<1x8x128xf32, #tpu.memory_space<vmem>>, vector<1x8x128xf32>
    %72 = vector.shape_cast %71 : vector<1x8x128xf32> to vector<8x128xf32>
    %73 = vector.shape_cast %34 : vector<8x128xf32> to vector<1x8x128xf32>
    tpu.vector_store %arg5[%c0_33, %c0_34, %c0_35], %73 {strides = array<i32>} : memref<1x8x128xf32, #tpu.memory_space<vmem>>, vector<1x8x128xf32>,
    %c0_36 = arith.constant 0 : index
    %c0_37 = arith.constant 0 : index
    %c0_38 = arith.constant 0 : index
    %74 = vector.load %arg6[%c0_36, %c0_37, %c0_38] : memref<1x8x128xf32, #tpu.memory_space<vmem>>, vector<1x8x128xf32>
    %75 = vector.shape_cast %74 : vector<1x8x128xf32> to vector<8x128xf32>
    %76 = vector.shape_cast %66 : vector<8x128xf32> to vector<1x8x128xf32>
    tpu.vector_store %arg6[%c0_36, %c0_37, %c0_38], %76 {strides = array<i32>} : memref<1x8x128xf32, #tpu.memory_space<vmem>>, vector<1x8x128xf32>,
    %c0_39 = arith.constant 0 : index
    %c0_40 = arith.constant 0 : index
    %77 = vector.load %arg7[%c0_39, %c0_40] : memref<8x128xf32, #tpu.memory_space<vmem>>, vector<8x128xf32>
    tpu.vector_store %arg7[%c0_39, %c0_40], %32 {strides = array<i32>} : memref<8x128xf32, #tpu.memory_space<vmem>>, vector<8x128xf32>,
    %c0_41 = arith.constant 0 : index
    %c0_42 = arith.constant 0 : index
    %78 = vector.load %arg8[%c0_41, %c0_42] : memref<8x128xf32, #tpu.memory_space<vmem>>, vector<8x128xf32>
    tpu.vector_store %arg8[%c0_41, %c0_42], %64 {strides = array<i32>} : memref<8x128xf32, #tpu.memory_space<vmem>>, vector<8x128xf32>,
    return
  }
  func.func @transform_0(%arg0: i32) -> (i32, i32, i32) {
    %c0_i32 = arith.constant 0 : i32
    %c0_i32_0 = arith.constant 0 : i32
    %c0_i32_1 = arith.constant 0 : i32
    return %arg0, %c0_i32, %c0_i32_0 : i32, i32, i32
  }
  func.func @transform_1(%arg0: i32) -> (i32, i32, i32) {
    %c7_i32 = arith.constant 7 : i32
    %0 = arith.subi %c7_i32, %arg0 : i32
    %c0_i32 = arith.constant 0 : i32
    %c0_i32_0 = arith.constant 0 : i32
    %c0_i32_1 = arith.constant 0 : i32
    return %0, %c0_i32, %c0_i32_0 : i32, i32, i32
  }
  func.func @transform_2(%arg0: i32) -> (i32, i32) {
    %c0_i32 = arith.constant 0 : i32
    %c0_i32_0 = arith.constant 0 : i32
    %c0_i32_1 = arith.constant 0 : i32
    return %c0_i32, %c0_i32_0 : i32, i32
  }
  func.func @transform_3(%arg0: i32) -> (i32, i32) {
    %c0_i32 = arith.constant 0 : i32
    %c0_i32_0 = arith.constant 0 : i32
    %c0_i32_1 = arith.constant 0 : i32
    return %c0_i32, %c0_i32_0 : i32, i32
  }
  func.func @transform_4(%arg0: i32) -> (i32, i32, i32) {
    %c0_i32 = arith.constant 0 : i32
    %c0_i32_0 = arith.constant 0 : i32
    %c0_i32_1 = arith.constant 0 : i32
    return %arg0, %c0_i32, %c0_i32_0 : i32, i32, i32
  }
  func.func @transform_5(%arg0: i32) -> (i32, i32, i32) {
    %c7_i32 = arith.constant 7 : i32
    %0 = arith.subi %c7_i32, %arg0 : i32
    %c0_i32 = arith.constant 0 : i32
    %c0_i32_0 = arith.constant 0 : i32
    %c0_i32_1 = arith.constant 0 : i32
    return %0, %c0_i32, %c0_i32_0 : i32, i32, i32
  }
  func.func @transform_6(%arg0: i32) -> (i32, i32) {
    %c0_i32 = arith.constant 0 : i32
    %c0_i32_0 = arith.constant 0 : i32
    %c0_i32_1 = arith.constant 0 : i32
    return %c0_i32, %c0_i32_0 : i32, i32
  }
  func.func @transform_7(%arg0: i32) -> (i32, i32) {
    %c0_i32 = arith.constant 0 : i32
    %c0_i32_0 = arith.constant 0 : i32
    %c0_i32_1 = arith.constant 0 : i32
    return %c0_i32, %c0_i32_0 : i32, i32
  }
}

module attributes {stable_mosaic.version = 11 : i64} {
  func.func @_matmul_kernel(%arg0: i32, %arg1: i32, %arg2: i32, %arg3: memref<64x256xf32, #tpu.memory_space<vmem>>, %arg4: memref<256x128xf32, #tpu.memory_space<vmem>>, %arg5: memref<64x128xf32, #tpu.memory_space<vmem>>, %arg6: memref<64x128xf32, #tpu.memory_space<vmem>>) attributes {dimension_semantics = [#tpu.dimension_semantics<parallel>, #tpu.dimension_semantics<parallel>, #tpu.dimension_semantics<arbitrary>], iteration_bounds = array<i64: 1, 1, 1>, scalar_prefetch = 0 : i64, scratch_operands = 1 : i64, tpu.core_type = #tpu.core_type<tc>, window_params = [{transform_indices = @transform_0, window_bounds = array<i64: 64, 256>}, {transform_indices = @transform_1, window_bounds = array<i64: 256, 128>}, {transform_indices = @transform_2, window_bounds = array<i64: 64, 128>}]} {
    %c0_i32 = arith.constant 0 : i32
    %0 = arith.cmpi eq, %arg2, %c0_i32 : i32
    %1 = arith.extui %0 : i1 to i32
    %c0_i32_0 = arith.constant 0 : i32
    %2 = arith.cmpi ne, %1, %c0_i32_0 : i32
    scf.if %2 {
      %cst_10 = arith.constant 0.000000e+00 : f32
      %12 = vector.broadcast %cst_10 : f32 to vector<64x128xf32>
      %c0_11 = arith.constant 0 : index
      %c0_12 = arith.constant 0 : index
      %13 = vector.load %arg6[%c0_11, %c0_12] : memref<64x128xf32, #tpu.memory_space<vmem>>, vector<64x128xf32>
      tpu.vector_store %arg6[%c0_11, %c0_12], %12 {strides = array<i32>} : memref<64x128xf32, #tpu.memory_space<vmem>>, vector<64x128xf32>,
    } else {
    }
    %c0 = arith.constant 0 : index
    %c0_1 = arith.constant 0 : index
    %3 = vector.load %arg6[%c0, %c0_1] : memref<64x128xf32, #tpu.memory_space<vmem>>, vector<64x128xf32>
    %c0_2 = arith.constant 0 : index
    %c0_3 = arith.constant 0 : index
    %4 = vector.load %arg3[%c0_2, %c0_3] : memref<64x256xf32, #tpu.memory_space<vmem>>, vector<64x256xf32>
    %c0_4 = arith.constant 0 : index
    %c0_5 = arith.constant 0 : index
    %5 = vector.load %arg4[%c0_4, %c0_5] : memref<256x128xf32, #tpu.memory_space<vmem>>, vector<256x128xf32>
    %cst = arith.constant dense<0.000000e+00> : vector<64x128xf32>
    %6 = tpu.matmul %4, %5, %cst {dimension_numbers = #tpu.dot_dimension_numbers<[1], [0], [0], [1], [0, 0, 1, 1], [], []>} : vector<64x256xf32>, vector<256x128xf32>, vector<64x128xf32> -> vector<64x128xf32>
    %7 = arith.addf %3, %6 : vector<64x128xf32>
    %c0_6 = arith.constant 0 : index
    %c0_7 = arith.constant 0 : index
    %8 = vector.load %arg6[%c0_6, %c0_7] : memref<64x128xf32, #tpu.memory_space<vmem>>, vector<64x128xf32>
    tpu.vector_store %arg6[%c0_6, %c0_7], %7 {strides = array<i32>} : memref<64x128xf32, #tpu.memory_space<vmem>>, vector<64x128xf32>,
    %c0_i32_8 = arith.constant 0 : i32
    %9 = arith.cmpi eq, %arg2, %c0_i32_8 : i32
    %10 = arith.extui %9 : i1 to i32
    %c0_i32_9 = arith.constant 0 : i32
    %11 = arith.cmpi ne, %10, %c0_i32_9 : i32
    scf.if %11 {
      %c0_10 = arith.constant 0 : index
      %c0_11 = arith.constant 0 : index
      %12 = vector.load %arg6[%c0_10, %c0_11] : memref<64x128xf32, #tpu.memory_space<vmem>>, vector<64x128xf32>
      %c0_12 = arith.constant 0 : index
      %c0_13 = arith.constant 0 : index
      %13 = vector.load %arg5[%c0_12, %c0_13] : memref<64x128xf32, #tpu.memory_space<vmem>>, vector<64x128xf32>
      tpu.vector_store %arg5[%c0_12, %c0_13], %12 {strides = array<i32>} : memref<64x128xf32, #tpu.memory_space<vmem>>, vector<64x128xf32>,
    } else {
    }
    return
  }
  func.func @transform_0(%arg0: i32, %arg1: i32, %arg2: i32) -> (i32, i32) {
    %c0_i32 = arith.constant 0 : i32
    return %arg0, %arg2 : i32, i32
  }
  func.func @transform_1(%arg0: i32, %arg1: i32, %arg2: i32) -> (i32, i32) {
    %c0_i32 = arith.constant 0 : i32
    return %arg2, %arg1 : i32, i32
  }
  func.func @transform_2(%arg0: i32, %arg1: i32, %arg2: i32) -> (i32, i32) {
    %c0_i32 = arith.constant 0 : i32
    return %arg0, %arg1 : i32, i32
  }
}

module attributes {stable_mosaic.version = 11 : i64} {
  func.func @_decoder_kernel(%arg0: i32, %arg1: memref<1x8x512xf32, #tpu.memory_space<vmem>>, %arg2: memref<128x512xf32, #tpu.memory_space<vmem>>, %arg3: memref<128x512xf32, #tpu.memory_space<vmem>>, %arg4: memref<8x8x256xf32, #tpu.memory_space<vmem>>, %arg5: memref<8x8x128xf32, #tpu.memory_space<vmem>>, %arg6: memref<128x128xf32, #tpu.memory_space<vmem>>, %arg7: memref<256x128xf32, #tpu.memory_space<vmem>>, %arg8: memref<8x128xf32, #tpu.memory_space<vmem>>, %arg9: memref<8x128xf32, #tpu.memory_space<vmem>>, %arg10: memref<1x8x128xf32, #tpu.memory_space<vmem>>, %arg11: memref<8x128xf32, #tpu.memory_space<vmem>>, %arg12: memref<8x128xf32, #tpu.memory_space<vmem>>, %arg13: memref<8x128xf32, #tpu.memory_space<vmem>>) attributes {dimension_semantics = [#tpu.dimension_semantics<arbitrary>], iteration_bounds = array<i64: 8>, scalar_prefetch = 0 : i64, scratch_operands = 3 : i64, tpu.core_type = #tpu.core_type<tc>, window_params = [{transform_indices = @transform_0, window_bounds = array<i64: 1, 8, 512>}, {pipeline_mode = #tpu.pipeline_mode<synchronous>, transform_indices = @transform_1, window_bounds = array<i64: 128, 512>}, {pipeline_mode = #tpu.pipeline_mode<synchronous>, transform_indices = @transform_2, window_bounds = array<i64: 128, 512>}, {pipeline_mode = #tpu.pipeline_mode<synchronous>, transform_indices = @transform_3, window_bounds = array<i64: 8, 8, 256>}, {pipeline_mode = #tpu.pipeline_mode<synchronous>, transform_indices = @transform_4, window_bounds = array<i64: 8, 8, 128>}, {pipeline_mode = #tpu.pipeline_mode<synchronous>, transform_indices = @transform_5, window_bounds = array<i64: 128, 128>}, {pipeline_mode = #tpu.pipeline_mode<synchronous>, transform_indices = @transform_6, window_bounds = array<i64: 256, 128>}, {pipeline_mode = #tpu.pipeline_mode<synchronous>, transform_indices = @transform_7, window_bounds = array<i64: 8, 128>}, {pipeline_mode = #tpu.pipeline_mode<synchronous>, transform_indices = @transform_8, window_bounds = array<i64: 8, 128>}, {transform_indices = @transform_9, window_bounds = array<i64: 1, 8, 128>}]} {
    %c0_i32 = arith.constant 0 : i32
    %0 = arith.cmpi eq, %arg0, %c0_i32 : i32
    %1 = arith.extui %0 : i1 to i32
    %c0_i32_0 = arith.constant 0 : i32
    %2 = arith.cmpi ne, %1, %c0_i32_0 : i32
    scf.if %2 {
      %c0_42 = arith.constant 0 : index
      %c0_43 = arith.constant 0 : index
      %67 = vector.load %arg8[%c0_42, %c0_43] : memref<8x128xf32, #tpu.memory_space<vmem>>, vector<8x128xf32>
      %c0_44 = arith.constant 0 : index
      %c0_45 = arith.constant 0 : index
      %68 = vector.load %arg11[%c0_44, %c0_45] : memref<8x128xf32, #tpu.memory_space<vmem>>, vector<8x128xf32>
      tpu.vector_store %arg11[%c0_44, %c0_45], %67 {strides = array<i32>} : memref<8x128xf32, #tpu.memory_space<vmem>>, vector<8x128xf32>,
      %c0_46 = arith.constant 0 : index
      %c0_47 = arith.constant 0 : index
      %69 = vector.load %arg9[%c0_46, %c0_47] : memref<8x128xf32, #tpu.memory_space<vmem>>, vector<8x128xf32>
      %c0_48 = arith.constant 0 : index
      %c0_49 = arith.constant 0 : index
      %70 = vector.load %arg12[%c0_48, %c0_49] : memref<8x128xf32, #tpu.memory_space<vmem>>, vector<8x128xf32>
      tpu.vector_store %arg12[%c0_48, %c0_49], %69 {strides = array<i32>} : memref<8x128xf32, #tpu.memory_space<vmem>>, vector<8x128xf32>,
      %cst_50 = arith.constant 0.000000e+00 : f32
      %71 = vector.broadcast %cst_50 : f32 to vector<8x128xf32>
      %c0_51 = arith.constant 0 : index
      %c0_52 = arith.constant 0 : index
      %72 = vector.load %arg13[%c0_51, %c0_52] : memref<8x128xf32, #tpu.memory_space<vmem>>, vector<8x128xf32>
      tpu.vector_store %arg13[%c0_51, %c0_52], %71 {strides = array<i32>} : memref<8x128xf32, #tpu.memory_space<vmem>>, vector<8x128xf32>,
    } else {
    }
    %c0 = arith.constant 0 : index
    %c0_1 = arith.constant 0 : index
    %c0_2 = arith.constant 0 : index
    %3 = vector.load %arg1[%c0, %c0_1, %c0_2] : memref<1x8x512xf32, #tpu.memory_space<vmem>>, vector<1x8x512xf32>
    %4 = vector.shape_cast %3 : vector<1x8x512xf32> to vector<8x512xf32>
    %c0_3 = arith.constant 0 : index
    %c0_4 = arith.constant 0 : index
    %5 = vector.load %arg13[%c0_3, %c0_4] : memref<8x128xf32, #tpu.memory_space<vmem>>, vector<8x128xf32>
    %c0_5 = arith.constant 0 : index
    %c0_6 = arith.constant 0 : index
    %6 = vector.load %arg2[%c0_5, %c0_6] : memref<128x512xf32, #tpu.memory_space<vmem>>, vector<128x512xf32>
    %cst = arith.constant dense<0.000000e+00> : vector<8x512xf32>
    %7 = tpu.matmul %5, %6, %cst {dimension_numbers = #tpu.dot_dimension_numbers<[1], [0], [0], [1], [0, 0, 1, 1], [], []>} : vector<8x128xf32>, vector<128x512xf32>, vector<8x512xf32> -> vector<8x512xf32>
    %8 = arith.addf %4, %7 : vector<8x512xf32>
    %c0_7 = arith.constant 0 : index
    %c0_8 = arith.constant 0 : index
    %9 = vector.load %arg11[%c0_7, %c0_8] : memref<8x128xf32, #tpu.memory_space<vmem>>, vector<8x128xf32>
    %c0_9 = arith.constant 0 : index
    %c0_10 = arith.constant 0 : index
    %10 = vector.load %arg3[%c0_9, %c0_10] : memref<128x512xf32, #tpu.memory_space<vmem>>, vector<128x512xf32>
    %cst_11 = arith.constant dense<0.000000e+00> : vector<8x512xf32>
    %11 = tpu.matmul %9, %10, %cst_11 {dimension_numbers = #tpu.dot_dimension_numbers<[1], [0], [0], [1], [0, 0, 1, 1], [], []>} : vector<8x128xf32>, vector<128x512xf32>, vector<8x512xf32> -> vector<8x512xf32>
    %12 = arith.addf %8, %11 : vector<8x512xf32>
    %13 = vector.extract_strided_slice %12 {offsets = [0, 0], sizes = [8, 128], strides = [1, 1]} : vector<8x512xf32> to vector<8x128xf32>
    %14 = arith.negf %13 : vector<8x128xf32>
    %15 = math.exp %14 : vector<8x128xf32>
    %cst_12 = arith.constant 1.000000e+00 : f32
    %16 = vector.broadcast %cst_12 : f32 to vector<8x128xf32>
    %17 = arith.addf %16, %15 : vector<8x128xf32>
    %18 = arith.divf %16, %17 : vector<8x128xf32>
    %19 = vector.extract_strided_slice %12 {offsets = [0, 128], sizes = [8, 128], strides = [1, 1]} : vector<8x512xf32> to vector<8x128xf32>
    %20 = arith.negf %19 : vector<8x128xf32>
    %21 = math.exp %20 : vector<8x128xf32>
    %cst_13 = arith.constant 1.000000e+00 : f32
    %22 = vector.broadcast %cst_13 : f32 to vector<8x128xf32>
    %23 = arith.addf %22, %21 : vector<8x128xf32>
    %24 = arith.divf %22, %23 : vector<8x128xf32>
    %25 = vector.extract_strided_slice %12 {offsets = [0, 256], sizes = [8, 128], strides = [1, 1]} : vector<8x512xf32> to vector<8x128xf32>
    %26 = math.tanh %25 : vector<8x128xf32>
    %27 = vector.extract_strided_slice %12 {offsets = [0, 384], sizes = [8, 128], strides = [1, 1]} : vector<8x512xf32> to vector<8x128xf32>
    %28 = arith.negf %27 : vector<8x128xf32>
    %29 = math.exp %28 : vector<8x128xf32>
    %cst_14 = arith.constant 1.000000e+00 : f32
    %30 = vector.broadcast %cst_14 : f32 to vector<8x128xf32>
    %31 = arith.addf %30, %29 : vector<8x128xf32>
    %32 = arith.divf %30, %31 : vector<8x128xf32>
    %c0_15 = arith.constant 0 : index
    %c0_16 = arith.constant 0 : index
    %33 = vector.load %arg12[%c0_15, %c0_16] : memref<8x128xf32, #tpu.memory_space<vmem>>, vector<8x128xf32>
    %34 = arith.mulf %24, %33 : vector<8x128xf32>
    %35 = arith.mulf %18, %26 : vector<8x128xf32>
    %36 = arith.addf %34, %35 : vector<8x128xf32>
    %37 = math.tanh %36 : vector<8x128xf32>
    %38 = arith.mulf %32, %37 : vector<8x128xf32>
    %39 = vector.shape_cast %38 : vector<8x128xf32> to vector<8x1x128xf32>
    %c0_17 = arith.constant 0 : index
    %c0_18 = arith.constant 0 : index
    %c0_19 = arith.constant 0 : index
    %40 = vector.load %arg5[%c0_17, %c0_18, %c0_19] : memref<8x8x128xf32, #tpu.memory_space<vmem>>, vector<8x8x128xf32>
    "tpu.trace_start"() <{level = 10 : i32, message = "bqh,blh->bql"}> : () -> ()
    %cst_20 = arith.constant dense<0.000000e+00> : vector<8x1x8xf32>
    %41 = tpu.matmul %39, %40, %cst_20 {dimension_numbers = #tpu.dot_dimension_numbers<[2], [2], [1], [1], [0, 0, 0, 1, 1, 1], [0], [0]>} : vector<8x1x128xf32>, vector<8x8x128xf32>, vector<8x1x8xf32> -> vector<8x1x8xf32>
    "tpu.trace_stop"() : () -> ()
    %cst_21 = arith.constant dense<0xFF800000> : vector<8x1xf32>
    %42 = vector.multi_reduction <maximumf>, %41, %cst_21 [2] : vector<8x1x8xf32> to vector<8x1xf32>
    %43 = vector.shape_cast %42 : vector<8x1xf32> to vector<8x1x1xf32>
    %44 = vector.broadcast %43 : vector<8x1x1xf32> to vector<8x1x8xf32>
    %45 = arith.subf %41, %44 : vector<8x1x8xf32>
    %46 = math.exp %45 : vector<8x1x8xf32>
    %cst_22 = arith.constant dense<0.000000e+00> : vector<8x1xf32>
    %47 = vector.multi_reduction <add>, %46, %cst_22 [2] : vector<8x1x8xf32> to vector<8x1xf32>
    %48 = vector.shape_cast %47 : vector<8x1xf32> to vector<8x1x1xf32>
    %49 = tpu.reciprocal %48 {approx = true} : vector<8x1x1xf32> -> vector<8x1x1xf32>
    %50 = vector.broadcast %49 : vector<8x1x1xf32> to vector<8x1x8xf32>
    %51 = arith.mulf %46, %50 : vector<8x1x8xf32>
    %c0_23 = arith.constant 0 : index
    %c0_24 = arith.constant 0 : index
    %c0_25 = arith.constant 0 : index
    %52 = vector.load %arg4[%c0_23, %c0_24, %c0_25] : memref<8x8x256xf32, #tpu.memory_space<vmem>>, vector<8x8x256xf32>
    "tpu.trace_start"() <{level = 10 : i32, message = "bql,blh->bqh"}> : () -> ()
    %cst_26 = arith.constant dense<0.000000e+00> : vector<8x1x256xf32>
    %53 = tpu.matmul %51, %52, %cst_26 {dimension_numbers = #tpu.dot_dimension_numbers<[2], [1], [1], [2], [0, 0, 0, 1, 1, 2], [0], [0]>} : vector<8x1x8xf32>, vector<8x8x256xf32>, vector<8x1x256xf32> -> vector<8x1x256xf32>
    "tpu.trace_stop"() : () -> ()
    %54 = vector.shape_cast %53 : vector<8x1x256xf32> to vector<8x256xf32>
    %c0_27 = arith.constant 0 : index
    %c0_28 = arith.constant 0 : index
    %55 = vector.load %arg6[%c0_27, %c0_28] : memref<128x128xf32, #tpu.memory_space<vmem>>, vector<128x128xf32>
    %cst_29 = arith.constant dense<0.000000e+00> : vector<8x128xf32>
    %56 = tpu.matmul %38, %55, %cst_29 {dimension_numbers = #tpu.dot_dimension_numbers<[1], [0], [0], [1], [0, 0, 1, 1], [], []>} : vector<8x128xf32>, vector<128x128xf32>, vector<8x128xf32> -> vector<8x128xf32>
    %c0_30 = arith.constant 0 : index
    %c0_31 = arith.constant 0 : index
    %57 = vector.load %arg7[%c0_30, %c0_31] : memref<256x128xf32, #tpu.memory_space<vmem>>, vector<256x128xf32>
    %cst_32 = arith.constant dense<0.000000e+00> : vector<8x128xf32>
    %58 = tpu.matmul %54, %57, %cst_32 {dimension_numbers = #tpu.dot_dimension_numbers<[1], [0], [0], [1], [0, 0, 1, 1], [], []>} : vector<8x256xf32>, vector<256x128xf32>, vector<8x128xf32> -> vector<8x128xf32>
    %59 = arith.addf %56, %58 : vector<8x128xf32>
    %60 = math.tanh %59 : vector<8x128xf32>
    %c0_33 = arith.constant 0 : index
    %c0_34 = arith.constant 0 : index
    %61 = vector.load %arg11[%c0_33, %c0_34] : memref<8x128xf32, #tpu.memory_space<vmem>>, vector<8x128xf32>
    tpu.vector_store %arg11[%c0_33, %c0_34], %38 {strides = array<i32>} : memref<8x128xf32, #tpu.memory_space<vmem>>, vector<8x128xf32>,
    %c0_35 = arith.constant 0 : index
    %c0_36 = arith.constant 0 : index
    %62 = vector.load %arg12[%c0_35, %c0_36] : memref<8x128xf32, #tpu.memory_space<vmem>>, vector<8x128xf32>
    tpu.vector_store %arg12[%c0_35, %c0_36], %36 {strides = array<i32>} : memref<8x128xf32, #tpu.memory_space<vmem>>, vector<8x128xf32>,
    %c0_37 = arith.constant 0 : index
    %c0_38 = arith.constant 0 : index
    %63 = vector.load %arg13[%c0_37, %c0_38] : memref<8x128xf32, #tpu.memory_space<vmem>>, vector<8x128xf32>
    tpu.vector_store %arg13[%c0_37, %c0_38], %60 {strides = array<i32>} : memref<8x128xf32, #tpu.memory_space<vmem>>, vector<8x128xf32>,
    %c0_39 = arith.constant 0 : index
    %c0_40 = arith.constant 0 : index
    %c0_41 = arith.constant 0 : index
    %64 = vector.load %arg10[%c0_39, %c0_40, %c0_41] : memref<1x8x128xf32, #tpu.memory_space<vmem>>, vector<1x8x128xf32>
    %65 = vector.shape_cast %64 : vector<1x8x128xf32> to vector<8x128xf32>
    %66 = vector.shape_cast %60 : vector<8x128xf32> to vector<1x8x128xf32>
    tpu.vector_store %arg10[%c0_39, %c0_40, %c0_41], %66 {strides = array<i32>} : memref<1x8x128xf32, #tpu.memory_space<vmem>>, vector<1x8x128xf32>,
    return
  }
  func.func @transform_0(%arg0: i32) -> (i32, i32, i32) {
    %c0_i32 = arith.constant 0 : i32
    %c0_i32_0 = arith.constant 0 : i32
    %c0_i32_1 = arith.constant 0 : i32
    return %arg0, %c0_i32, %c0_i32_0 : i32, i32, i32
  }
  func.func @transform_1(%arg0: i32) -> (i32, i32) {
    %c0_i32 = arith.constant 0 : i32
    %c0_i32_0 = arith.constant 0 : i32
    %c0_i32_1 = arith.constant 0 : i32
    return %c0_i32, %c0_i32_0 : i32, i32
  }
  func.func @transform_2(%arg0: i32) -> (i32, i32) {
    %c0_i32 = arith.constant 0 : i32
    %c0_i32_0 = arith.constant 0 : i32
    %c0_i32_1 = arith.constant 0 : i32
    return %c0_i32, %c0_i32_0 : i32, i32
  }
  func.func @transform_3(%arg0: i32) -> (i32, i32, i32) {
    %c0_i32 = arith.constant 0 : i32
    %c0_i32_0 = arith.constant 0 : i32
    %c0_i32_1 = arith.constant 0 : i32
    %c0_i32_2 = arith.constant 0 : i32
    return %c0_i32, %c0_i32_0, %c0_i32_1 : i32, i32, i32
  }
  func.func @transform_4(%arg0: i32) -> (i32, i32, i32) {
    %c0_i32 = arith.constant 0 : i32
    %c0_i32_0 = arith.constant 0 : i32
    %c0_i32_1 = arith.constant 0 : i32
    %c0_i32_2 = arith.constant 0 : i32
    return %c0_i32, %c0_i32_0, %c0_i32_1 : i32, i32, i32
  }
  func.func @transform_5(%arg0: i32) -> (i32, i32) {
    %c0_i32 = arith.constant 0 : i32
    %c0_i32_0 = arith.constant 0 : i32
    %c0_i32_1 = arith.constant 0 : i32
    return %c0_i32, %c0_i32_0 : i32, i32
  }
  func.func @transform_6(%arg0: i32) -> (i32, i32) {
    %c0_i32 = arith.constant 0 : i32
    %c0_i32_0 = arith.constant 0 : i32
    %c0_i32_1 = arith.constant 0 : i32
    return %c0_i32, %c0_i32_0 : i32, i32
  }
  func.func @transform_7(%arg0: i32) -> (i32, i32) {
    %c0_i32 = arith.constant 0 : i32
    %c0_i32_0 = arith.constant 0 : i32
    %c0_i32_1 = arith.constant 0 : i32
    return %c0_i32, %c0_i32_0 : i32, i32
  }
  func.func @transform_8(%arg0: i32) -> (i32, i32) {
    %c0_i32 = arith.constant 0 : i32
    %c0_i32_0 = arith.constant 0 : i32
    %c0_i32_1 = arith.constant 0 : i32
    return %c0_i32, %c0_i32_0 : i32, i32
  }
  func.func @transform_9(%arg0: i32) -> (i32, i32, i32) {
    %c0_i32 = arith.constant 0 : i32
    %c0_i32_0 = arith.constant 0 : i32
    %c0_i32_1 = arith.constant 0 : i32
    return %arg0, %c0_i32, %c0_i32_0 : i32, i32, i32
  }
}

module attributes {stable_mosaic.version = 11 : i64} {
  func.func @_matmul_kernel(%arg0: i32, %arg1: i32, %arg2: i32, %arg3: memref<64x128xf32, #tpu.memory_space<vmem>>, %arg4: memref<128x128xf32, #tpu.memory_space<vmem>>, %arg5: memref<64x128xf32, #tpu.memory_space<vmem>>, %arg6: memref<64x128xf32, #tpu.memory_space<vmem>>) attributes {dimension_semantics = [#tpu.dimension_semantics<parallel>, #tpu.dimension_semantics<parallel>, #tpu.dimension_semantics<arbitrary>], iteration_bounds = array<i64: 1, 1, 1>, scalar_prefetch = 0 : i64, scratch_operands = 1 : i64, tpu.core_type = #tpu.core_type<tc>, window_params = [{transform_indices = @transform_0, window_bounds = array<i64: 64, 128>}, {transform_indices = @transform_1, window_bounds = array<i64: 128, 128>}, {transform_indices = @transform_2, window_bounds = array<i64: 64, 128>}]} {
    %c0_i32 = arith.constant 0 : i32
    %0 = arith.cmpi eq, %arg2, %c0_i32 : i32
    %1 = arith.extui %0 : i1 to i32
    %c0_i32_0 = arith.constant 0 : i32
    %2 = arith.cmpi ne, %1, %c0_i32_0 : i32
    scf.if %2 {
      %cst_10 = arith.constant 0.000000e+00 : f32
      %12 = vector.broadcast %cst_10 : f32 to vector<64x128xf32>
      %c0_11 = arith.constant 0 : index
      %c0_12 = arith.constant 0 : index
      %13 = vector.load %arg6[%c0_11, %c0_12] : memref<64x128xf32, #tpu.memory_space<vmem>>, vector<64x128xf32>
      tpu.vector_store %arg6[%c0_11, %c0_12], %12 {strides = array<i32>} : memref<64x128xf32, #tpu.memory_space<vmem>>, vector<64x128xf32>,
    } else {
    }
    %c0 = arith.constant 0 : index
    %c0_1 = arith.constant 0 : index
    %3 = vector.load %arg6[%c0, %c0_1] : memref<64x128xf32, #tpu.memory_space<vmem>>, vector<64x128xf32>
    %c0_2 = arith.constant 0 : index
    %c0_3 = arith.constant 0 : index
    %4 = vector.load %arg3[%c0_2, %c0_3] : memref<64x128xf32, #tpu.memory_space<vmem>>, vector<64x128xf32>
    %c0_4 = arith.constant 0 : index
    %c0_5 = arith.constant 0 : index
    %5 = vector.load %arg4[%c0_4, %c0_5] : memref<128x128xf32, #tpu.memory_space<vmem>>, vector<128x128xf32>
    %cst = arith.constant dense<0.000000e+00> : vector<64x128xf32>
    %6 = tpu.matmul %4, %5, %cst {dimension_numbers = #tpu.dot_dimension_numbers<[1], [0], [0], [1], [0, 0, 1, 1], [], []>} : vector<64x128xf32>, vector<128x128xf32>, vector<64x128xf32> -> vector<64x128xf32>
    %7 = arith.addf %3, %6 : vector<64x128xf32>
    %c0_6 = arith.constant 0 : index
    %c0_7 = arith.constant 0 : index
    %8 = vector.load %arg6[%c0_6, %c0_7] : memref<64x128xf32, #tpu.memory_space<vmem>>, vector<64x128xf32>
    tpu.vector_store %arg6[%c0_6, %c0_7], %7 {strides = array<i32>} : memref<64x128xf32, #tpu.memory_space<vmem>>, vector<64x128xf32>,
    %c0_i32_8 = arith.constant 0 : i32
    %9 = arith.cmpi eq, %arg2, %c0_i32_8 : i32
    %10 = arith.extui %9 : i1 to i32
    %c0_i32_9 = arith.constant 0 : i32
    %11 = arith.cmpi ne, %10, %c0_i32_9 : i32
    scf.if %11 {
      %c0_10 = arith.constant 0 : index
      %c0_11 = arith.constant 0 : index
      %12 = vector.load %arg6[%c0_10, %c0_11] : memref<64x128xf32, #tpu.memory_space<vmem>>, vector<64x128xf32>
      %c0_12 = arith.constant 0 : index
      %c0_13 = arith.constant 0 : index
      %13 = vector.load %arg5[%c0_12, %c0_13] : memref<64x128xf32, #tpu.memory_space<vmem>>, vector<64x128xf32>
      tpu.vector_store %arg5[%c0_12, %c0_13], %12 {strides = array<i32>} : memref<64x128xf32, #tpu.memory_space<vmem>>, vector<64x128xf32>,
    } else {
    }
    return
  }
  func.func @transform_0(%arg0: i32, %arg1: i32, %arg2: i32) -> (i32, i32) {
    %c0_i32 = arith.constant 0 : i32
    return %arg0, %arg2 : i32, i32
  }
  func.func @transform_1(%arg0: i32, %arg1: i32, %arg2: i32) -> (i32, i32) {
    %c0_i32 = arith.constant 0 : i32
    return %arg2, %arg1 : i32, i32
  }
  func.func @transform_2(%arg0: i32, %arg1: i32, %arg2: i32) -> (i32, i32) {
    %c0_i32 = arith.constant 0 : i32
    return %arg0, %arg1 : i32, i32
  }
}

</mosaic_0001>

<llo_original>
// kernel: _lambda_.12
$region0: #{_lambda_.12}
  #allocation0 [shape = 'u32[]', space=smem, size = 0x4, offset = 0x4, fixed_abs, tag = 'smem constant byte address 0x4 - core index']
  #allocation1 [shape = 'u32[144,128]{1,0:T(1,128)}', space=vmem, size = 0x12000, scoped, tag = 'internal scratch']
  %s0 = inlined_call_operand.vmem [shape: f32[8,128], index: 0, kind: input, shape index: {}]
  %s1 = inlined_call_operand.vmem [shape: f32[8,128], index: 1, kind: input, shape index: {}]
  %s2 = inlined_call_operand.vmem [shape: f32[128,128], index: 2, kind: input, shape index: {}]
  %s3 = inlined_call_operand.vmem [shape: f32[128,128], index: 3, kind: input, shape index: {}]
  %s4 = inlined_call_operand.vmem [shape: f32[1,128], index: 4, kind: input, shape index: {}]
  %s5 = inlined_call_operand.vmem [shape: f32[8,128], index: 5, kind: output, shape index: {0}]
  %s6 = inlined_call_operand.vmem [shape: f32[8,128], index: 6, kind: output, shape index: {1}]
  %7 = xla_tuple %s5, %s6
  %s8 = sld [smem:[#allocation0]]
  $region38: #{_lambda_.12} parent=0
    _
  %s10 = ssub.s32 1, %s8
  %s11 = scalar_select 0, %s10, %s8
  // Predicated region
  $region2: #{_lambda_.12} parent=0 // pred_check
    _
  $region3: #{_lambda_.12} parent=0 // pred_check_branch
    %13 = sbr.rel (0) target = $region5
  $region4: #{_lambda_.12} parent=0 // pred_region
    _
  $region5: #{_lambda_.12} parent=0 // pred_fallthru
    _
  // Predicated region
  $region6: #{_lambda_.12} parent=0 // pred_check
    _
  $region7: #{_lambda_.12} parent=0 // pred_check_branch
    %15 = sbr.rel (0) target = $region9
  $region8: #{_lambda_.12} parent=0 // pred_region
    _
  $region9: #{_lambda_.12} parent=0 // pred_fallthru
    _
  // Predicated region
  $region10: #{_lambda_.12} parent=0 // pred_check
    _
  $region11: #{_lambda_.12} parent=0 // pred_check_branch
    %17 = sbr.rel (0) target = $region13
  $region12: #{_lambda_.12} parent=0 // pred_region
    _
  $region13: #{_lambda_.12} parent=0 // pred_fallthru
    _
  // Predicated region
  $region14: #{_lambda_.12} parent=0 // pred_check
    _
  $region15: #{_lambda_.12} parent=0 // pred_check_branch
    %19 = sbr.rel (0) target = $region17
  $region16: #{_lambda_.12} parent=0 // pred_region
    _
  $region17: #{_lambda_.12} parent=0 // pred_fallthru
    _
  // Predicated region
  $region18: #{_lambda_.12} parent=0 // pred_check
    _
  $region19: #{_lambda_.12} parent=0 // pred_check_branch
    %21 = sbr.rel (0) target = $region21
  $region20: #{_lambda_.12} parent=0 // pred_region
    _
  $region21: #{_lambda_.12} parent=0 // pred_fallthru
    _
  %v22 = vld [vmem:[%s0] sm:$0xff]
  %v23 = vld [vmem:[%s2] sm:$0xff]
  %v24 = vld [vmem:[%s2 + $0x8] sm:$0xff]
  %v25 = vld [vmem:[%s2 + $0x10] sm:$0xff]
  %v26 = vld [vmem:[%s2 + $0x18] sm:$0xff]
  %v27 = vld [vmem:[%s2 + $0x20] sm:$0xff]
  %v28 = vld [vmem:[%s2 + $0x28] sm:$0xff]
  %v29 = vld [vmem:[%s2 + $0x30] sm:$0xff]
  %v30 = vld [vmem:[%s2 + $0x38] sm:$0xff]
  %v31 = vld [vmem:[%s2 + $0x40] sm:$0xff]
  %v32 = vld [vmem:[%s2 + $0x48] sm:$0xff]
  %v33 = vld [vmem:[%s2 + $0x50] sm:$0xff]
  %v34 = vld [vmem:[%s2 + $0x58] sm:$0xff]
  %v35 = vld [vmem:[%s2 + $0x60] sm:$0xff]
  %v36 = vld [vmem:[%s2 + $0x68] sm:$0xff]
  %v37 = vld [vmem:[%s2 + $0x70] sm:$0xff]
  %v38 = vld [vmem:[%s2 + $0x78] sm:$0xff]
  %v39 = vld [vmem:[%s1] sm:$0xff]
  %v40 = vld [vmem:[%s3] sm:$0xff]
  %v41 = vld [vmem:[%s3 + $0x8] sm:$0xff]
  %v42 = vld [vmem:[%s3 + $0x10] sm:$0xff]
  %v43 = vld [vmem:[%s3 + $0x18] sm:$0xff]
  %v44 = vld [vmem:[%s3 + $0x20] sm:$0xff]
  %v45 = vld [vmem:[%s3 + $0x28] sm:$0xff]
  %v46 = vld [vmem:[%s3 + $0x30] sm:$0xff]
  %v47 = vld [vmem:[%s3 + $0x38] sm:$0xff]
  %v48 = vld [vmem:[%s3 + $0x40] sm:$0xff]
  %v49 = vld [vmem:[%s3 + $0x48] sm:$0xff]
  %v50 = vld [vmem:[%s3 + $0x50] sm:$0xff]
  %v51 = vld [vmem:[%s3 + $0x58] sm:$0xff]
  %v52 = vld [vmem:[%s3 + $0x60] sm:$0xff]
  %v53 = vld [vmem:[%s3 + $0x68] sm:$0xff]
  %v54 = vld [vmem:[%s3 + $0x70] sm:$0xff]
  %v55 = vld [vmem:[%s3 + $0x78] sm:$0xff]
  %56 = vmatprep.subr.mxu0 0.0
  %57 = vmatpush1.msra.mxu0 %v55
  %58 = vmatprep.subr.mxu0 0.0
  %59 = vmatpush1.msra.mxu0 %v54
  %60 = vmatprep.subr.mxu0 0.0
  %61 = vmatpush1.msra.mxu0 %v53
  %62 = vmatprep.subr.mxu0 0.0
  %63 = vmatpush1.msra.mxu0 %v52
  %64 = vmatprep.subr.mxu0 0.0
  %65 = vmatpush1.msra.mxu0 %v51
  %66 = vmatprep.subr.mxu0 0.0
  %67 = vmatpush1.msra.mxu0 %v50
  %68 = vmatprep.subr.mxu0 0.0
  %69 = vmatpush1.msra.mxu0 %v49
  %70 = vmatprep.subr.mxu0 0.0
  %71 = vmatpush1.msra.mxu0 %v48
  %72 = vmatprep.subr.mxu0 0.0
  %73 = vmatpush1.msra.mxu0 %v47
  %74 = vmatprep.subr.mxu0 0.0
  %75 = vmatpush1.msra.mxu0 %v46
  %76 = vmatprep.subr.mxu0 0.0
  %77 = vmatpush1.msra.mxu0 %v45
  %78 = vmatprep.subr.mxu0 0.0
  %79 = vmatpush1.msra.mxu0 %v44
  %80 = vmatprep.subr.mxu0 0.0
  %81 = vmatpush1.msra.mxu0 %v43
  %82 = vmatprep.subr.mxu0 0.0
  %83 = vmatpush1.msra.mxu0 %v42
  %84 = vmatprep.subr.mxu0 0.0
  %85 = vmatpush1.msra.mxu0 %v41
  %86 = vmatprep.subr.mxu0 0.0
  %87 = vmatpush1.msra.mxu0 %v40
  %88 = vmatprep.subr.mxu0 0.0
  %89 = vmatpush2.msra.mxu0 0.0
  %90 = vmatprep.subr.mxu0 0.0
  %91 = vmatpush2.msra.mxu0 0.0
  %92 = vmatprep.subr.mxu0 0.0
  %93 = vmatpush2.msra.mxu0 0.0
  %94 = vmatprep.subr.mxu0 0.0
  %95 = vmatpush2.msra.mxu0 0.0
  %96 = vmatprep.subr.mxu0 0.0
  %97 = vmatpush2.msra.mxu0 0.0
  %98 = vmatprep.subr.mxu0 0.0
  %99 = vmatpush2.msra.mxu0 0.0
  %100 = vmatprep.subr.mxu0 0.0
  %101 = vmatpush2.msra.mxu0 0.0
  %102 = vmatprep.subr.mxu0 0.0
  %103 = vmatpush2.msra.mxu0 0.0
  %104 = vmatprep.subr.mxu0 0.0
  %105 = vmatpush2.msra.mxu0 0.0
  %106 = vmatprep.subr.mxu0 0.0
  %107 = vmatpush2.msra.mxu0 0.0
  %108 = vmatprep.subr.mxu0 0.0
  %109 = vmatpush2.msra.mxu0 0.0
  %110 = vmatprep.subr.mxu0 0.0
  %111 = vmatpush2.msra.mxu0 0.0
  %112 = vmatprep.subr.mxu0 0.0
  %113 = vmatpush2.msra.mxu0 0.0
  %114 = vmatprep.subr.mxu0 0.0
  %115 = vmatpush2.msra.mxu0 0.0
  %116 = vmatprep.subr.mxu0 0.0
  %117 = vmatpush2.msra.mxu0 0.0
  %118 = vmatprep.subr.mxu0 0.0
  %119 = vmatpush2.msra.mxu0 0.0
  %120 = vmatprep.mubr.f32.mxu0 0.0
  %121 = vmatmul.mubr.f32.gmra.mxu0 %v39
  %v122 = vpop.f32.mrf.mxu0
  %v123 = vadd.f32 0.0, %v122
  %v124 = vpop.f32.mrf.mxu0
  %125 = vdwg.mxu0
  %126 = vmatprep.subr.mxu0 0.0
  %127 = vmatpush1.msra.mxu0 %v38
  %128 = vmatprep.subr.mxu0 0.0
  %129 = vmatpush1.msra.mxu0 %v37
  %130 = vmatprep.subr.mxu0 0.0
  %131 = vmatpush1.msra.mxu0 %v36
  %132 = vmatprep.subr.mxu0 0.0
  %133 = vmatpush1.msra.mxu0 %v35
  %134 = vmatprep.subr.mxu0 0.0
  %135 = vmatpush1.msra.mxu0 %v34
  %136 = vmatprep.subr.mxu0 0.0
  %137 = vmatpush1.msra.mxu0 %v33
  %138 = vmatprep.subr.mxu0 0.0
  %139 = vmatpush1.msra.mxu0 %v32
  %140 = vmatprep.subr.mxu0 0.0
  %141 = vmatpush1.msra.mxu0 %v31
  %142 = vmatprep.subr.mxu0 0.0
  %143 = vmatpush1.msra.mxu0 %v30
  %144 = vmatprep.subr.mxu0 0.0
  %145 = vmatpush1.msra.mxu0 %v29
  %146 = vmatprep.subr.mxu0 0.0
  %147 = vmatpush1.msra.mxu0 %v28
  %148 = vmatprep.subr.mxu0 0.0
  %149 = vmatpush1.msra.mxu0 %v27
  %150 = vmatprep.subr.mxu0 0.0
  %151 = vmatpush1.msra.mxu0 %v26
  %152 = vmatprep.subr.mxu0 0.0
  %153 = vmatpush1.msra.mxu0 %v25
  %154 = vmatprep.subr.mxu0 0.0
  %155 = vmatpush1.msra.mxu0 %v24
  %156 = vmatprep.subr.mxu0 0.0
  %157 = vmatpush1.msra.mxu0 %v23
  %158 = vmatprep.subr.mxu0 0.0
  %159 = vmatpush2.msra.mxu0 0.0
  %160 = vmatprep.subr.mxu0 0.0
  %161 = vmatpush2.msra.mxu0 0.0
  %162 = vmatprep.subr.mxu0 0.0
  %163 = vmatpush2.msra.mxu0 0.0
  %164 = vmatprep.subr.mxu0 0.0
  %165 = vmatpush2.msra.mxu0 0.0
  %166 = vmatprep.subr.mxu0 0.0
  %167 = vmatpush2.msra.mxu0 0.0
  %168 = vmatprep.subr.mxu0 0.0
  %169 = vmatpush2.msra.mxu0 0.0
  %170 = vmatprep.subr.mxu0 0.0
  %171 = vmatpush2.msra.mxu0 0.0
  %172 = vmatprep.subr.mxu0 0.0
  %173 = vmatpush2.msra.mxu0 0.0
  %174 = vmatprep.subr.mxu0 0.0
  %175 = vmatpush2.msra.mxu0 0.0
  %176 = vmatprep.subr.mxu0 0.0
  %177 = vmatpush2.msra.mxu0 0.0
  %178 = vmatprep.subr.mxu0 0.0
  %179 = vmatpush2.msra.mxu0 0.0
  %180 = vmatprep.subr.mxu0 0.0
  %181 = vmatpush2.msra.mxu0 0.0
  %182 = vmatprep.subr.mxu0 0.0
  %183 = vmatpush2.msra.mxu0 0.0
  %184 = vmatprep.subr.mxu0 0.0
  %185 = vmatpush2.msra.mxu0 0.0
  %186 = vmatprep.subr.mxu0 0.0
  %187 = vmatpush2.msra.mxu0 0.0
  %188 = vmatprep.subr.mxu0 0.0
  %189 = vmatpush2.msra.mxu0 0.0
  %190 = vmatprep.mubr.f32.mxu0 0.0
  %191 = vmatmul.mubr.f32.gmra.mxu0 %v22
  %v192 = vpop.f32.mrf.mxu0
  %v193 = vadd.f32 %v123, %v192
  %v194 = vpop.f32.mrf.mxu0
  %195 = vdwg.mxu0
  %v196 = vld [vmem:[%s4] sm:$0x1]
  %v198 = vlaneseq
  %v199 = vshrl.u32 %v198, 7
  %v200 = vsub.s32 0, %v199
  %v201 = vrot.slane %v196, %v200
  %v203 = vadd.f32 %v193, %v201
  %204 = vst [vmem:[%s5] sm:$0xff] %v203
  %v205 = vtanh.pop %v203
  %206 = vst [vmem:[%s6] sm:$0xff] %v205
  // Predicated region
  $region22: #{_lambda_.12} parent=0 // pred_check
    _
  $region23: #{_lambda_.12} parent=0 // pred_check_branch
    %208 = sbr.rel (0) target = $region25
  $region24: #{_lambda_.12} parent=0 // pred_region
    _
  $region25: #{_lambda_.12} parent=0 // pred_fallthru
    _
  // Predicated region
  $region26: #{_lambda_.12} parent=0 // pred_check
    _
  $region27: #{_lambda_.12} parent=0 // pred_check_branch
    %210 = sbr.rel (0) target = $region29
  $region28: #{_lambda_.12} parent=0 // pred_region
    _
  $region29: #{_lambda_.12} parent=0 // pred_fallthru
    _
  // Predicated region
  $region30: #{_lambda_.12} parent=0 // pred_check
    _
  $region31: #{_lambda_.12} parent=0 // pred_check_branch
    %212 = sbr.rel (0) target = $region33
  $region32: #{_lambda_.12} parent=0 // pred_region
    _
  $region33: #{_lambda_.12} parent=0 // pred_fallthru
    _
  // Predicated region
  $region34: #{_lambda_.12} parent=0 // pred_check
    _
  $region35: #{_lambda_.12} parent=0 // pred_check_branch
    %214 = sbr.rel (0) target = $region37
  $region36: #{_lambda_.12} parent=0 // pred_region
    _
  $region37: #{_lambda_.12} parent=0 // pred_fallthru
    _

// kernel: _lambda_.11
$region0: #{_lambda_.11}
  #allocation0 [shape = 'u32[]', space=smem, size = 0x4, offset = 0x4, fixed_abs, tag = 'smem constant byte address 0x4 - core index']
  #allocation1 [shape = 'u32[144,128]{1,0:T(1,128)}', space=vmem, size = 0x12000, scoped, tag = 'internal scratch']
  #allocation2 [shape = 'f32[64,128]{1,0:T(8,128)}', space=vmem, size = 0x8000, scoped, tag = 'scratch operand']
  %s0 = inlined_call_operand.vmem [shape: f32[64,256], index: 0, kind: input, shape index: {}]
  %s1 = inlined_call_operand.vmem [shape: f32[256,128], index: 1, kind: input, shape index: {}]
  %s2 = inlined_call_operand.vmem [shape: f32[64,128], index: 2, kind: output, shape index: {}]
  %s3 = sld [smem:[#allocation0]]
  $region26: #{_lambda_.11} parent=0
    _
  %s5 = ssub.s32 1, %s3
  %s6 = scalar_select 0, %s5, %s3
  // Predicated region
  $region2: #{_lambda_.11} parent=0 // pred_check
    _
  $region3: #{_lambda_.11} parent=0 // pred_check_branch
    %8 = sbr.rel (0) target = $region5
  $region4: #{_lambda_.11} parent=0 // pred_region
    _
  $region5: #{_lambda_.11} parent=0 // pred_fallthru
    _
  // Predicated region
  $region6: #{_lambda_.11} parent=0 // pred_check
    _
  $region7: #{_lambda_.11} parent=0 // pred_check_branch
    %10 = sbr.rel (0) target = $region9
  $region8: #{_lambda_.11} parent=0 // pred_region
    _
  $region9: #{_lambda_.11} parent=0 // pred_fallthru
    _
  %p11 = scmp.eq.s32.totalorder 0, 0
  // Predicated region
  $region10: #{_lambda_.11} parent=0 // pred_check
    %p12 = pneg %p11
  $region11: #{_lambda_.11} parent=0 // pred_check_branch
    %14 = sbr.rel (%p12) target = $region13
  $region12: #{_lambda_.11} parent=0 // pred_region
    %15 = vst [vmem:[#allocation2] sm:$0xff] 0.0
    %16 = vst [vmem:[#allocation2 + $0x8] sm:$0xff] 0.0
    %17 = vst [vmem:[#allocation2 + $0x10] sm:$0xff] 0.0
    %18 = vst [vmem:[#allocation2 + $0x18] sm:$0xff] 0.0
    %19 = vst [vmem:[#allocation2 + $0x20] sm:$0xff] 0.0
    %20 = vst [vmem:[#allocation2 + $0x28] sm:$0xff] 0.0
    %21 = vst [vmem:[#allocation2 + $0x30] sm:$0xff] 0.0
    %22 = vst [vmem:[#allocation2 + $0x38] sm:$0xff] 0.0
  $region13: #{_lambda_.11} parent=0 // pred_fallthru
    _
  %v23 = vld [vmem:[#allocation2] sm:$0xff]
  %v24 = vld [vmem:[#allocation2 + $0x8] sm:$0xff]
  %v25 = vld [vmem:[#allocation2 + $0x10] sm:$0xff]
  %v26 = vld [vmem:[#allocation2 + $0x18] sm:$0xff]
  %v27 = vld [vmem:[#allocation2 + $0x20] sm:$0xff]
  %v28 = vld [vmem:[#allocation2 + $0x28] sm:$0xff]
  %v29 = vld [vmem:[#allocation2 + $0x30] sm:$0xff]
  %v30 = vld [vmem:[#allocation2 + $0x38] sm:$0xff]
  %v31 = vld [vmem:[%s0] sm:$0xff]
  %v32 = vld [vmem:[%s0 + $0x8] sm:$0xff]
  %v33 = vld [vmem:[%s0 + $0x10] sm:$0xff]
  %v34 = vld [vmem:[%s0 + $0x18] sm:$0xff]
  %v35 = vld [vmem:[%s0 + $0x20] sm:$0xff]
  %v36 = vld [vmem:[%s0 + $0x28] sm:$0xff]
  %v37 = vld [vmem:[%s0 + $0x30] sm:$0xff]
  %v38 = vld [vmem:[%s0 + $0x38] sm:$0xff]
  %v39 = vld [vmem:[%s0 + $0x40] sm:$0xff]
  %v40 = vld [vmem:[%s0 + $0x48] sm:$0xff]
  %v41 = vld [vmem:[%s0 + $0x50] sm:$0xff]
  %v42 = vld [vmem:[%s0 + $0x58] sm:$0xff]
  %v43 = vld [vmem:[%s0 + $0x60] sm:$0xff]
  %v44 = vld [vmem:[%s0 + $0x68] sm:$0xff]
  %v45 = vld [vmem:[%s0 + $0x70] sm:$0xff]
  %v46 = vld [vmem:[%s0 + $0x78] sm:$0xff]
  %v47 = vld [vmem:[%s1] sm:$0xff]
  %v48 = vld [vmem:[%s1 + $0x8] sm:$0xff]
  %v49 = vld [vmem:[%s1 + $0x10] sm:$0xff]
  %v50 = vld [vmem:[%s1 + $0x18] sm:$0xff]
  %v51 = vld [vmem:[%s1 + $0x20] sm:$0xff]
  %v52 = vld [vmem:[%s1 + $0x28] sm:$0xff]
  %v53 = vld [vmem:[%s1 + $0x30] sm:$0xff]
  %v54 = vld [vmem:[%s1 + $0x38] sm:$0xff]
  %v55 = vld [vmem:[%s1 + $0x40] sm:$0xff]
  %v56 = vld [vmem:[%s1 + $0x48] sm:$0xff]
  %v57 = vld [vmem:[%s1 + $0x50] sm:$0xff]
  %v58 = vld [vmem:[%s1 + $0x58] sm:$0xff]
  %v59 = vld [vmem:[%s1 + $0x60] sm:$0xff]
  %v60 = vld [vmem:[%s1 + $0x68] sm:$0xff]
  %v61 = vld [vmem:[%s1 + $0x70] sm:$0xff]
  %v62 = vld [vmem:[%s1 + $0x78] sm:$0xff]
  %v63 = vld [vmem:[%s1 + $0x80] sm:$0xff]
  %v64 = vld [vmem:[%s1 + $0x88] sm:$0xff]
  %v65 = vld [vmem:[%s1 + $0x90] sm:$0xff]
  %v66 = vld [vmem:[%s1 + $0x98] sm:$0xff]
  %v67 = vld [vmem:[%s1 + $0xa0] sm:$0xff]
  %v68 = vld [vmem:[%s1 + $0xa8] sm:$0xff]
  %v69 = vld [vmem:[%s1 + $0xb0] sm:$0xff]
  %v70 = vld [vmem:[%s1 + $0xb8] sm:$0xff]
  %v71 = vld [vmem:[%s1 + $0xc0] sm:$0xff]
  %v72 = vld [vmem:[%s1 + $0xc8] sm:$0xff]
  %v73 = vld [vmem:[%s1 + $0xd0] sm:$0xff]
  %v74 = vld [vmem:[%s1 + $0xd8] sm:$0xff]
  %v75 = vld [vmem:[%s1 + $0xe0] sm:$0xff]
  %v76 = vld [vmem:[%s1 + $0xe8] sm:$0xff]
  %v77 = vld [vmem:[%s1 + $0xf0] sm:$0xff]
  %v78 = vld [vmem:[%s1 + $0xf8] sm:$0xff]
  %79 = vmatprep.subr.mxu0 0.0
  %80 = vmatpush1.msra.mxu0 %v62
  %81 = vmatprep.subr.mxu0 0.0
  %82 = vmatpush1.msra.mxu0 %v61
  %83 = vmatprep.subr.mxu0 0.0
  %84 = vmatpush1.msra.mxu0 %v60
  %85 = vmatprep.subr.mxu0 0.0
  %86 = vmatpush1.msra.mxu0 %v59
  %87 = vmatprep.subr.mxu0 0.0
  %88 = vmatpush1.msra.mxu0 %v58
  %89 = vmatprep.subr.mxu0 0.0
  %90 = vmatpush1.msra.mxu0 %v57
  %91 = vmatprep.subr.mxu0 0.0
  %92 = vmatpush1.msra.mxu0 %v56
  %93 = vmatprep.subr.mxu0 0.0
  %94 = vmatpush1.msra.mxu0 %v55
  %95 = vmatprep.subr.mxu0 0.0
  %96 = vmatpush1.msra.mxu0 %v54
  %97 = vmatprep.subr.mxu0 0.0
  %98 = vmatpush1.msra.mxu0 %v53
  %99 = vmatprep.subr.mxu0 0.0
  %100 = vmatpush1.msra.mxu0 %v52
  %101 = vmatprep.subr.mxu0 0.0
  %102 = vmatpush1.msra.mxu0 %v51
  %103 = vmatprep.subr.mxu0 0.0
  %104 = vmatpush1.msra.mxu0 %v50
  %105 = vmatprep.subr.mxu0 0.0
  %106 = vmatpush1.msra.mxu0 %v49
  %107 = vmatprep.subr.mxu0 0.0
  %108 = vmatpush1.msra.mxu0 %v48
  %109 = vmatprep.subr.mxu0 0.0
  %110 = vmatpush1.msra.mxu0 %v47
  %111 = vmatprep.subr.mxu0 0.0
  %112 = vmatpush2.msra.mxu0 %v78
  %113 = vmatprep.subr.mxu0 0.0
  %114 = vmatpush2.msra.mxu0 %v77
  %115 = vmatprep.subr.mxu0 0.0
  %116 = vmatpush2.msra.mxu0 %v76
  %117 = vmatprep.subr.mxu0 0.0
  %118 = vmatpush2.msra.mxu0 %v75
  %119 = vmatprep.subr.mxu0 0.0
  %120 = vmatpush2.msra.mxu0 %v74
  %121 = vmatprep.subr.mxu0 0.0
  %122 = vmatpush2.msra.mxu0 %v73
  %123 = vmatprep.subr.mxu0 0.0
  %124 = vmatpush2.msra.mxu0 %v72
  %125 = vmatprep.subr.mxu0 0.0
  %126 = vmatpush2.msra.mxu0 %v71
  %127 = vmatprep.subr.mxu0 0.0
  %128 = vmatpush2.msra.mxu0 %v70
  %129 = vmatprep.subr.mxu0 0.0
  %130 = vmatpush2.msra.mxu0 %v69
  %131 = vmatprep.subr.mxu0 0.0
  %132 = vmatpush2.msra.mxu0 %v68
  %133 = vmatprep.subr.mxu0 0.0
  %134 = vmatpush2.msra.mxu0 %v67
  %135 = vmatprep.subr.mxu0 0.0
  %136 = vmatpush2.msra.mxu0 %v66
  %137 = vmatprep.subr.mxu0 0.0
  %138 = vmatpush2.msra.mxu0 %v65
  %139 = vmatprep.subr.mxu0 0.0
  %140 = vmatpush2.msra.mxu0 %v64
  %141 = vmatprep.subr.mxu0 0.0
  %142 = vmatpush2.msra.mxu0 %v63
  %143 = vmatprep.mubr.f32.mxu0 %v32
  %144 = vmatmul.mubr.f32.gmra.mxu0 %v31
  %v145 = vpop.f32.mrf.mxu0
  %v146 = vadd.f32 0.0, %v145
  %v147 = vpop.f32.mrf.mxu0
  %148 = vmatprep.mubr.f32.mxu0 %v34
  %149 = vmatmul.mubr.f32.gmra.mxu0 %v33
  %v150 = vpop.f32.mrf.mxu0
  %v151 = vadd.f32 0.0, %v150
  %v152 = vpop.f32.mrf.mxu0
  %153 = vmatprep.mubr.f32.mxu0 %v36
  %154 = vmatmul.mubr.f32.gmra.mxu0 %v35
  %v155 = vpop.f32.mrf.mxu0
  %v156 = vadd.f32 0.0, %v155
  %v157 = vpop.f32.mrf.mxu0
  %158 = vmatprep.mubr.f32.mxu0 %v38
  %159 = vmatmul.mubr.f32.gmra.mxu0 %v37
  %v160 = vpop.f32.mrf.mxu0
  %v161 = vadd.f32 0.0, %v160
  %v162 = vpop.f32.mrf.mxu0
  %163 = vmatprep.mubr.f32.mxu0 %v40
  %164 = vmatmul.mubr.f32.gmra.mxu0 %v39
  %v165 = vpop.f32.mrf.mxu0
  %v166 = vadd.f32 0.0, %v165
  %v167 = vpop.f32.mrf.mxu0
  %168 = vmatprep.mubr.f32.mxu0 %v42
  %169 = vmatmul.mubr.f32.gmra.mxu0 %v41
  %v170 = vpop.f32.mrf.mxu0
  %v171 = vadd.f32 0.0, %v170
  %v172 = vpop.f32.mrf.mxu0
  %173 = vmatprep.mubr.f32.mxu0 %v44
  %174 = vmatmul.mubr.f32.gmra.mxu0 %v43
  %v175 = vpop.f32.mrf.mxu0
  %v176 = vadd.f32 0.0, %v175
  %v177 = vpop.f32.mrf.mxu0
  %178 = vmatprep.mubr.f32.mxu0 %v46
  %179 = vmatmul.mubr.f32.gmra.mxu0 %v45
  %v180 = vpop.f32.mrf.mxu0
  %v181 = vadd.f32 0.0, %v180
  %v182 = vpop.f32.mrf.mxu0
  %183 = vdwg.mxu0
  %v184 = vadd.f32 %v23, %v146
  %v185 = vadd.f32 %v24, %v151
  %v186 = vadd.f32 %v25, %v156
  %v187 = vadd.f32 %v26, %v161
  %v188 = vadd.f32 %v27, %v166
  %v189 = vadd.f32 %v28, %v171
  %v190 = vadd.f32 %v29, %v176
  %v191 = vadd.f32 %v30, %v181
  %192 = vst [vmem:[#allocation2] sm:$0xff] %v184
  %193 = vst [vmem:[#allocation2 + $0x8] sm:$0xff] %v185
  %194 = vst [vmem:[#allocation2 + $0x10] sm:$0xff] %v186
  %195 = vst [vmem:[#allocation2 + $0x18] sm:$0xff] %v187
  %196 = vst [vmem:[#allocation2 + $0x20] sm:$0xff] %v188
  %197 = vst [vmem:[#allocation2 + $0x28] sm:$0xff] %v189
  %198 = vst [vmem:[#allocation2 + $0x30] sm:$0xff] %v190
  %199 = vst [vmem:[#allocation2 + $0x38] sm:$0xff] %v191
  // Predicated region
  $region14: #{_lambda_.11} parent=0 // pred_check
    %p200 = pneg %p11
  $region15: #{_lambda_.11} parent=0 // pred_check_branch
    %202 = sbr.rel (%p200) target = $region17
  $region16: #{_lambda_.11} parent=0 // pred_region
    %v203 = vld [vmem:[#allocation2] sm:$0xff]
    %v204 = vld [vmem:[#allocation2 + $0x8] sm:$0xff]
    %v205 = vld [vmem:[#allocation2 + $0x10] sm:$0xff]
    %v206 = vld [vmem:[#allocation2 + $0x18] sm:$0xff]
    %v207 = vld [vmem:[#allocation2 + $0x20] sm:$0xff]
    %v208 = vld [vmem:[#allocation2 + $0x28] sm:$0xff]
    %v209 = vld [vmem:[#allocation2 + $0x30] sm:$0xff]
    %v210 = vld [vmem:[#allocation2 + $0x38] sm:$0xff]
    %211 = vst [vmem:[%s2] sm:$0xff] %v203
    %212 = vst [vmem:[%s2 + $0x8] sm:$0xff] %v204
    %213 = vst [vmem:[%s2 + $0x10] sm:$0xff] %v205
    %214 = vst [vmem:[%s2 + $0x18] sm:$0xff] %v206
    %215 = vst [vmem:[%s2 + $0x20] sm:$0xff] %v207
    %216 = vst [vmem:[%s2 + $0x28] sm:$0xff] %v208
    %217 = vst [vmem:[%s2 + $0x30] sm:$0xff] %v209
    %218 = vst [vmem:[%s2 + $0x38] sm:$0xff] %v210
  $region17: #{_lambda_.11} parent=0 // pred_fallthru
    _
  // Predicated region
  $region18: #{_lambda_.11} parent=0 // pred_check
    _
  $region19: #{_lambda_.11} parent=0 // pred_check_branch
    %220 = sbr.rel (0) target = $region21
  $region20: #{_lambda_.11} parent=0 // pred_region
    _
  $region21: #{_lambda_.11} parent=0 // pred_fallthru
    _
  // Predicated region
  $region22: #{_lambda_.11} parent=0 // pred_check
    _
  $region23: #{_lambda_.11} parent=0 // pred_check_branch
    %222 = sbr.rel (0) target = $region25
  $region24: #{_lambda_.11} parent=0 // pred_region
    _
  $region25: #{_lambda_.11} parent=0 // pred_fallthru
    _

// kernel: _lambda_.9
$region0: #{_lambda_.9}
  #allocation0 [shape = 'u32[]', space=smem, size = 0x4, offset = 0x4, fixed_abs, tag = 'smem constant byte address 0x4 - core index']
  #allocation1 [shape = 'u32[144,128]{1,0:T(1,128)}', space=vmem, size = 0x12000, scoped, tag = 'internal scratch']
  #allocation2 [shape = 'f32[64,512]{1,0:T(8,128)}', space=vmem, size = 0x20000, scoped, tag = 'scratch operand']
  %s0 = inlined_call_operand.vmem [shape: f32[64,128], index: 0, kind: input, shape index: {}]
  %s1 = inlined_call_operand.vmem [shape: f32[128,512], index: 1, kind: input, shape index: {}]
  %s2 = inlined_call_operand.vmem [shape: f32[64,512], index: 2, kind: output, shape index: {}]
  %s3 = sld [smem:[#allocation0]]
  $region26: #{_lambda_.9} parent=0
    _
  %s5 = ssub.s32 1, %s3
  %s6 = scalar_select 0, %s5, %s3
  // Predicated region
  $region2: #{_lambda_.9} parent=0 // pred_check
    _
  $region3: #{_lambda_.9} parent=0 // pred_check_branch
    %8 = sbr.rel (0) target = $region5
  $region4: #{_lambda_.9} parent=0 // pred_region
    _
  $region5: #{_lambda_.9} parent=0 // pred_fallthru
    _
  // Predicated region
  $region6: #{_lambda_.9} parent=0 // pred_check
    _
  $region7: #{_lambda_.9} parent=0 // pred_check_branch
    %10 = sbr.rel (0) target = $region9
  $region8: #{_lambda_.9} parent=0 // pred_region
    _
  $region9: #{_lambda_.9} parent=0 // pred_fallthru
    _
  %p11 = scmp.eq.s32.totalorder 0, 0
  // Predicated region
  $region10: #{_lambda_.9} parent=0 // pred_check
    %p12 = pneg %p11
  $region11: #{_lambda_.9} parent=0 // pred_check_branch
    %14 = sbr.rel (%p12) target = $region13
  $region12: #{_lambda_.9} parent=0 // pred_region
    %15 = vst [vmem:[#allocation2] sm:$0xff] 0.0
    %16 = vst [vmem:[#allocation2 + $0x8] sm:$0xff] 0.0
    %17 = vst [vmem:[#allocation2 + $0x10] sm:$0xff] 0.0
    %18 = vst [vmem:[#allocation2 + $0x18] sm:$0xff] 0.0
    %19 = vst [vmem:[#allocation2 + $0x20] sm:$0xff] 0.0
    %20 = vst [vmem:[#allocation2 + $0x28] sm:$0xff] 0.0
    %21 = vst [vmem:[#allocation2 + $0x30] sm:$0xff] 0.0
    %22 = vst [vmem:[#allocation2 + $0x38] sm:$0xff] 0.0
    %23 = vst [vmem:[#allocation2 + $0x40] sm:$0xff] 0.0
    %24 = vst [vmem:[#allocation2 + $0x48] sm:$0xff] 0.0
    %25 = vst [vmem:[#allocation2 + $0x50] sm:$0xff] 0.0
    %26 = vst [vmem:[#allocation2 + $0x58] sm:$0xff] 0.0
    %27 = vst [vmem:[#allocation2 + $0x60] sm:$0xff] 0.0
    %28 = vst [vmem:[#allocation2 + $0x68] sm:$0xff] 0.0
    %29 = vst [vmem:[#allocation2 + $0x70] sm:$0xff] 0.0
    %30 = vst [vmem:[#allocation2 + $0x78] sm:$0xff] 0.0
    %31 = vst [vmem:[#allocation2 + $0x80] sm:$0xff] 0.0
    %32 = vst [vmem:[#allocation2 + $0x88] sm:$0xff] 0.0
    %33 = vst [vmem:[#allocation2 + $0x90] sm:$0xff] 0.0
    %34 = vst [vmem:[#allocation2 + $0x98] sm:$0xff] 0.0
    %35 = vst [vmem:[#allocation2 + $0xa0] sm:$0xff] 0.0
    %36 = vst [vmem:[#allocation2 + $0xa8] sm:$0xff] 0.0
    %37 = vst [vmem:[#allocation2 + $0xb0] sm:$0xff] 0.0
    %38 = vst [vmem:[#allocation2 + $0xb8] sm:$0xff] 0.0
    %39 = vst [vmem:[#allocation2 + $0xc0] sm:$0xff] 0.0
    %40 = vst [vmem:[#allocation2 + $0xc8] sm:$0xff] 0.0
    %41 = vst [vmem:[#allocation2 + $0xd0] sm:$0xff] 0.0
    %42 = vst [vmem:[#allocation2 + $0xd8] sm:$0xff] 0.0
    %43 = vst [vmem:[#allocation2 + $0xe0] sm:$0xff] 0.0
    %44 = vst [vmem:[#allocation2 + $0xe8] sm:$0xff] 0.0
    %45 = vst [vmem:[#allocation2 + $0xf0] sm:$0xff] 0.0
    %46 = vst [vmem:[#allocation2 + $0xf8] sm:$0xff] 0.0
  $region13: #{_lambda_.9} parent=0 // pred_fallthru
    _
  %v47 = vld [vmem:[#allocation2] sm:$0xff]
  %v48 = vld [vmem:[#allocation2 + $0x8] sm:$0xff]
  %v49 = vld [vmem:[#allocation2 + $0x10] sm:$0xff]
  %v50 = vld [vmem:[#allocation2 + $0x18] sm:$0xff]
  %v51 = vld [vmem:[#allocation2 + $0x20] sm:$0xff]
  %v52 = vld [vmem:[#allocation2 + $0x28] sm:$0xff]
  %v53 = vld [vmem:[#allocation2 + $0x30] sm:$0xff]
  %v54 = vld [vmem:[#allocation2 + $0x38] sm:$0xff]
  %v55 = vld [vmem:[#allocation2 + $0x40] sm:$0xff]
  %v56 = vld [vmem:[#allocation2 + $0x48] sm:$0xff]
  %v57 = vld [vmem:[#allocation2 + $0x50] sm:$0xff]
  %v58 = vld [vmem:[#allocation2 + $0x58] sm:$0xff]
  %v59 = vld [vmem:[#allocation2 + $0x60] sm:$0xff]
  %v60 = vld [vmem:[#allocation2 + $0x68] sm:$0xff]
  %v61 = vld [vmem:[#allocation2 + $0x70] sm:$0xff]
  %v62 = vld [vmem:[#allocation2 + $0x78] sm:$0xff]
  %v63 = vld [vmem:[#allocation2 + $0x80] sm:$0xff]
  %v64 = vld [vmem:[#allocation2 + $0x88] sm:$0xff]
  %v65 = vld [vmem:[#allocation2 + $0x90] sm:$0xff]
  %v66 = vld [vmem:[#allocation2 + $0x98] sm:$0xff]
  %v67 = vld [vmem:[#allocation2 + $0xa0] sm:$0xff]
  %v68 = vld [vmem:[#allocation2 + $0xa8] sm:$0xff]
  %v69 = vld [vmem:[#allocation2 + $0xb0] sm:$0xff]
  %v70 = vld [vmem:[#allocation2 + $0xb8] sm:$0xff]
  %v71 = vld [vmem:[#allocation2 + $0xc0] sm:$0xff]
  %v72 = vld [vmem:[#allocation2 + $0xc8] sm:$0xff]
  %v73 = vld [vmem:[#allocation2 + $0xd0] sm:$0xff]
  %v74 = vld [vmem:[#allocation2 + $0xd8] sm:$0xff]
  %v75 = vld [vmem:[#allocation2 + $0xe0] sm:$0xff]
  %v76 = vld [vmem:[#allocation2 + $0xe8] sm:$0xff]
  %v77 = vld [vmem:[#allocation2 + $0xf0] sm:$0xff]
  %v78 = vld [vmem:[#allocation2 + $0xf8] sm:$0xff]
  %v79 = vld [vmem:[%s0] sm:$0xff]
  %v80 = vld [vmem:[%s0 + $0x8] sm:$0xff]
  %v81 = vld [vmem:[%s0 + $0x10] sm:$0xff]
  %v82 = vld [vmem:[%s0 + $0x18] sm:$0xff]
  %v83 = vld [vmem:[%s0 + $0x20] sm:$0xff]
  %v84 = vld [vmem:[%s0 + $0x28] sm:$0xff]
  %v85 = vld [vmem:[%s0 + $0x30] sm:$0xff]
  %v86 = vld [vmem:[%s0 + $0x38] sm:$0xff]
  %v87 = vld [vmem:[%s1] sm:$0xff]
  %v88 = vld [vmem:[%s1 + $0x8] sm:$0xff]
  %v89 = vld [vmem:[%s1 + $0x10] sm:$0xff]
  %v90 = vld [vmem:[%s1 + $0x18] sm:$0xff]
  %v91 = vld [vmem:[%s1 + $0x20] sm:$0xff]
  %v92 = vld [vmem:[%s1 + $0x28] sm:$0xff]
  %v93 = vld [vmem:[%s1 + $0x30] sm:$0xff]
  %v94 = vld [vmem:[%s1 + $0x38] sm:$0xff]
  %v95 = vld [vmem:[%s1 + $0x40] sm:$0xff]
  %v96 = vld [vmem:[%s1 + $0x48] sm:$0xff]
  %v97 = vld [vmem:[%s1 + $0x50] sm:$0xff]
  %v98 = vld [vmem:[%s1 + $0x58] sm:$0xff]
  %v99 = vld [vmem:[%s1 + $0x60] sm:$0xff]
  %v100 = vld [vmem:[%s1 + $0x68] sm:$0xff]
  %v101 = vld [vmem:[%s1 + $0x70] sm:$0xff]
  %v102 = vld [vmem:[%s1 + $0x78] sm:$0xff]
  %v103 = vld [vmem:[%s1 + $0x80] sm:$0xff]
  %v104 = vld [vmem:[%s1 + $0x88] sm:$0xff]
  %v105 = vld [vmem:[%s1 + $0x90] sm:$0xff]
  %v106 = vld [vmem:[%s1 + $0x98] sm:$0xff]
  %v107 = vld [vmem:[%s1 + $0xa0] sm:$0xff]
  %v108 = vld [vmem:[%s1 + $0xa8] sm:$0xff]
  %v109 = vld [vmem:[%s1 + $0xb0] sm:$0xff]
  %v110 = vld [vmem:[%s1 + $0xb8] sm:$0xff]
  %v111 = vld [vmem:[%s1 + $0xc0] sm:$0xff]
  %v112 = vld [vmem:[%s1 + $0xc8] sm:$0xff]
  %v113 = vld [vmem:[%s1 + $0xd0] sm:$0xff]
  %v114 = vld [vmem:[%s1 + $0xd8] sm:$0xff]
  %v115 = vld [vmem:[%s1 + $0xe0] sm:$0xff]
  %v116 = vld [vmem:[%s1 + $0xe8] sm:$0xff]
  %v117 = vld [vmem:[%s1 + $0xf0] sm:$0xff]
  %v118 = vld [vmem:[%s1 + $0xf8] sm:$0xff]
  %v119 = vld [vmem:[%s1 + $0x100] sm:$0xff]
  %v120 = vld [vmem:[%s1 + $0x108] sm:$0xff]
  %v121 = vld [vmem:[%s1 + $0x110] sm:$0xff]
  %v122 = vld [vmem:[%s1 + $0x118] sm:$0xff]
  %v123 = vld [vmem:[%s1 + $0x120] sm:$0xff]
  %v124 = vld [vmem:[%s1 + $0x128] sm:$0xff]
  %v125 = vld [vmem:[%s1 + $0x130] sm:$0xff]
  %v126 = vld [vmem:[%s1 + $0x138] sm:$0xff]
  %v127 = vld [vmem:[%s1 + $0x140] sm:$0xff]
  %v128 = vld [vmem:[%s1 + $0x148] sm:$0xff]
  %v129 = vld [vmem:[%s1 + $0x150] sm:$0xff]
  %v130 = vld [vmem:[%s1 + $0x158] sm:$0xff]
  %v131 = vld [vmem:[%s1 + $0x160] sm:$0xff]
  %v132 = vld [vmem:[%s1 + $0x168] sm:$0xff]
  %v133 = vld [vmem:[%s1 + $0x170] sm:$0xff]
  %v134 = vld [vmem:[%s1 + $0x178] sm:$0xff]
  %v135 = vld [vmem:[%s1 + $0x180] sm:$0xff]
  %v136 = vld [vmem:[%s1 + $0x188] sm:$0xff]
  %v137 = vld [vmem:[%s1 + $0x190] sm:$0xff]
  %v138 = vld [vmem:[%s1 + $0x198] sm:$0xff]
  %v139 = vld [vmem:[%s1 + $0x1a0] sm:$0xff]
  %v140 = vld [vmem:[%s1 + $0x1a8] sm:$0xff]
  %v141 = vld [vmem:[%s1 + $0x1b0] sm:$0xff]
  %v142 = vld [vmem:[%s1 + $0x1b8] sm:$0xff]
  %v143 = vld [vmem:[%s1 + $0x1c0] sm:$0xff]
  %v144 = vld [vmem:[%s1 + $0x1c8] sm:$0xff]
  %v145 = vld [vmem:[%s1 + $0x1d0] sm:$0xff]
  %v146 = vld [vmem:[%s1 + $0x1d8] sm:$0xff]
  %v147 = vld [vmem:[%s1 + $0x1e0] sm:$0xff]
  %v148 = vld [vmem:[%s1 + $0x1e8] sm:$0xff]
  %v149 = vld [vmem:[%s1 + $0x1f0] sm:$0xff]
  %v150 = vld [vmem:[%s1 + $0x1f8] sm:$0xff]
  %151 = vmatprep.subr.mxu0 %v148
  %152 = vmatpush1.msra.mxu0 %v147
  %153 = vmatprep.subr.mxu0 %v144
  %154 = vmatpush1.msra.mxu0 %v143
  %155 = vmatprep.subr.mxu0 %v140
  %156 = vmatpush1.msra.mxu0 %v139
  %157 = vmatprep.subr.mxu0 %v136
  %158 = vmatpush1.msra.mxu0 %v135
  %159 = vmatprep.subr.mxu0 %v132
  %160 = vmatpush1.msra.mxu0 %v131
  %161 = vmatprep.subr.mxu0 %v128
  %162 = vmatpush1.msra.mxu0 %v127
  %163 = vmatprep.subr.mxu0 %v124
  %164 = vmatpush1.msra.mxu0 %v123
  %165 = vmatprep.subr.mxu0 %v120
  %166 = vmatpush1.msra.mxu0 %v119
  %167 = vmatprep.subr.mxu0 %v116
  %168 = vmatpush1.msra.mxu0 %v115
  %169 = vmatprep.subr.mxu0 %v112
  %170 = vmatpush1.msra.mxu0 %v111
  %171 = vmatprep.subr.mxu0 %v108
  %172 = vmatpush1.msra.mxu0 %v107
  %173 = vmatprep.subr.mxu0 %v104
  %174 = vmatpush1.msra.mxu0 %v103
  %175 = vmatprep.subr.mxu0 %v100
  %176 = vmatpush1.msra.mxu0 %v99
  %177 = vmatprep.subr.mxu0 %v96
  %178 = vmatpush1.msra.mxu0 %v95
  %179 = vmatprep.subr.mxu0 %v92
  %180 = vmatpush1.msra.mxu0 %v91
  %181 = vmatprep.subr.mxu0 %v88
  %182 = vmatpush1.msra.mxu0 %v87
  %183 = vmatprep.subr.mxu0 0.0
  %184 = vmatpush2.msra.mxu0 0.0
  %185 = vmatprep.subr.mxu0 0.0
  %186 = vmatpush2.msra.mxu0 0.0
  %187 = vmatprep.subr.mxu0 0.0
  %188 = vmatpush2.msra.mxu0 0.0
  %189 = vmatprep.subr.mxu0 0.0
  %190 = vmatpush2.msra.mxu0 0.0
  %191 = vmatprep.subr.mxu0 0.0
  %192 = vmatpush2.msra.mxu0 0.0
  %193 = vmatprep.subr.mxu0 0.0
  %194 = vmatpush2.msra.mxu0 0.0
  %195 = vmatprep.subr.mxu0 0.0
  %196 = vmatpush2.msra.mxu0 0.0
  %197 = vmatprep.subr.mxu0 0.0
  %198 = vmatpush2.msra.mxu0 0.0
  %199 = vmatprep.subr.mxu0 0.0
  %200 = vmatpush2.msra.mxu0 0.0
  %201 = vmatprep.subr.mxu0 0.0
  %202 = vmatpush2.msra.mxu0 0.0
  %203 = vmatprep.subr.mxu0 0.0
  %204 = vmatpush2.msra.mxu0 0.0
  %205 = vmatprep.subr.mxu0 0.0
  %206 = vmatpush2.msra.mxu0 0.0
  %207 = vmatprep.subr.mxu0 0.0
  %208 = vmatpush2.msra.mxu0 0.0
  %209 = vmatprep.subr.mxu0 0.0
  %210 = vmatpush2.msra.mxu0 0.0
  %211 = vmatprep.subr.mxu0 0.0
  %212 = vmatpush2.msra.mxu0 0.0
  %213 = vmatprep.subr.mxu0 0.0
  %214 = vmatpush2.msra.mxu0 0.0
  %215 = vmatprep.mubr.f32.mxu0 0.0
  %216 = vmatmul.mubr.f32.gmra.mxu0 %v79
  %v217 = vpop.f32.mrf.mxu0
  %v218 = vadd.f32 0.0, %v217
  %v219 = vpop.f32.mrf.mxu0
  %v220 = vadd.f32 0.0, %v219
  %221 = vmatprep.mubr.f32.mxu0 0.0
  %222 = vmatmul.mubr.f32.gmra.mxu0 %v80
  %v223 = vpop.f32.mrf.mxu0
  %v224 = vadd.f32 0.0, %v223
  %v225 = vpop.f32.mrf.mxu0
  %v226 = vadd.f32 0.0, %v225
  %227 = vmatprep.mubr.f32.mxu0 0.0
  %228 = vmatmul.mubr.f32.gmra.mxu0 %v81
  %v229 = vpop.f32.mrf.mxu0
  %v230 = vadd.f32 0.0, %v229
  %v231 = vpop.f32.mrf.mxu0
  %v232 = vadd.f32 0.0, %v231
  %233 = vmatprep.mubr.f32.mxu0 0.0
  %234 = vmatmul.mubr.f32.gmra.mxu0 %v82
  %v235 = vpop.f32.mrf.mxu0
  %v236 = vadd.f32 0.0, %v235
  %v237 = vpop.f32.mrf.mxu0
  %v238 = vadd.f32 0.0, %v237
  %239 = vmatprep.mubr.f32.mxu0 0.0
  %240 = vmatmul.mubr.f32.gmra.mxu0 %v83
  %v241 = vpop.f32.mrf.mxu0
  %v242 = vadd.f32 0.0, %v241
  %v243 = vpop.f32.mrf.mxu0
  %v244 = vadd.f32 0.0, %v243
  %245 = vmatprep.mubr.f32.mxu0 0.0
  %246 = vmatmul.mubr.f32.gmra.mxu0 %v84
  %v247 = vpop.f32.mrf.mxu0
  %v248 = vadd.f32 0.0, %v247
  %v249 = vpop.f32.mrf.mxu0
  %v250 = vadd.f32 0.0, %v249
  %251 = vmatprep.mubr.f32.mxu0 0.0
  %252 = vmatmul.mubr.f32.gmra.mxu0 %v85
  %v253 = vpop.f32.mrf.mxu0
  %v254 = vadd.f32 0.0, %v253
  %v255 = vpop.f32.mrf.mxu0
  %v256 = vadd.f32 0.0, %v255
  %257 = vmatprep.mubr.f32.mxu0 0.0
  %258 = vmatmul.mubr.f32.gmra.mxu0 %v86
  %v259 = vpop.f32.mrf.mxu0
  %v260 = vadd.f32 0.0, %v259
  %v261 = vpop.f32.mrf.mxu0
  %v262 = vadd.f32 0.0, %v261
  %263 = vdwg.mxu0
  %264 = vmatprep.subr.mxu0 %v150
  %265 = vmatpush1.msra.mxu0 %v149
  %266 = vmatprep.subr.mxu0 %v146
  %267 = vmatpush1.msra.mxu0 %v145
  %268 = vmatprep.subr.mxu0 %v142
  %269 = vmatpush1.msra.mxu0 %v141
  %270 = vmatprep.subr.mxu0 %v138
  %271 = vmatpush1.msra.mxu0 %v137
  %272 = vmatprep.subr.mxu0 %v134
  %273 = vmatpush1.msra.mxu0 %v133
  %274 = vmatprep.subr.mxu0 %v130
  %275 = vmatpush1.msra.mxu0 %v129
  %276 = vmatprep.subr.mxu0 %v126
  %277 = vmatpush1.msra.mxu0 %v125
  %278 = vmatprep.subr.mxu0 %v122
  %279 = vmatpush1.msra.mxu0 %v121
  %280 = vmatprep.subr.mxu0 %v118
  %281 = vmatpush1.msra.mxu0 %v117
  %282 = vmatprep.subr.mxu0 %v114
  %283 = vmatpush1.msra.mxu0 %v113
  %284 = vmatprep.subr.mxu0 %v110
  %285 = vmatpush1.msra.mxu0 %v109
  %286 = vmatprep.subr.mxu0 %v106
  %287 = vmatpush1.msra.mxu0 %v105
  %288 = vmatprep.subr.mxu0 %v102
  %289 = vmatpush1.msra.mxu0 %v101
  %290 = vmatprep.subr.mxu0 %v98
  %291 = vmatpush1.msra.mxu0 %v97
  %292 = vmatprep.subr.mxu0 %v94
  %293 = vmatpush1.msra.mxu0 %v93
  %294 = vmatprep.subr.mxu0 %v90
  %295 = vmatpush1.msra.mxu0 %v89
  %296 = vmatprep.subr.mxu0 0.0
  %297 = vmatpush2.msra.mxu0 0.0
  %298 = vmatprep.subr.mxu0 0.0
  %299 = vmatpush2.msra.mxu0 0.0
  %300 = vmatprep.subr.mxu0 0.0
  %301 = vmatpush2.msra.mxu0 0.0
  %302 = vmatprep.subr.mxu0 0.0
  %303 = vmatpush2.msra.mxu0 0.0
  %304 = vmatprep.subr.mxu0 0.0
  %305 = vmatpush2.msra.mxu0 0.0
  %306 = vmatprep.subr.mxu0 0.0
  %307 = vmatpush2.msra.mxu0 0.0
  %308 = vmatprep.subr.mxu0 0.0
  %309 = vmatpush2.msra.mxu0 0.0
  %310 = vmatprep.subr.mxu0 0.0
  %311 = vmatpush2.msra.mxu0 0.0
  %312 = vmatprep.subr.mxu0 0.0
  %313 = vmatpush2.msra.mxu0 0.0
  %314 = vmatprep.subr.mxu0 0.0
  %315 = vmatpush2.msra.mxu0 0.0
  %316 = vmatprep.subr.mxu0 0.0
  %317 = vmatpush2.msra.mxu0 0.0
  %318 = vmatprep.subr.mxu0 0.0
  %319 = vmatpush2.msra.mxu0 0.0
  %320 = vmatprep.subr.mxu0 0.0
  %321 = vmatpush2.msra.mxu0 0.0
  %322 = vmatprep.subr.mxu0 0.0
  %323 = vmatpush2.msra.mxu0 0.0
  %324 = vmatprep.subr.mxu0 0.0
  %325 = vmatpush2.msra.mxu0 0.0
  %326 = vmatprep.subr.mxu0 0.0
  %327 = vmatpush2.msra.mxu0 0.0
  %328 = vmatprep.mubr.f32.mxu0 0.0
  %329 = vmatmul.mubr.f32.gmra.mxu0 %v79
  %v330 = vpop.f32.mrf.mxu0
  %v331 = vadd.f32 0.0, %v330
  %v332 = vpop.f32.mrf.mxu0
  %v333 = vadd.f32 0.0, %v332
  %334 = vmatprep.mubr.f32.mxu0 0.0
  %335 = vmatmul.mubr.f32.gmra.mxu0 %v80
  %v336 = vpop.f32.mrf.mxu0
  %v337 = vadd.f32 0.0, %v336
  %v338 = vpop.f32.mrf.mxu0
  %v339 = vadd.f32 0.0, %v338
  %340 = vmatprep.mubr.f32.mxu0 0.0
  %341 = vmatmul.mubr.f32.gmra.mxu0 %v81
  %v342 = vpop.f32.mrf.mxu0
  %v343 = vadd.f32 0.0, %v342
  %v344 = vpop.f32.mrf.mxu0
  %v345 = vadd.f32 0.0, %v344
  %346 = vmatprep.mubr.f32.mxu0 0.0
  %347 = vmatmul.mubr.f32.gmra.mxu0 %v82
  %v348 = vpop.f32.mrf.mxu0
  %v349 = vadd.f32 0.0, %v348
  %v350 = vpop.f32.mrf.mxu0
  %v351 = vadd.f32 0.0, %v350
  %352 = vmatprep.mubr.f32.mxu0 0.0
  %353 = vmatmul.mubr.f32.gmra.mxu0 %v83
  %v354 = vpop.f32.mrf.mxu0
  %v355 = vadd.f32 0.0, %v354
  %v356 = vpop.f32.mrf.mxu0
  %v357 = vadd.f32 0.0, %v356
  %358 = vmatprep.mubr.f32.mxu0 0.0
  %359 = vmatmul.mubr.f32.gmra.mxu0 %v84
  %v360 = vpop.f32.mrf.mxu0
  %v361 = vadd.f32 0.0, %v360
  %v362 = vpop.f32.mrf.mxu0
  %v363 = vadd.f32 0.0, %v362
  %364 = vmatprep.mubr.f32.mxu0 0.0
  %365 = vmatmul.mubr.f32.gmra.mxu0 %v85
  %v366 = vpop.f32.mrf.mxu0
  %v367 = vadd.f32 0.0, %v366
  %v368 = vpop.f32.mrf.mxu0
  %v369 = vadd.f32 0.0, %v368
  %370 = vmatprep.mubr.f32.mxu0 0.0
  %371 = vmatmul.mubr.f32.gmra.mxu0 %v86
  %v372 = vpop.f32.mrf.mxu0
  %v373 = vadd.f32 0.0, %v372
  %v374 = vpop.f32.mrf.mxu0
  %v375 = vadd.f32 0.0, %v374
  %376 = vdwg.mxu0
  %v377 = vadd.f32 %v47, %v218
  %v378 = vadd.f32 %v48, %v220
  %v379 = vadd.f32 %v49, %v331
  %v380 = vadd.f32 %v50, %v333
  %v381 = vadd.f32 %v51, %v224
  %v382 = vadd.f32 %v52, %v226
  %v383 = vadd.f32 %v53, %v337
  %v384 = vadd.f32 %v54, %v339
  %v385 = vadd.f32 %v55, %v230
  %v386 = vadd.f32 %v56, %v232
  %v387 = vadd.f32 %v57, %v343
  %v388 = vadd.f32 %v58, %v345
  %v389 = vadd.f32 %v59, %v236
  %v390 = vadd.f32 %v60, %v238
  %v391 = vadd.f32 %v61, %v349
  %v392 = vadd.f32 %v62, %v351
  %v393 = vadd.f32 %v63, %v242
  %v394 = vadd.f32 %v64, %v244
  %v395 = vadd.f32 %v65, %v355
  %v396 = vadd.f32 %v66, %v357
  %v397 = vadd.f32 %v67, %v248
  %v398 = vadd.f32 %v68, %v250
  %v399 = vadd.f32 %v69, %v361
  %v400 = vadd.f32 %v70, %v363
  %v401 = vadd.f32 %v71, %v254
  %v402 = vadd.f32 %v72, %v256
  %v403 = vadd.f32 %v73, %v367
  %v404 = vadd.f32 %v74, %v369
  %v405 = vadd.f32 %v75, %v260
  %v406 = vadd.f32 %v76, %v262
  %v407 = vadd.f32 %v77, %v373
  %v408 = vadd.f32 %v78, %v375
  %409 = vst [vmem:[#allocation2] sm:$0xff] %v377
  %410 = vst [vmem:[#allocation2 + $0x8] sm:$0xff] %v378
  %411 = vst [vmem:[#allocation2 + $0x10] sm:$0xff] %v379
  %412 = vst [vmem:[#allocation2 + $0x18] sm:$0xff] %v380
  %413 = vst [vmem:[#allocation2 + $0x20] sm:$0xff] %v381
  %414 = vst [vmem:[#allocation2 + $0x28] sm:$0xff] %v382
  %415 = vst [vmem:[#allocation2 + $0x30] sm:$0xff] %v383
  %416 = vst [vmem:[#allocation2 + $0x38] sm:$0xff] %v384
  %417 = vst [vmem:[#allocation2 + $0x40] sm:$0xff] %v385
  %418 = vst [vmem:[#allocation2 + $0x48] sm:$0xff] %v386
  %419 = vst [vmem:[#allocation2 + $0x50] sm:$0xff] %v387
  %420 = vst [vmem:[#allocation2 + $0x58] sm:$0xff] %v388
  %421 = vst [vmem:[#allocation2 + $0x60] sm:$0xff] %v389
  %422 = vst [vmem:[#allocation2 + $0x68] sm:$0xff] %v390
  %423 = vst [vmem:[#allocation2 + $0x70] sm:$0xff] %v391
  %424 = vst [vmem:[#allocation2 + $0x78] sm:$0xff] %v392
  %425 = vst [vmem:[#allocation2 + $0x80] sm:$0xff] %v393
  %426 = vst [vmem:[#allocation2 + $0x88] sm:$0xff] %v394
  %427 = vst [vmem:[#allocation2 + $0x90] sm:$0xff] %v395
  %428 = vst [vmem:[#allocation2 + $0x98] sm:$0xff] %v396
  %429 = vst [vmem:[#allocation2 + $0xa0] sm:$0xff] %v397
  %430 = vst [vmem:[#allocation2 + $0xa8] sm:$0xff] %v398
  %431 = vst [vmem:[#allocation2 + $0xb0] sm:$0xff] %v399
  %432 = vst [vmem:[#allocation2 + $0xb8] sm:$0xff] %v400
  %433 = vst [vmem:[#allocation2 + $0xc0] sm:$0xff] %v401
  %434 = vst [vmem:[#allocation2 + $0xc8] sm:$0xff] %v402
  %435 = vst [vmem:[#allocation2 + $0xd0] sm:$0xff] %v403
  %436 = vst [vmem:[#allocation2 + $0xd8] sm:$0xff] %v404
  %437 = vst [vmem:[#allocation2 + $0xe0] sm:$0xff] %v405
  %438 = vst [vmem:[#allocation2 + $0xe8] sm:$0xff] %v406
  %439 = vst [vmem:[#allocation2 + $0xf0] sm:$0xff] %v407
  %440 = vst [vmem:[#allocation2 + $0xf8] sm:$0xff] %v408
  // Predicated region
  $region14: #{_lambda_.9} parent=0 // pred_check
    %p441 = pneg %p11
  $region15: #{_lambda_.9} parent=0 // pred_check_branch
    %443 = sbr.rel (%p441) target = $region17
  $region16: #{_lambda_.9} parent=0 // pred_region
    %v444 = vld [vmem:[#allocation2] sm:$0xff]
    %v445 = vld [vmem:[#allocation2 + $0x8] sm:$0xff]
    %v446 = vld [vmem:[#allocation2 + $0x10] sm:$0xff]
    %v447 = vld [vmem:[#allocation2 + $0x18] sm:$0xff]
    %v448 = vld [vmem:[#allocation2 + $0x20] sm:$0xff]
    %v449 = vld [vmem:[#allocation2 + $0x28] sm:$0xff]
    %v450 = vld [vmem:[#allocation2 + $0x30] sm:$0xff]
    %v451 = vld [vmem:[#allocation2 + $0x38] sm:$0xff]
    %v452 = vld [vmem:[#allocation2 + $0x40] sm:$0xff]
    %v453 = vld [vmem:[#allocation2 + $0x48] sm:$0xff]
    %v454 = vld [vmem:[#allocation2 + $0x50] sm:$0xff]
    %v455 = vld [vmem:[#allocation2 + $0x58] sm:$0xff]
    %v456 = vld [vmem:[#allocation2 + $0x60] sm:$0xff]
    %v457 = vld [vmem:[#allocation2 + $0x68] sm:$0xff]
    %v458 = vld [vmem:[#allocation2 + $0x70] sm:$0xff]
    %v459 = vld [vmem:[#allocation2 + $0x78] sm:$0xff]
    %v460 = vld [vmem:[#allocation2 + $0x80] sm:$0xff]
    %v461 = vld [vmem:[#allocation2 + $0x88] sm:$0xff]
    %v462 = vld [vmem:[#allocation2 + $0x90] sm:$0xff]
    %v463 = vld [vmem:[#allocation2 + $0x98] sm:$0xff]
    %v464 = vld [vmem:[#allocation2 + $0xa0] sm:$0xff]
    %v465 = vld [vmem:[#allocation2 + $0xa8] sm:$0xff]
    %v466 = vld [vmem:[#allocation2 + $0xb0] sm:$0xff]
    %v467 = vld [vmem:[#allocation2 + $0xb8] sm:$0xff]
    %v468 = vld [vmem:[#allocation2 + $0xc0] sm:$0xff]
    %v469 = vld [vmem:[#allocation2 + $0xc8] sm:$0xff]
    %v470 = vld [vmem:[#allocation2 + $0xd0] sm:$0xff]
    %v471 = vld [vmem:[#allocation2 + $0xd8] sm:$0xff]
    %v472 = vld [vmem:[#allocation2 + $0xe0] sm:$0xff]
    %v473 = vld [vmem:[#allocation2 + $0xe8] sm:$0xff]
    %v474 = vld [vmem:[#allocation2 + $0xf0] sm:$0xff]
    %v475 = vld [vmem:[#allocation2 + $0xf8] sm:$0xff]
    %476 = vst [vmem:[%s2] sm:$0xff] %v444
    %477 = vst [vmem:[%s2 + $0x8] sm:$0xff] %v445
    %478 = vst [vmem:[%s2 + $0x10] sm:$0xff] %v446
    %479 = vst [vmem:[%s2 + $0x18] sm:$0xff] %v447
    %480 = vst [vmem:[%s2 + $0x20] sm:$0xff] %v448
    %481 = vst [vmem:[%s2 + $0x28] sm:$0xff] %v449
    %482 = vst [vmem:[%s2 + $0x30] sm:$0xff] %v450
    %483 = vst [vmem:[%s2 + $0x38] sm:$0xff] %v451
    %484 = vst [vmem:[%s2 + $0x40] sm:$0xff] %v452
    %485 = vst [vmem:[%s2 + $0x48] sm:$0xff] %v453
    %486 = vst [vmem:[%s2 + $0x50] sm:$0xff] %v454
    %487 = vst [vmem:[%s2 + $0x58] sm:$0xff] %v455
    %488 = vst [vmem:[%s2 + $0x60] sm:$0xff] %v456
    %489 = vst [vmem:[%s2 + $0x68] sm:$0xff] %v457
    %490 = vst [vmem:[%s2 + $0x70] sm:$0xff] %v458
    %491 = vst [vmem:[%s2 + $0x78] sm:$0xff] %v459
    %492 = vst [vmem:[%s2 + $0x80] sm:$0xff] %v460
    %493 = vst [vmem:[%s2 + $0x88] sm:$0xff] %v461
    %494 = vst [vmem:[%s2 + $0x90] sm:$0xff] %v462
    %495 = vst [vmem:[%s2 + $0x98] sm:$0xff] %v463
    %496 = vst [vmem:[%s2 + $0xa0] sm:$0xff] %v464
    %497 = vst [vmem:[%s2 + $0xa8] sm:$0xff] %v465
    %498 = vst [vmem:[%s2 + $0xb0] sm:$0xff] %v466
    %499 = vst [vmem:[%s2 + $0xb8] sm:$0xff] %v467
    %500 = vst [vmem:[%s2 + $0xc0] sm:$0xff] %v468
    %501 = vst [vmem:[%s2 + $0xc8] sm:$0xff] %v469
    %502 = vst [vmem:[%s2 + $0xd0] sm:$0xff] %v470
    %503 = vst [vmem:[%s2 + $0xd8] sm:$0xff] %v471
    %504 = vst [vmem:[%s2 + $0xe0] sm:$0xff] %v472
    %505 = vst [vmem:[%s2 + $0xe8] sm:$0xff] %v473
    %506 = vst [vmem:[%s2 + $0xf0] sm:$0xff] %v474
    %507 = vst [vmem:[%s2 + $0xf8] sm:$0xff] %v475
  $region17: #{_lambda_.9} parent=0 // pred_fallthru
    _
  // Predicated region
  $region18: #{_lambda_.9} parent=0 // pred_check
    _
  $region19: #{_lambda_.9} parent=0 // pred_check_branch
    %509 = sbr.rel (0) target = $region21
  $region20: #{_lambda_.9} parent=0 // pred_region
    _
  $region21: #{_lambda_.9} parent=0 // pred_fallthru
    _
  // Predicated region
  $region22: #{_lambda_.9} parent=0 // pred_check
    _
  $region23: #{_lambda_.9} parent=0 // pred_check_branch
    %511 = sbr.rel (0) target = $region25
  $region24: #{_lambda_.9} parent=0 // pred_region
    _
  $region25: #{_lambda_.9} parent=0 // pred_fallthru
    _

// kernel: _lambda_.10
$region0: #{_lambda_.10}
  #allocation0 [shape = 'u32[]', space=smem, size = 0x4, offset = 0x4, fixed_abs, tag = 'smem constant byte address 0x4 - core index']
  #allocation1 [shape = 'u32[144,128]{1,0:T(1,128)}', space=vmem, size = 0x12000, scoped, tag = 'internal scratch']
  #allocation2 [shape = 'f32[8,128]{1,0:T(8,128)}', space=vmem, size = 0x1000, scoped, tag = 'scratch operand']
  #allocation3 [shape = 'f32[8,128]{1,0:T(8,128)}', space=vmem, size = 0x1000, scoped, tag = 'scratch operand']
  #allocation4 [shape = 'f32[8,128]{1,0:T(8,128)}', space=vmem, size = 0x1000, scoped, tag = 'scratch operand']
  #allocation5 [shape = 'f32[8,128]{1,0:T(8,128)}', space=vmem, size = 0x1000, scoped, tag = 'scratch operand']
  %s0 = inlined_call_operand.vmem [shape: f32[8,8,512], index: 0, kind: input, shape index: {}]
  %s1 = inlined_call_operand.vmem [shape: f32[8,8,512], index: 1, kind: input, shape index: {}]
  %s2 = inlined_call_operand.vmem [shape: f32[128,512], index: 2, kind: input, shape index: {}]
  %s3 = inlined_call_operand.vmem [shape: f32[128,512], index: 3, kind: input, shape index: {}]
  %s4 = inlined_call_operand.vmem [shape: f32[8,8,128], index: 4, kind: output, shape index: {0}]
  %s5 = inlined_call_operand.vmem [shape: f32[8,8,128], index: 5, kind: output, shape index: {1}]
  %s6 = inlined_call_operand.vmem [shape: f32[8,128], index: 6, kind: output, shape index: {2}]
  %s7 = inlined_call_operand.vmem [shape: f32[8,128], index: 7, kind: output, shape index: {3}]
  %8 = xla_tuple %s4, %s5, %s6, %s7
  %s9 = sld [smem:[#allocation0]]
  $region77: #{_lambda_.10} parent=0
    _
  %s11 = ssub.s32 1, %s9
  %s12 = scalar_select 0, %s11, %s9
  loop: start=0, step=1, limit=10
  $region2: #{_lambda_.10} parent=0 // loop_pre_header
    _
  $region3: #{_lambda_.10} parent=0 // loop_header
    %s14 = sphi 0, %s18
    %p15 = scmp.ge.s32.totalorder %s14, 10
    %s24 = sphi 0, %s26
    %s27 = sphi 0, %s24
    %s28 = sphi 0, %s27
    %s44 = sphi 0, %s28
    %s52 = sphi 0, %s54
    %s55 = sphi 0, %s52
    %s56 = sphi 0, %s55
    %s72 = sphi 0, %s56
    %s76 = sphi 0, %s76
    %s78 = sphi 0, %s76
    %s79 = sphi 0, %s78
    %s93 = sphi 0, %s79
    %s97 = sphi 0, %s97
    %s99 = sphi 0, %s97
    %s100 = sphi 0, %s99
    %s114 = sphi 0, %s100
    %s120 = sphi 0, %s122
    %s123 = sphi 0, %s120
    %s124 = sphi 0, %s123
    %s140 = sphi 0, %s124
    %s148 = sphi 0, %s150
    %s151 = sphi 0, %s148
    %s152 = sphi 0, %s151
    %s168 = sphi 0, %s152
    %s172 = sphi 0, %s172
    %s174 = sphi 0, %s172
    %s175 = sphi 0, %s174
    %s189 = sphi 0, %s175
    %s193 = sphi 0, %s193
    %s195 = sphi 0, %s193
    %s196 = sphi 0, %s195
    %s210 = sphi 0, %s196
  $region4: #{_lambda_.10} parent=0 // loop_header_branch
    %17 = sbr.rel (%p15) target = $region8
  $region5: #{_lambda_.10} parent=0 // loop_body
    %s19 = ssub.s32 %s14, 1
    %s20 = ssub.s32 %s14, 2
    %s21 = sadd.s32 %s14, 1
    %s22 = ssub.s32 %s14, %s21
    %p23 = scmp.eq.s32.totalorder %s22, 0
    %s25 = sadd.s32 %s24, 1
    %s26 = scalar_select %p23, %s24, %s25
    %p29 = pneg %p23
    %p30 = scmp.eq.s32.totalorder %s14, 7
    %p31 = por %p29, %p30
    %p32 = scmp.ne.s32.totalorder %s24, %s27
    %p33 = scmp.eq.s32.totalorder %s14, 0
    %p34 = por %p32, %p33
    %p35 = scmp.ne.s32.totalorder %s24, %s27
    %p36 = scmp.eq.s32.totalorder %s19, 7
    %p37 = por %p35, %p36
    %p38 = scmp.ne.s32.totalorder %s27, %s28
    %p39 = scmp.eq.s32.totalorder %s19, 0
    %p40 = por %p38, %p39
    %p41 = scmp.ne.s32.totalorder %s27, %s28
    %p42 = scmp.eq.s32.totalorder %s20, 7
    %p43 = por %p41, %p42
    %p45 = scmp.ne.s32.totalorder %s28, %s44
    %p46 = scmp.eq.s32.totalorder %s20, 0
    %p47 = por %p45, %p46
    %s48 = ssub.s32 7, %s14
    %s49 = ssub.s32 7, %s21
    %s50 = ssub.s32 %s48, %s49
    %p51 = scmp.eq.s32.totalorder %s50, 0
    %s53 = sadd.s32 %s52, 1
    %s54 = scalar_select %p51, %s52, %s53
    %p57 = pneg %p51
    %p58 = scmp.eq.s32.totalorder %s14, 7
    %p59 = por %p57, %p58
    %p60 = scmp.ne.s32.totalorder %s52, %s55
    %p61 = scmp.eq.s32.totalorder %s14, 0
    %p62 = por %p60, %p61
    %p63 = scmp.ne.s32.totalorder %s52, %s55
    %p64 = scmp.eq.s32.totalorder %s19, 7
    %p65 = por %p63, %p64
    %p66 = scmp.ne.s32.totalorder %s55, %s56
    %p67 = scmp.eq.s32.totalorder %s19, 0
    %p68 = por %p66, %p67
    %p69 = scmp.ne.s32.totalorder %s55, %s56
    %p70 = scmp.eq.s32.totalorder %s20, 7
    %p71 = por %p69, %p70
    %p73 = scmp.ne.s32.totalorder %s56, %s72
    %p74 = scmp.eq.s32.totalorder %s20, 0
    %p75 = por %p73, %p74
    %s77 = sadd.s32 %s76, 1
    %p80 = scmp.eq.s32.totalorder %s14, 7
    %p81 = scmp.ne.s32.totalorder %s76, %s78
    %p82 = scmp.eq.s32.totalorder %s14, 0
    %p83 = por %p81, %p82
    %p84 = scmp.ne.s32.totalorder %s76, %s78
    %p85 = scmp.eq.s32.totalorder %s19, 7
    %p86 = por %p84, %p85
    %p87 = scmp.ne.s32.totalorder %s78, %s79
    %p88 = scmp.eq.s32.totalorder %s19, 0
    %p89 = por %p87, %p88
    %p90 = scmp.ne.s32.totalorder %s78, %s79
    %p91 = scmp.eq.s32.totalorder %s20, 7
    %p92 = por %p90, %p91
    %p94 = scmp.ne.s32.totalorder %s79, %s93
    %p95 = scmp.eq.s32.totalorder %s20, 0
    %p96 = por %p94, %p95
    %s98 = sadd.s32 %s97, 1
    %p101 = scmp.eq.s32.totalorder %s14, 7
    %p102 = scmp.ne.s32.totalorder %s97, %s99
    %p103 = scmp.eq.s32.totalorder %s14, 0
    %p104 = por %p102, %p103
    %p105 = scmp.ne.s32.totalorder %s97, %s99
    %p106 = scmp.eq.s32.totalorder %s19, 7
    %p107 = por %p105, %p106
    %p108 = scmp.ne.s32.totalorder %s99, %s100
    %p109 = scmp.eq.s32.totalorder %s19, 0
    %p110 = por %p108, %p109
    %p111 = scmp.ne.s32.totalorder %s99, %s100
    %p112 = scmp.eq.s32.totalorder %s20, 7
    %p113 = por %p111, %p112
    %p115 = scmp.ne.s32.totalorder %s100, %s114
    %p116 = scmp.eq.s32.totalorder %s20, 0
    %p117 = por %p115, %p116
    %s118 = ssub.s32 %s14, %s21
    %p119 = scmp.eq.s32.totalorder %s118, 0
    %s121 = sadd.s32 %s120, 1
    %s122 = scalar_select %p119, %s120, %s121
    %p125 = pneg %p119
    %p126 = scmp.eq.s32.totalorder %s14, 7
    %p127 = por %p125, %p126
    %p128 = scmp.ne.s32.totalorder %s120, %s123
    %p129 = scmp.eq.s32.totalorder %s14, 0
    %p130 = por %p128, %p129
    %p131 = scmp.ne.s32.totalorder %s120, %s123
    %p132 = scmp.eq.s32.totalorder %s19, 7
    %p133 = por %p131, %p132
    %p134 = scmp.ne.s32.totalorder %s123, %s124
    %p135 = scmp.eq.s32.totalorder %s19, 0
    %p136 = por %p134, %p135
    %p137 = scmp.ne.s32.totalorder %s123, %s124
    %p138 = scmp.eq.s32.totalorder %s20, 7
    %p139 = por %p137, %p138
    %p141 = scmp.ne.s32.totalorder %s124, %s140
    %p142 = scmp.eq.s32.totalorder %s20, 0
    %p143 = por %p141, %p142
    %s144 = ssub.s32 7, %s14
    %s145 = ssub.s32 7, %s21
    %s146 = ssub.s32 %s144, %s145
    %p147 = scmp.eq.s32.totalorder %s146, 0
    %s149 = sadd.s32 %s148, 1
    %s150 = scalar_select %p147, %s148, %s149
    %p153 = pneg %p147
    %p154 = scmp.eq.s32.totalorder %s14, 7
    %p155 = por %p153, %p154
    %p156 = scmp.ne.s32.totalorder %s148, %s151
    %p157 = scmp.eq.s32.totalorder %s14, 0
    %p158 = por %p156, %p157
    %p159 = scmp.ne.s32.totalorder %s148, %s151
    %p160 = scmp.eq.s32.totalorder %s19, 7
    %p161 = por %p159, %p160
    %p162 = scmp.ne.s32.totalorder %s151, %s152
    %p163 = scmp.eq.s32.totalorder %s19, 0
    %p164 = por %p162, %p163
    %p165 = scmp.ne.s32.totalorder %s151, %s152
    %p166 = scmp.eq.s32.totalorder %s20, 7
    %p167 = por %p165, %p166
    %p169 = scmp.ne.s32.totalorder %s152, %s168
    %p170 = scmp.eq.s32.totalorder %s20, 0
    %p171 = por %p169, %p170
    %s173 = sadd.s32 %s172, 1
    %p176 = scmp.eq.s32.totalorder %s14, 7
    %p177 = scmp.ne.s32.totalorder %s172, %s174
    %p178 = scmp.eq.s32.totalorder %s14, 0
    %p179 = por %p177, %p178
    %p180 = scmp.ne.s32.totalorder %s172, %s174
    %p181 = scmp.eq.s32.totalorder %s19, 7
    %p182 = por %p180, %p181
    %p183 = scmp.ne.s32.totalorder %s174, %s175
    %p184 = scmp.eq.s32.totalorder %s19, 0
    %p185 = por %p183, %p184
    %p186 = scmp.ne.s32.totalorder %s174, %s175
    %p187 = scmp.eq.s32.totalorder %s20, 7
    %p188 = por %p186, %p187
    %p190 = scmp.ne.s32.totalorder %s175, %s189
    %p191 = scmp.eq.s32.totalorder %s20, 0
    %p192 = por %p190, %p191
    %s194 = sadd.s32 %s193, 1
    %p197 = scmp.eq.s32.totalorder %s14, 7
    %p198 = scmp.ne.s32.totalorder %s193, %s195
    %p199 = scmp.eq.s32.totalorder %s14, 0
    %p200 = por %p198, %p199
    %p201 = scmp.ne.s32.totalorder %s193, %s195
    %p202 = scmp.eq.s32.totalorder %s19, 7
    %p203 = por %p201, %p202
    %p204 = scmp.ne.s32.totalorder %s195, %s196
    %p205 = scmp.eq.s32.totalorder %s19, 0
    %p206 = por %p204, %p205
    %p207 = scmp.ne.s32.totalorder %s195, %s196
    %p208 = scmp.eq.s32.totalorder %s20, 7
    %p209 = por %p207, %p208
    %p211 = scmp.ne.s32.totalorder %s196, %s210
    %p212 = scmp.eq.s32.totalorder %s20, 0
    %p213 = por %p211, %p212
    %p214 = scmp.le.s32.totalorder 1, %s14
    %p215 = scmp.lt.s32.totalorder %s14, 9
    %p216 = pnand %p214, %p215
    %p217 = pneg %p216
    // Predicated region
    $region9: #{_lambda_.10} parent=5 // pred_check
      _
    $region10: #{_lambda_.10} parent=5 // pred_check_branch
      %219 = sbr.rel (%p216) target = $region12
    $region11: #{_lambda_.10} parent=5 // pred_region
      %s220 = ssub.s32 %s14, 1
      // Predicated region
      $region13: #{_lambda_.10} parent=11 // pred_check
        %p221 = pneg %p89
      $region14: #{_lambda_.10} parent=11 // pred_check_branch
        %223 = sbr.rel (%p221) target = $region16
      $region15: #{_lambda_.10} parent=11 // pred_region
        _
      $region16: #{_lambda_.10} parent=11 // pred_fallthru
        _
      // Predicated region
      $region17: #{_lambda_.10} parent=11 // pred_check
        %p224 = pneg %p110
      $region18: #{_lambda_.10} parent=11 // pred_check_branch
        %226 = sbr.rel (%p224) target = $region20
      $region19: #{_lambda_.10} parent=11 // pred_region
        _
      $region20: #{_lambda_.10} parent=11 // pred_fallthru
        _
    $region12: #{_lambda_.10} parent=5 // pred_fallthru
      _
    %p227 = scmp.lt.s32.totalorder %s14, 8
    // Predicated region
    $region21: #{_lambda_.10} parent=5 // pred_check
      %p228 = pneg %p227
    $region22: #{_lambda_.10} parent=5 // pred_check_branch
      %230 = sbr.rel (%p228) target = $region24
    $region23: #{_lambda_.10} parent=5 // pred_region
      // Predicated region
      $region25: #{_lambda_.10} parent=23 // pred_check
        %p231 = pneg %p34
      $region26: #{_lambda_.10} parent=23 // pred_check_branch
        %233 = sbr.rel (%p231) target = $region28
      $region27: #{_lambda_.10} parent=23 // pred_region
        %p234 = scmp.lt.s32.totalorder %s14, 7
        %s235 = scalar_select %p234, %s14, 7
        %s236 = smul.addr %s235, 4
        %s237 = smul.addr %s236, 8
        %s238 = scalar_lea.vmem %s0, %s237
      $region28: #{_lambda_.10} parent=23 // pred_fallthru
        _
      // Predicated region
      $region29: #{_lambda_.10} parent=23 // pred_check
        %p239 = pneg %p62
      $region30: #{_lambda_.10} parent=23 // pred_check_branch
        %241 = sbr.rel (%p239) target = $region32
      $region31: #{_lambda_.10} parent=23 // pred_region
        %s242 = ssub.s32 7, %s14
        %p243 = scmp.lt.s32.totalorder %s242, 7
        %s244 = scalar_select %p243, %s242, 7
        %s245 = smul.addr %s244, 4
        %s246 = smul.addr %s245, 8
        %s247 = scalar_lea.vmem %s1, %s246
        %s248 = ssub.s32 7, %s14
      $region32: #{_lambda_.10} parent=23 // pred_fallthru
        _
    $region24: #{_lambda_.10} parent=5 // pred_fallthru
      _
    %p249 = scmp.le.s32.totalorder 1, %s14
    %p250 = scmp.lt.s32.totalorder %s14, 9
    %p251 = pnand %p249, %p250
    %p252 = pneg %p251
    // Predicated region
    $region33: #{_lambda_.10} parent=5 // pred_check
      _
    $region34: #{_lambda_.10} parent=5 // pred_check_branch
      %254 = sbr.rel (%p251) target = $region36
    $region35: #{_lambda_.10} parent=5 // pred_region
      %s255 = ssub.s32 %s14, 1
      %p256 = scmp.lt.s32.totalorder %s19, 7
      %s257 = scalar_select %p256, %s19, 7
      %s258 = smul.addr %s257, 4
      %s259 = smul.addr %s258, 8
      %s260 = scalar_lea.vmem %s0, %s259
      %p261 = pneg %p40
      %p262 = pneg %p37
      %s263 = ssub.s32 7, %s19
      %p264 = scmp.lt.s32.totalorder %s263, 7
      %s265 = scalar_select %p264, %s263, 7
      %s266 = smul.addr %s265, 4
      %s267 = smul.addr %s266, 8
      %s268 = scalar_lea.vmem %s1, %s267
      %p269 = pneg %p68
      %p270 = pneg %p65
      %p271 = pneg %p89
      %p272 = pneg %p86
      %p273 = pneg %p110
      %p274 = pneg %p107
      %p275 = pneg %p136
      %p276 = pneg %p133
      %p277 = scmp.lt.s32.totalorder %s19, 7
      %s278 = scalar_select %p277, %s19, 7
      %s279 = smul.addr %s278, 8
      %s280 = scalar_lea.vmem %s4, %s279
      %p281 = pneg %p164
      %p282 = pneg %p161
      %s283 = ssub.s32 7, %s19
      %p284 = scmp.lt.s32.totalorder %s283, 7
      %s285 = scalar_select %p284, %s283, 7
      %s286 = smul.addr %s285, 8
      %s287 = scalar_lea.vmem %s5, %s286
      %p288 = pneg %p185
      %p289 = pneg %p182
      %p290 = pneg %p206
      %p291 = pneg %p203
      %p292 = scmp.lt.s32.totalorder %s19, 7
      %s293 = scalar_select %p292, %s19, 7
      %s294 = smul.addr %s293, 4
      %s295 = smul.addr %s294, 8
      %s296 = scalar_lea.vmem %s0, %s295
      %s297 = ssub.s32 7, %s19
      %p298 = scmp.lt.s32.totalorder %s297, 7
      %s299 = scalar_select %p298, %s297, 7
      %s300 = smul.addr %s299, 4
      %s301 = smul.addr %s300, 8
      %s302 = scalar_lea.vmem %s1, %s301
      %s303 = ssub.s32 7, %s19
      %p304 = scmp.lt.s32.totalorder %s19, 7
      %s305 = scalar_select %p304, %s19, 7
      %s306 = smul.addr %s305, 8
      %s307 = scalar_lea.vmem %s4, %s306
      %s308 = ssub.s32 7, %s19
      %p309 = scmp.lt.s32.totalorder %s308, 7
      %s310 = scalar_select %p309, %s308, 7
      %s311 = smul.addr %s310, 8
      %s312 = scalar_lea.vmem %s5, %s311
      %s313 = ssub.s32 7, %s19
      %p314 = scmp.eq.s32.totalorder %s19, 0
      // Predicated region
      $region37: #{_lambda_.10} parent=35 // pred_check
        %p315 = pneg %p314
      $region38: #{_lambda_.10} parent=35 // pred_check_branch
        %317 = sbr.rel (%p315) target = $region40
      $region39: #{_lambda_.10} parent=35 // pred_region
        %318 = vst [vmem:[#allocation2] sm:$0xff] 0.0
        %319 = vst [vmem:[#allocation3] sm:$0xff] 0.0
        %320 = vst [vmem:[#allocation4] sm:$0xff] 0.0
        %321 = vst [vmem:[#allocation5] sm:$0xff] 0.0
      $region40: #{_lambda_.10} parent=35 // pred_fallthru
        _
      %v322 = vld [vmem:[%s296] sm:$0xff]
      %v323 = vld [vmem:[%s296 + $0x8] sm:$0xff]
      %v324 = vld [vmem:[%s296 + $0x10] sm:$0xff]
      %v325 = vld [vmem:[%s296 + $0x18] sm:$0xff]
      %v326 = vld [vmem:[#allocation2] sm:$0xff]
      %v327 = vld [vmem:[#allocation3] sm:$0xff]
      %v328 = vld [vmem:[%s2] sm:$0xff]
      %v329 = vld [vmem:[%s2 + $0x8] sm:$0xff]
      %v330 = vld [vmem:[%s2 + $0x10] sm:$0xff]
      %v331 = vld [vmem:[%s2 + $0x18] sm:$0xff]
      %v332 = vld [vmem:[%s2 + $0x20] sm:$0xff]
      %v333 = vld [vmem:[%s2 + $0x28] sm:$0xff]
      %v334 = vld [vmem:[%s2 + $0x30] sm:$0xff]
      %v335 = vld [vmem:[%s2 + $0x38] sm:$0xff]
      %v336 = vld [vmem:[%s2 + $0x40] sm:$0xff]
      %v337 = vld [vmem:[%s2 + $0x48] sm:$0xff]
      %v338 = vld [vmem:[%s2 + $0x50] sm:$0xff]
      %v339 = vld [vmem:[%s2 + $0x58] sm:$0xff]
      %v340 = vld [vmem:[%s2 + $0x60] sm:$0xff]
      %v341 = vld [vmem:[%s2 + $0x68] sm:$0xff]
      %v342 = vld [vmem:[%s2 + $0x70] sm:$0xff]
      %v343 = vld [vmem:[%s2 + $0x78] sm:$0xff]
      %v344 = vld [vmem:[%s2 + $0x80] sm:$0xff]
      %v345 = vld [vmem:[%s2 + $0x88] sm:$0xff]
      %v346 = vld [vmem:[%s2 + $0x90] sm:$0xff]
      %v347 = vld [vmem:[%s2 + $0x98] sm:$0xff]
      %v348 = vld [vmem:[%s2 + $0xa0] sm:$0xff]
      %v349 = vld [vmem:[%s2 + $0xa8] sm:$0xff]
      %v350 = vld [vmem:[%s2 + $0xb0] sm:$0xff]
      %v351 = vld [vmem:[%s2 + $0xb8] sm:$0xff]
      %v352 = vld [vmem:[%s2 + $0xc0] sm:$0xff]
      %v353 = vld [vmem:[%s2 + $0xc8] sm:$0xff]
      %v354 = vld [vmem:[%s2 + $0xd0] sm:$0xff]
      %v355 = vld [vmem:[%s2 + $0xd8] sm:$0xff]
      %v356 = vld [vmem:[%s2 + $0xe0] sm:$0xff]
      %v357 = vld [vmem:[%s2 + $0xe8] sm:$0xff]
      %v358 = vld [vmem:[%s2 + $0xf0] sm:$0xff]
      %v359 = vld [vmem:[%s2 + $0xf8] sm:$0xff]
      %v360 = vld [vmem:[%s2 + $0x100] sm:$0xff]
      %v361 = vld [vmem:[%s2 + $0x108] sm:$0xff]
      %v362 = vld [vmem:[%s2 + $0x110] sm:$0xff]
      %v363 = vld [vmem:[%s2 + $0x118] sm:$0xff]
      %v364 = vld [vmem:[%s2 + $0x120] sm:$0xff]
      %v365 = vld [vmem:[%s2 + $0x128] sm:$0xff]
      %v366 = vld [vmem:[%s2 + $0x130] sm:$0xff]
      %v367 = vld [vmem:[%s2 + $0x138] sm:$0xff]
      %v368 = vld [vmem:[%s2 + $0x140] sm:$0xff]
      %v369 = vld [vmem:[%s2 + $0x148] sm:$0xff]
      %v370 = vld [vmem:[%s2 + $0x150] sm:$0xff]
      %v371 = vld [vmem:[%s2 + $0x158] sm:$0xff]
      %v372 = vld [vmem:[%s2 + $0x160] sm:$0xff]
      %v373 = vld [vmem:[%s2 + $0x168] sm:$0xff]
      %v374 = vld [vmem:[%s2 + $0x170] sm:$0xff]
      %v375 = vld [vmem:[%s2 + $0x178] sm:$0xff]
      %v376 = vld [vmem:[%s2 + $0x180] sm:$0xff]
      %v377 = vld [vmem:[%s2 + $0x188] sm:$0xff]
      %v378 = vld [vmem:[%s2 + $0x190] sm:$0xff]
      %v379 = vld [vmem:[%s2 + $0x198] sm:$0xff]
      %v380 = vld [vmem:[%s2 + $0x1a0] sm:$0xff]
      %v381 = vld [vmem:[%s2 + $0x1a8] sm:$0xff]
      %v382 = vld [vmem:[%s2 + $0x1b0] sm:$0xff]
      %v383 = vld [vmem:[%s2 + $0x1b8] sm:$0xff]
      %v384 = vld [vmem:[%s2 + $0x1c0] sm:$0xff]
      %v385 = vld [vmem:[%s2 + $0x1c8] sm:$0xff]
      %v386 = vld [vmem:[%s2 + $0x1d0] sm:$0xff]
      %v387 = vld [vmem:[%s2 + $0x1d8] sm:$0xff]
      %v388 = vld [vmem:[%s2 + $0x1e0] sm:$0xff]
      %v389 = vld [vmem:[%s2 + $0x1e8] sm:$0xff]
      %v390 = vld [vmem:[%s2 + $0x1f0] sm:$0xff]
      %v391 = vld [vmem:[%s2 + $0x1f8] sm:$0xff]
      %392 = vmatprep.subr.mxu0 %v389
      %393 = vmatpush1.msra.mxu0 %v388
      %394 = vmatprep.subr.mxu0 %v385
      %395 = vmatpush1.msra.mxu0 %v384
      %396 = vmatprep.subr.mxu0 %v381
      %397 = vmatpush1.msra.mxu0 %v380
      %398 = vmatprep.subr.mxu0 %v377
      %399 = vmatpush1.msra.mxu0 %v376
      %400 = vmatprep.subr.mxu0 %v373
      %401 = vmatpush1.msra.mxu0 %v372
      %402 = vmatprep.subr.mxu0 %v369
      %403 = vmatpush1.msra.mxu0 %v368
      %404 = vmatprep.subr.mxu0 %v365
      %405 = vmatpush1.msra.mxu0 %v364
      %406 = vmatprep.subr.mxu0 %v361
      %407 = vmatpush1.msra.mxu0 %v360
      %408 = vmatprep.subr.mxu0 %v357
      %409 = vmatpush1.msra.mxu0 %v356
      %410 = vmatprep.subr.mxu0 %v353
      %411 = vmatpush1.msra.mxu0 %v352
      %412 = vmatprep.subr.mxu0 %v349
      %413 = vmatpush1.msra.mxu0 %v348
      %414 = vmatprep.subr.mxu0 %v345
      %415 = vmatpush1.msra.mxu0 %v344
      %416 = vmatprep.subr.mxu0 %v341
      %417 = vmatpush1.msra.mxu0 %v340
      %418 = vmatprep.subr.mxu0 %v337
      %419 = vmatpush1.msra.mxu0 %v336
      %420 = vmatprep.subr.mxu0 %v333
      %421 = vmatpush1.msra.mxu0 %v332
      %422 = vmatprep.subr.mxu0 %v329
      %423 = vmatpush1.msra.mxu0 %v328
      %424 = vmatprep.subr.mxu0 0.0
      %425 = vmatpush2.msra.mxu0 0.0
      %426 = vmatprep.subr.mxu0 0.0
      %427 = vmatpush2.msra.mxu0 0.0
      %428 = vmatprep.subr.mxu0 0.0
      %429 = vmatpush2.msra.mxu0 0.0
      %430 = vmatprep.subr.mxu0 0.0
      %431 = vmatpush2.msra.mxu0 0.0
      %432 = vmatprep.subr.mxu0 0.0
      %433 = vmatpush2.msra.mxu0 0.0
      %434 = vmatprep.subr.mxu0 0.0
      %435 = vmatpush2.msra.mxu0 0.0
      %436 = vmatprep.subr.mxu0 0.0
      %437 = vmatpush2.msra.mxu0 0.0
      %438 = vmatprep.subr.mxu0 0.0
      %439 = vmatpush2.msra.mxu0 0.0
      %440 = vmatprep.subr.mxu0 0.0
      %441 = vmatpush2.msra.mxu0 0.0
      %442 = vmatprep.subr.mxu0 0.0
      %443 = vmatpush2.msra.mxu0 0.0
      %444 = vmatprep.subr.mxu0 0.0
      %445 = vmatpush2.msra.mxu0 0.0
      %446 = vmatprep.subr.mxu0 0.0
      %447 = vmatpush2.msra.mxu0 0.0
      %448 = vmatprep.subr.mxu0 0.0
      %449 = vmatpush2.msra.mxu0 0.0
      %450 = vmatprep.subr.mxu0 0.0
      %451 = vmatpush2.msra.mxu0 0.0
      %452 = vmatprep.subr.mxu0 0.0
      %453 = vmatpush2.msra.mxu0 0.0
      %454 = vmatprep.subr.mxu0 0.0
      %455 = vmatpush2.msra.mxu0 0.0
      %456 = vmatprep.mubr.f32.mxu0 0.0
      %457 = vmatmul.mubr.f32.gmra.mxu0 %v326
      %v458 = vpop.f32.mrf.mxu0
      %v459 = vadd.f32 0.0, %v458
      %v460 = vpop.f32.mrf.mxu0
      %v461 = vadd.f32 0.0, %v460
      %462 = vdwg.mxu0
      %463 = vmatprep.subr.mxu0 %v391
      %464 = vmatpush1.msra.mxu0 %v390
      %465 = vmatprep.subr.mxu0 %v387
      %466 = vmatpush1.msra.mxu0 %v386
      %467 = vmatprep.subr.mxu0 %v383
      %468 = vmatpush1.msra.mxu0 %v382
      %469 = vmatprep.subr.mxu0 %v379
      %470 = vmatpush1.msra.mxu0 %v378
      %471 = vmatprep.subr.mxu0 %v375
      %472 = vmatpush1.msra.mxu0 %v374
      %473 = vmatprep.subr.mxu0 %v371
      %474 = vmatpush1.msra.mxu0 %v370
      %475 = vmatprep.subr.mxu0 %v367
      %476 = vmatpush1.msra.mxu0 %v366
      %477 = vmatprep.subr.mxu0 %v363
      %478 = vmatpush1.msra.mxu0 %v362
      %479 = vmatprep.subr.mxu0 %v359
      %480 = vmatpush1.msra.mxu0 %v358
      %481 = vmatprep.subr.mxu0 %v355
      %482 = vmatpush1.msra.mxu0 %v354
      %483 = vmatprep.subr.mxu0 %v351
      %484 = vmatpush1.msra.mxu0 %v350
      %485 = vmatprep.subr.mxu0 %v347
      %486 = vmatpush1.msra.mxu0 %v346
      %487 = vmatprep.subr.mxu0 %v343
      %488 = vmatpush1.msra.mxu0 %v342
      %489 = vmatprep.subr.mxu0 %v339
      %490 = vmatpush1.msra.mxu0 %v338
      %491 = vmatprep.subr.mxu0 %v335
      %492 = vmatpush1.msra.mxu0 %v334
      %493 = vmatprep.subr.mxu0 %v331
      %494 = vmatpush1.msra.mxu0 %v330
      %495 = vmatprep.subr.mxu0 0.0
      %496 = vmatpush2.msra.mxu0 0.0
      %497 = vmatprep.subr.mxu0 0.0
      %498 = vmatpush2.msra.mxu0 0.0
      %499 = vmatprep.subr.mxu0 0.0
      %500 = vmatpush2.msra.mxu0 0.0
      %501 = vmatprep.subr.mxu0 0.0
      %502 = vmatpush2.msra.mxu0 0.0
      %503 = vmatprep.subr.mxu0 0.0
      %504 = vmatpush2.msra.mxu0 0.0
      %505 = vmatprep.subr.mxu0 0.0
      %506 = vmatpush2.msra.mxu0 0.0
      %507 = vmatprep.subr.mxu0 0.0
      %508 = vmatpush2.msra.mxu0 0.0
      %509 = vmatprep.subr.mxu0 0.0
      %510 = vmatpush2.msra.mxu0 0.0
      %511 = vmatprep.subr.mxu0 0.0
      %512 = vmatpush2.msra.mxu0 0.0
      %513 = vmatprep.subr.mxu0 0.0
      %514 = vmatpush2.msra.mxu0 0.0
      %515 = vmatprep.subr.mxu0 0.0
      %516 = vmatpush2.msra.mxu0 0.0
      %517 = vmatprep.subr.mxu0 0.0
      %518 = vmatpush2.msra.mxu0 0.0
      %519 = vmatprep.subr.mxu0 0.0
      %520 = vmatpush2.msra.mxu0 0.0
      %521 = vmatprep.subr.mxu0 0.0
      %522 = vmatpush2.msra.mxu0 0.0
      %523 = vmatprep.subr.mxu0 0.0
      %524 = vmatpush2.msra.mxu0 0.0
      %525 = vmatprep.subr.mxu0 0.0
      %526 = vmatpush2.msra.mxu0 0.0
      %527 = vmatprep.mubr.f32.mxu0 0.0
      %528 = vmatmul.mubr.f32.gmra.mxu0 %v326
      %v529 = vpop.f32.mrf.mxu0
      %v530 = vadd.f32 0.0, %v529
      %v531 = vpop.f32.mrf.mxu0
      %v532 = vadd.f32 0.0, %v531
      %533 = vdwg.mxu0
      %v534 = vadd.f32 %v322, %v459
      %v535 = vadd.f32 %v323, %v461
      %v536 = vadd.f32 %v324, %v530
      %v537 = vadd.f32 %v325, %v532
      %v538 = vxor.u32 %v534, 2147483648
      %v539 = vmul.f32 %v538, 1.442695
      %v540 = vpow.pop %v539
      %v541 = vadd.f32 %v540, 1.0
      %v542 = vrcp.pop %v541
      %v543 = vmul.f32 1.0, %v542
      %v544 = vxor.u32 %v535, 2147483648
      %v545 = vmul.f32 %v544, 1.442695
      %v546 = vpow.pop %v545
      %v547 = vadd.f32 %v546, 1.0
      %v548 = vrcp.pop %v547
      %v549 = vmul.f32 1.0, %v548
      %v550 = vtanh.pop %v536
      %v551 = vxor.u32 %v537, 2147483648
      %v552 = vmul.f32 %v551, 1.442695
      %v553 = vpow.pop %v552
      %v554 = vadd.f32 %v553, 1.0
      %v555 = vrcp.pop %v554
      %v556 = vmul.f32 1.0, %v555
      %v557 = vmul.f32 %v549, %v327
      %v558 = vmul.f32 %v543, %v550
      %v559 = vadd.f32 %v557, %v558
      %v560 = vtanh.pop %v559
      %v561 = vmul.f32 %v556, %v560
      %v562 = vld [vmem:[%s302] sm:$0xff]
      %v563 = vld [vmem:[%s302 + $0x8] sm:$0xff]
      %v564 = vld [vmem:[%s302 + $0x10] sm:$0xff]
      %v565 = vld [vmem:[%s302 + $0x18] sm:$0xff]
      %v566 = vld [vmem:[#allocation4] sm:$0xff]
      %v567 = vld [vmem:[#allocation5] sm:$0xff]
      %v568 = vld [vmem:[%s3] sm:$0xff]
      %v569 = vld [vmem:[%s3 + $0x8] sm:$0xff]
      %v570 = vld [vmem:[%s3 + $0x10] sm:$0xff]
      %v571 = vld [vmem:[%s3 + $0x18] sm:$0xff]
      %v572 = vld [vmem:[%s3 + $0x20] sm:$0xff]
      %v573 = vld [vmem:[%s3 + $0x28] sm:$0xff]
      %v574 = vld [vmem:[%s3 + $0x30] sm:$0xff]
      %v575 = vld [vmem:[%s3 + $0x38] sm:$0xff]
      %v576 = vld [vmem:[%s3 + $0x40] sm:$0xff]
      %v577 = vld [vmem:[%s3 + $0x48] sm:$0xff]
      %v578 = vld [vmem:[%s3 + $0x50] sm:$0xff]
      %v579 = vld [vmem:[%s3 + $0x58] sm:$0xff]
      %v580 = vld [vmem:[%s3 + $0x60] sm:$0xff]
      %v581 = vld [vmem:[%s3 + $0x68] sm:$0xff]
      %v582 = vld [vmem:[%s3 + $0x70] sm:$0xff]
      %v583 = vld [vmem:[%s3 + $0x78] sm:$0xff]
      %v584 = vld [vmem:[%s3 + $0x80] sm:$0xff]
      %v585 = vld [vmem:[%s3 + $0x88] sm:$0xff]
      %v586 = vld [vmem:[%s3 + $0x90] sm:$0xff]
      %v587 = vld [vmem:[%s3 + $0x98] sm:$0xff]
      %v588 = vld [vmem:[%s3 + $0xa0] sm:$0xff]
      %v589 = vld [vmem:[%s3 + $0xa8] sm:$0xff]
      %v590 = vld [vmem:[%s3 + $0xb0] sm:$0xff]
      %v591 = vld [vmem:[%s3 + $0xb8] sm:$0xff]
      %v592 = vld [vmem:[%s3 + $0xc0] sm:$0xff]
      %v593 = vld [vmem:[%s3 + $0xc8] sm:$0xff]
      %v594 = vld [vmem:[%s3 + $0xd0] sm:$0xff]
      %v595 = vld [vmem:[%s3 + $0xd8] sm:$0xff]
      %v596 = vld [vmem:[%s3 + $0xe0] sm:$0xff]
      %v597 = vld [vmem:[%s3 + $0xe8] sm:$0xff]
      %v598 = vld [vmem:[%s3 + $0xf0] sm:$0xff]
      %v599 = vld [vmem:[%s3 + $0xf8] sm:$0xff]
      %v600 = vld [vmem:[%s3 + $0x100] sm:$0xff]
      %v601 = vld [vmem:[%s3 + $0x108] sm:$0xff]
      %v602 = vld [vmem:[%s3 + $0x110] sm:$0xff]
      %v603 = vld [vmem:[%s3 + $0x118] sm:$0xff]
      %v604 = vld [vmem:[%s3 + $0x120] sm:$0xff]
      %v605 = vld [vmem:[%s3 + $0x128] sm:$0xff]
      %v606 = vld [vmem:[%s3 + $0x130] sm:$0xff]
      %v607 = vld [vmem:[%s3 + $0x138] sm:$0xff]
      %v608 = vld [vmem:[%s3 + $0x140] sm:$0xff]
      %v609 = vld [vmem:[%s3 + $0x148] sm:$0xff]
      %v610 = vld [vmem:[%s3 + $0x150] sm:$0xff]
      %v611 = vld [vmem:[%s3 + $0x158] sm:$0xff]
      %v612 = vld [vmem:[%s3 + $0x160] sm:$0xff]
      %v613 = vld [vmem:[%s3 + $0x168] sm:$0xff]
      %v614 = vld [vmem:[%s3 + $0x170] sm:$0xff]
      %v615 = vld [vmem:[%s3 + $0x178] sm:$0xff]
      %v616 = vld [vmem:[%s3 + $0x180] sm:$0xff]
      %v617 = vld [vmem:[%s3 + $0x188] sm:$0xff]
      %v618 = vld [vmem:[%s3 + $0x190] sm:$0xff]
      %v619 = vld [vmem:[%s3 + $0x198] sm:$0xff]
      %v620 = vld [vmem:[%s3 + $0x1a0] sm:$0xff]
      %v621 = vld [vmem:[%s3 + $0x1a8] sm:$0xff]
      %v622 = vld [vmem:[%s3 + $0x1b0] sm:$0xff]
      %v623 = vld [vmem:[%s3 + $0x1b8] sm:$0xff]
      %v624 = vld [vmem:[%s3 + $0x1c0] sm:$0xff]
      %v625 = vld [vmem:[%s3 + $0x1c8] sm:$0xff]
      %v626 = vld [vmem:[%s3 + $0x1d0] sm:$0xff]
      %v627 = vld [vmem:[%s3 + $0x1d8] sm:$0xff]
      %v628 = vld [vmem:[%s3 + $0x1e0] sm:$0xff]
      %v629 = vld [vmem:[%s3 + $0x1e8] sm:$0xff]
      %v630 = vld [vmem:[%s3 + $0x1f0] sm:$0xff]
      %v631 = vld [vmem:[%s3 + $0x1f8] sm:$0xff]
      %632 = vmatprep.subr.mxu0 %v629
      %633 = vmatpush1.msra.mxu0 %v628
      %634 = vmatprep.subr.mxu0 %v625
      %635 = vmatpush1.msra.mxu0 %v624
      %636 = vmatprep.subr.mxu0 %v621
      %637 = vmatpush1.msra.mxu0 %v620
      %638 = vmatprep.subr.mxu0 %v617
      %639 = vmatpush1.msra.mxu0 %v616
      %640 = vmatprep.subr.mxu0 %v613
      %641 = vmatpush1.msra.mxu0 %v612
      %642 = vmatprep.subr.mxu0 %v609
      %643 = vmatpush1.msra.mxu0 %v608
      %644 = vmatprep.subr.mxu0 %v605
      %645 = vmatpush1.msra.mxu0 %v604
      %646 = vmatprep.subr.mxu0 %v601
      %647 = vmatpush1.msra.mxu0 %v600
      %648 = vmatprep.subr.mxu0 %v597
      %649 = vmatpush1.msra.mxu0 %v596
      %650 = vmatprep.subr.mxu0 %v593
      %651 = vmatpush1.msra.mxu0 %v592
      %652 = vmatprep.subr.mxu0 %v589
      %653 = vmatpush1.msra.mxu0 %v588
      %654 = vmatprep.subr.mxu0 %v585
      %655 = vmatpush1.msra.mxu0 %v584
      %656 = vmatprep.subr.mxu0 %v581
      %657 = vmatpush1.msra.mxu0 %v580
      %658 = vmatprep.subr.mxu0 %v577
      %659 = vmatpush1.msra.mxu0 %v576
      %660 = vmatprep.subr.mxu0 %v573
      %661 = vmatpush1.msra.mxu0 %v572
      %662 = vmatprep.subr.mxu0 %v569
      %663 = vmatpush1.msra.mxu0 %v568
      %664 = vmatprep.subr.mxu0 0.0
      %665 = vmatpush2.msra.mxu0 0.0
      %666 = vmatprep.subr.mxu0 0.0
      %667 = vmatpush2.msra.mxu0 0.0
      %668 = vmatprep.subr.mxu0 0.0
      %669 = vmatpush2.msra.mxu0 0.0
      %670 = vmatprep.subr.mxu0 0.0
      %671 = vmatpush2.msra.mxu0 0.0
      %672 = vmatprep.subr.mxu0 0.0
      %673 = vmatpush2.msra.mxu0 0.0
      %674 = vmatprep.subr.mxu0 0.0
      %675 = vmatpush2.msra.mxu0 0.0
      %676 = vmatprep.subr.mxu0 0.0
      %677 = vmatpush2.msra.mxu0 0.0
      %678 = vmatprep.subr.mxu0 0.0
      %679 = vmatpush2.msra.mxu0 0.0
      %680 = vmatprep.subr.mxu0 0.0
      %681 = vmatpush2.msra.mxu0 0.0
      %682 = vmatprep.subr.mxu0 0.0
      %683 = vmatpush2.msra.mxu0 0.0
      %684 = vmatprep.subr.mxu0 0.0
      %685 = vmatpush2.msra.mxu0 0.0
      %686 = vmatprep.subr.mxu0 0.0
      %687 = vmatpush2.msra.mxu0 0.0
      %688 = vmatprep.subr.mxu0 0.0
      %689 = vmatpush2.msra.mxu0 0.0
      %690 = vmatprep.subr.mxu0 0.0
      %691 = vmatpush2.msra.mxu0 0.0
      %692 = vmatprep.subr.mxu0 0.0
      %693 = vmatpush2.msra.mxu0 0.0
      %694 = vmatprep.subr.mxu0 0.0
      %695 = vmatpush2.msra.mxu0 0.0
      %696 = vmatprep.mubr.f32.mxu0 0.0
      %697 = vmatmul.mubr.f32.gmra.mxu0 %v566
      %v698 = vpop.f32.mrf.mxu0
      %v699 = vadd.f32 0.0, %v698
      %v700 = vpop.f32.mrf.mxu0
      %v701 = vadd.f32 0.0, %v700
      %702 = vdwg.mxu0
      %703 = vmatprep.subr.mxu0 %v631
      %704 = vmatpush1.msra.mxu0 %v630
      %705 = vmatprep.subr.mxu0 %v627
      %706 = vmatpush1.msra.mxu0 %v626
      %707 = vmatprep.subr.mxu0 %v623
      %708 = vmatpush1.msra.mxu0 %v622
      %709 = vmatprep.subr.mxu0 %v619
      %710 = vmatpush1.msra.mxu0 %v618
      %711 = vmatprep.subr.mxu0 %v615
      %712 = vmatpush1.msra.mxu0 %v614
      %713 = vmatprep.subr.mxu0 %v611
      %714 = vmatpush1.msra.mxu0 %v610
      %715 = vmatprep.subr.mxu0 %v607
      %716 = vmatpush1.msra.mxu0 %v606
      %717 = vmatprep.subr.mxu0 %v603
      %718 = vmatpush1.msra.mxu0 %v602
      %719 = vmatprep.subr.mxu0 %v599
      %720 = vmatpush1.msra.mxu0 %v598
      %721 = vmatprep.subr.mxu0 %v595
      %722 = vmatpush1.msra.mxu0 %v594
      %723 = vmatprep.subr.mxu0 %v591
      %724 = vmatpush1.msra.mxu0 %v590
      %725 = vmatprep.subr.mxu0 %v587
      %726 = vmatpush1.msra.mxu0 %v586
      %727 = vmatprep.subr.mxu0 %v583
      %728 = vmatpush1.msra.mxu0 %v582
      %729 = vmatprep.subr.mxu0 %v579
      %730 = vmatpush1.msra.mxu0 %v578
      %731 = vmatprep.subr.mxu0 %v575
      %732 = vmatpush1.msra.mxu0 %v574
      %733 = vmatprep.subr.mxu0 %v571
      %734 = vmatpush1.msra.mxu0 %v570
      %735 = vmatprep.subr.mxu0 0.0
      %736 = vmatpush2.msra.mxu0 0.0
      %737 = vmatprep.subr.mxu0 0.0
      %738 = vmatpush2.msra.mxu0 0.0
      %739 = vmatprep.subr.mxu0 0.0
      %740 = vmatpush2.msra.mxu0 0.0
      %741 = vmatprep.subr.mxu0 0.0
      %742 = vmatpush2.msra.mxu0 0.0
      %743 = vmatprep.subr.mxu0 0.0
      %744 = vmatpush2.msra.mxu0 0.0
      %745 = vmatprep.subr.mxu0 0.0
      %746 = vmatpush2.msra.mxu0 0.0
      %747 = vmatprep.subr.mxu0 0.0
      %748 = vmatpush2.msra.mxu0 0.0
      %749 = vmatprep.subr.mxu0 0.0
      %750 = vmatpush2.msra.mxu0 0.0
      %751 = vmatprep.subr.mxu0 0.0
      %752 = vmatpush2.msra.mxu0 0.0
      %753 = vmatprep.subr.mxu0 0.0
      %754 = vmatpush2.msra.mxu0 0.0
      %755 = vmatprep.subr.mxu0 0.0
      %756 = vmatpush2.msra.mxu0 0.0
      %757 = vmatprep.subr.mxu0 0.0
      %758 = vmatpush2.msra.mxu0 0.0
      %759 = vmatprep.subr.mxu0 0.0
      %760 = vmatpush2.msra.mxu0 0.0
      %761 = vmatprep.subr.mxu0 0.0
      %762 = vmatpush2.msra.mxu0 0.0
      %763 = vmatprep.subr.mxu0 0.0
      %764 = vmatpush2.msra.mxu0 0.0
      %765 = vmatprep.subr.mxu0 0.0
      %766 = vmatpush2.msra.mxu0 0.0
      %767 = vmatprep.mubr.f32.mxu0 0.0
      %768 = vmatmul.mubr.f32.gmra.mxu0 %v566
      %v769 = vpop.f32.mrf.mxu0
      %v770 = vadd.f32 0.0, %v769
      %v771 = vpop.f32.mrf.mxu0
      %v772 = vadd.f32 0.0, %v771
      %773 = vdwg.mxu0
      %v774 = vadd.f32 %v562, %v699
      %v775 = vadd.f32 %v563, %v701
      %v776 = vadd.f32 %v564, %v770
      %v777 = vadd.f32 %v565, %v772
      %v778 = vxor.u32 %v774, 2147483648
      %v779 = vmul.f32 %v778, 1.442695
      %v780 = vpow.pop %v779
      %v781 = vadd.f32 %v780, 1.0
      %v782 = vrcp.pop %v781
      %v783 = vmul.f32 1.0, %v782
      %v784 = vxor.u32 %v775, 2147483648
      %v785 = vmul.f32 %v784, 1.442695
      %v786 = vpow.pop %v785
      %v787 = vadd.f32 %v786, 1.0
      %v788 = vrcp.pop %v787
      %v789 = vmul.f32 1.0, %v788
      %v790 = vtanh.pop %v776
      %v791 = vxor.u32 %v777, 2147483648
      %v792 = vmul.f32 %v791, 1.442695
      %v793 = vpow.pop %v792
      %v794 = vadd.f32 %v793, 1.0
      %v795 = vrcp.pop %v794
      %v796 = vmul.f32 1.0, %v795
      %v797 = vmul.f32 %v789, %v567
      %v798 = vmul.f32 %v783, %v790
      %v799 = vadd.f32 %v797, %v798
      %v800 = vtanh.pop %v799
      %v801 = vmul.f32 %v796, %v800
      %802 = vst [vmem:[#allocation2] sm:$0xff] %v561
      %803 = vst [vmem:[#allocation3] sm:$0xff] %v559
      %804 = vst [vmem:[#allocation4] sm:$0xff] %v801
      %805 = vst [vmem:[#allocation5] sm:$0xff] %v799
      %806 = vst [vmem:[%s307] sm:$0xff] %v561
      %807 = vst [vmem:[%s312] sm:$0xff] %v801
      %808 = vst [vmem:[%s6] sm:$0xff] %v559
      %809 = vst [vmem:[%s7] sm:$0xff] %v799
      %p810 = scmp.lt.s32.totalorder %s19, 7
      %s811 = scalar_select %p810, %s19, 7
      %s812 = smul.addr %s811, 8
      %s813 = scalar_lea.vmem %s4, %s812
      %s814 = ssub.s32 7, %s19
      %p815 = scmp.lt.s32.totalorder %s814, 7
      %s816 = scalar_select %p815, %s814, 7
      %s817 = smul.addr %s816, 8
      %s818 = scalar_lea.vmem %s5, %s817
      // Predicated region
      $region41: #{_lambda_.10} parent=35 // pred_check
        %p819 = pneg %p133
      $region42: #{_lambda_.10} parent=35 // pred_check_branch
        %821 = sbr.rel (%p819) target = $region44
      $region43: #{_lambda_.10} parent=35 // pred_region
        _
      $region44: #{_lambda_.10} parent=35 // pred_fallthru
        _
      // Predicated region
      $region45: #{_lambda_.10} parent=35 // pred_check
        %p822 = pneg %p161
      $region46: #{_lambda_.10} parent=35 // pred_check_branch
        %824 = sbr.rel (%p822) target = $region48
      $region47: #{_lambda_.10} parent=35 // pred_region
        %s825 = ssub.s32 7, %s19
      $region48: #{_lambda_.10} parent=35 // pred_fallthru
        _
      // Predicated region
      $region49: #{_lambda_.10} parent=35 // pred_check
        %p826 = pneg %p182
      $region50: #{_lambda_.10} parent=35 // pred_check_branch
        %828 = sbr.rel (%p826) target = $region52
      $region51: #{_lambda_.10} parent=35 // pred_region
        _
      $region52: #{_lambda_.10} parent=35 // pred_fallthru
        _
      // Predicated region
      $region53: #{_lambda_.10} parent=35 // pred_check
        %p829 = pneg %p203
      $region54: #{_lambda_.10} parent=35 // pred_check_branch
        %831 = sbr.rel (%p829) target = $region56
      $region55: #{_lambda_.10} parent=35 // pred_region
        _
      $region56: #{_lambda_.10} parent=35 // pred_fallthru
        _
      // Predicated region
      $region57: #{_lambda_.10} parent=35 // pred_check
        %p832 = pneg %p182
      $region58: #{_lambda_.10} parent=35 // pred_check_branch
        %834 = sbr.rel (%p832) target = $region60
      $region59: #{_lambda_.10} parent=35 // pred_region
        _
      $region60: #{_lambda_.10} parent=35 // pred_fallthru
        _
      // Predicated region
      $region61: #{_lambda_.10} parent=35 // pred_check
        %p835 = pneg %p203
      $region62: #{_lambda_.10} parent=35 // pred_check_branch
        %837 = sbr.rel (%p835) target = $region64
      $region63: #{_lambda_.10} parent=35 // pred_region
        _
      $region64: #{_lambda_.10} parent=35 // pred_fallthru
        _
    $region36: #{_lambda_.10} parent=5 // pred_fallthru
      _
    %p838 = scmp.le.s32.totalorder 2, %s14
    // Predicated region
    $region65: #{_lambda_.10} parent=5 // pred_check
      %p839 = pneg %p838
    $region66: #{_lambda_.10} parent=5 // pred_check_branch
      %841 = sbr.rel (%p839) target = $region68
    $region67: #{_lambda_.10} parent=5 // pred_region
      %s842 = ssub.s32 %s14, 2
      // Predicated region
      $region69: #{_lambda_.10} parent=67 // pred_check
        %p843 = pneg %p139
      $region70: #{_lambda_.10} parent=67 // pred_check_branch
        %845 = sbr.rel (%p843) target = $region72
      $region71: #{_lambda_.10} parent=67 // pred_region
        %p846 = scmp.lt.s32.totalorder %s20, 7
        %s847 = scalar_select %p846, %s20, 7
        %s848 = smul.addr %s847, 8
        %s849 = scalar_lea.vmem %s4, %s848
      $region72: #{_lambda_.10} parent=67 // pred_fallthru
        _
      // Predicated region
      $region73: #{_lambda_.10} parent=67 // pred_check
        %p850 = pneg %p167
      $region74: #{_lambda_.10} parent=67 // pred_check_branch
        %852 = sbr.rel (%p850) target = $region76
      $region75: #{_lambda_.10} parent=67 // pred_region
        %s853 = ssub.s32 7, %s20
        %p854 = scmp.lt.s32.totalorder %s853, 7
        %s855 = scalar_select %p854, %s853, 7
        %s856 = smul.addr %s855, 8
        %s857 = scalar_lea.vmem %s5, %s856
      $region76: #{_lambda_.10} parent=67 // pred_fallthru
        _
    $region68: #{_lambda_.10} parent=5 // pred_fallthru
      _
  $region6: #{_lambda_.10} parent=0 // loop_footer
    %s18 = sadd.s32 1, %s14
  $region7: #{_lambda_.10} parent=0 // loop_footer_branch
    %13 = sbr.rel target = $region3
  $region8: #{_lambda_.10} parent=0 // loop_exit
    _

// kernel: _lambda_.15
$region0: #{_lambda_.15}
  #allocation0 [shape = 'u32[]', space=smem, size = 0x4, offset = 0x4, fixed_abs, tag = 'smem constant byte address 0x4 - core index']
  #allocation1 [shape = 'u32[144,128]{1,0:T(1,128)}', space=vmem, size = 0x12000, scoped, tag = 'internal scratch']
  #allocation2 [shape = 'f32[64,128]{1,0:T(8,128)}', space=vmem, size = 0x8000, scoped, tag = 'scratch operand']
  %s0 = inlined_call_operand.vmem [shape: f32[64,128], index: 0, kind: input, shape index: {}]
  %s1 = inlined_call_operand.vmem [shape: f32[128,128], index: 1, kind: input, shape index: {}]
  %s2 = inlined_call_operand.vmem [shape: f32[64,128], index: 2, kind: output, shape index: {}]
  %s3 = sld [smem:[#allocation0]]
  $region26: #{_lambda_.15} parent=0
    _
  %s5 = ssub.s32 1, %s3
  %s6 = scalar_select 0, %s5, %s3
  // Predicated region
  $region2: #{_lambda_.15} parent=0 // pred_check
    _
  $region3: #{_lambda_.15} parent=0 // pred_check_branch
    %8 = sbr.rel (0) target = $region5
  $region4: #{_lambda_.15} parent=0 // pred_region
    _
  $region5: #{_lambda_.15} parent=0 // pred_fallthru
    _
  // Predicated region
  $region6: #{_lambda_.15} parent=0 // pred_check
    _
  $region7: #{_lambda_.15} parent=0 // pred_check_branch
    %10 = sbr.rel (0) target = $region9
  $region8: #{_lambda_.15} parent=0 // pred_region
    _
  $region9: #{_lambda_.15} parent=0 // pred_fallthru
    _
  %p11 = scmp.eq.s32.totalorder 0, 0
  // Predicated region
  $region10: #{_lambda_.15} parent=0 // pred_check
    %p12 = pneg %p11
  $region11: #{_lambda_.15} parent=0 // pred_check_branch
    %14 = sbr.rel (%p12) target = $region13
  $region12: #{_lambda_.15} parent=0 // pred_region
    %15 = vst [vmem:[#allocation2] sm:$0xff] 0.0
    %16 = vst [vmem:[#allocation2 + $0x8] sm:$0xff] 0.0
    %17 = vst [vmem:[#allocation2 + $0x10] sm:$0xff] 0.0
    %18 = vst [vmem:[#allocation2 + $0x18] sm:$0xff] 0.0
    %19 = vst [vmem:[#allocation2 + $0x20] sm:$0xff] 0.0
    %20 = vst [vmem:[#allocation2 + $0x28] sm:$0xff] 0.0
    %21 = vst [vmem:[#allocation2 + $0x30] sm:$0xff] 0.0
    %22 = vst [vmem:[#allocation2 + $0x38] sm:$0xff] 0.0
  $region13: #{_lambda_.15} parent=0 // pred_fallthru
    _
  %v23 = vld [vmem:[#allocation2] sm:$0xff]
  %v24 = vld [vmem:[#allocation2 + $0x8] sm:$0xff]
  %v25 = vld [vmem:[#allocation2 + $0x10] sm:$0xff]
  %v26 = vld [vmem:[#allocation2 + $0x18] sm:$0xff]
  %v27 = vld [vmem:[#allocation2 + $0x20] sm:$0xff]
  %v28 = vld [vmem:[#allocation2 + $0x28] sm:$0xff]
  %v29 = vld [vmem:[#allocation2 + $0x30] sm:$0xff]
  %v30 = vld [vmem:[#allocation2 + $0x38] sm:$0xff]
  %v31 = vld [vmem:[%s0] sm:$0xff]
  %v32 = vld [vmem:[%s0 + $0x8] sm:$0xff]
  %v33 = vld [vmem:[%s0 + $0x10] sm:$0xff]
  %v34 = vld [vmem:[%s0 + $0x18] sm:$0xff]
  %v35 = vld [vmem:[%s0 + $0x20] sm:$0xff]
  %v36 = vld [vmem:[%s0 + $0x28] sm:$0xff]
  %v37 = vld [vmem:[%s0 + $0x30] sm:$0xff]
  %v38 = vld [vmem:[%s0 + $0x38] sm:$0xff]
  %v39 = vld [vmem:[%s1] sm:$0xff]
  %v40 = vld [vmem:[%s1 + $0x8] sm:$0xff]
  %v41 = vld [vmem:[%s1 + $0x10] sm:$0xff]
  %v42 = vld [vmem:[%s1 + $0x18] sm:$0xff]
  %v43 = vld [vmem:[%s1 + $0x20] sm:$0xff]
  %v44 = vld [vmem:[%s1 + $0x28] sm:$0xff]
  %v45 = vld [vmem:[%s1 + $0x30] sm:$0xff]
  %v46 = vld [vmem:[%s1 + $0x38] sm:$0xff]
  %v47 = vld [vmem:[%s1 + $0x40] sm:$0xff]
  %v48 = vld [vmem:[%s1 + $0x48] sm:$0xff]
  %v49 = vld [vmem:[%s1 + $0x50] sm:$0xff]
  %v50 = vld [vmem:[%s1 + $0x58] sm:$0xff]
  %v51 = vld [vmem:[%s1 + $0x60] sm:$0xff]
  %v52 = vld [vmem:[%s1 + $0x68] sm:$0xff]
  %v53 = vld [vmem:[%s1 + $0x70] sm:$0xff]
  %v54 = vld [vmem:[%s1 + $0x78] sm:$0xff]
  %55 = vmatprep.subr.mxu0 0.0
  %56 = vmatpush1.msra.mxu0 %v54
  %57 = vmatprep.subr.mxu0 0.0
  %58 = vmatpush1.msra.mxu0 %v53
  %59 = vmatprep.subr.mxu0 0.0
  %60 = vmatpush1.msra.mxu0 %v52
  %61 = vmatprep.subr.mxu0 0.0
  %62 = vmatpush1.msra.mxu0 %v51
  %63 = vmatprep.subr.mxu0 0.0
  %64 = vmatpush1.msra.mxu0 %v50
  %65 = vmatprep.subr.mxu0 0.0
  %66 = vmatpush1.msra.mxu0 %v49
  %67 = vmatprep.subr.mxu0 0.0
  %68 = vmatpush1.msra.mxu0 %v48
  %69 = vmatprep.subr.mxu0 0.0
  %70 = vmatpush1.msra.mxu0 %v47
  %71 = vmatprep.subr.mxu0 0.0
  %72 = vmatpush1.msra.mxu0 %v46
  %73 = vmatprep.subr.mxu0 0.0
  %74 = vmatpush1.msra.mxu0 %v45
  %75 = vmatprep.subr.mxu0 0.0
  %76 = vmatpush1.msra.mxu0 %v44
  %77 = vmatprep.subr.mxu0 0.0
  %78 = vmatpush1.msra.mxu0 %v43
  %79 = vmatprep.subr.mxu0 0.0
  %80 = vmatpush1.msra.mxu0 %v42
  %81 = vmatprep.subr.mxu0 0.0
  %82 = vmatpush1.msra.mxu0 %v41
  %83 = vmatprep.subr.mxu0 0.0
  %84 = vmatpush1.msra.mxu0 %v40
  %85 = vmatprep.subr.mxu0 0.0
  %86 = vmatpush1.msra.mxu0 %v39
  %87 = vmatprep.subr.mxu0 0.0
  %88 = vmatpush2.msra.mxu0 0.0
  %89 = vmatprep.subr.mxu0 0.0
  %90 = vmatpush2.msra.mxu0 0.0
  %91 = vmatprep.subr.mxu0 0.0
  %92 = vmatpush2.msra.mxu0 0.0
  %93 = vmatprep.subr.mxu0 0.0
  %94 = vmatpush2.msra.mxu0 0.0
  %95 = vmatprep.subr.mxu0 0.0
  %96 = vmatpush2.msra.mxu0 0.0
  %97 = vmatprep.subr.mxu0 0.0
  %98 = vmatpush2.msra.mxu0 0.0
  %99 = vmatprep.subr.mxu0 0.0
  %100 = vmatpush2.msra.mxu0 0.0
  %101 = vmatprep.subr.mxu0 0.0
  %102 = vmatpush2.msra.mxu0 0.0
  %103 = vmatprep.subr.mxu0 0.0
  %104 = vmatpush2.msra.mxu0 0.0
  %105 = vmatprep.subr.mxu0 0.0
  %106 = vmatpush2.msra.mxu0 0.0
  %107 = vmatprep.subr.mxu0 0.0
  %108 = vmatpush2.msra.mxu0 0.0
  %109 = vmatprep.subr.mxu0 0.0
  %110 = vmatpush2.msra.mxu0 0.0
  %111 = vmatprep.subr.mxu0 0.0
  %112 = vmatpush2.msra.mxu0 0.0
  %113 = vmatprep.subr.mxu0 0.0
  %114 = vmatpush2.msra.mxu0 0.0
  %115 = vmatprep.subr.mxu0 0.0
  %116 = vmatpush2.msra.mxu0 0.0
  %117 = vmatprep.subr.mxu0 0.0
  %118 = vmatpush2.msra.mxu0 0.0
  %119 = vmatprep.mubr.f32.mxu0 0.0
  %120 = vmatmul.mubr.f32.gmra.mxu0 %v31
  %v121 = vpop.f32.mrf.mxu0
  %v122 = vadd.f32 0.0, %v121
  %v123 = vpop.f32.mrf.mxu0
  %124 = vmatprep.mubr.f32.mxu0 0.0
  %125 = vmatmul.mubr.f32.gmra.mxu0 %v32
  %v126 = vpop.f32.mrf.mxu0
  %v127 = vadd.f32 0.0, %v126
  %v128 = vpop.f32.mrf.mxu0
  %129 = vmatprep.mubr.f32.mxu0 0.0
  %130 = vmatmul.mubr.f32.gmra.mxu0 %v33
  %v131 = vpop.f32.mrf.mxu0
  %v132 = vadd.f32 0.0, %v131
  %v133 = vpop.f32.mrf.mxu0
  %134 = vmatprep.mubr.f32.mxu0 0.0
  %135 = vmatmul.mubr.f32.gmra.mxu0 %v34
  %v136 = vpop.f32.mrf.mxu0
  %v137 = vadd.f32 0.0, %v136
  %v138 = vpop.f32.mrf.mxu0
  %139 = vmatprep.mubr.f32.mxu0 0.0
  %140 = vmatmul.mubr.f32.gmra.mxu0 %v35
  %v141 = vpop.f32.mrf.mxu0
  %v142 = vadd.f32 0.0, %v141
  %v143 = vpop.f32.mrf.mxu0
  %144 = vmatprep.mubr.f32.mxu0 0.0
  %145 = vmatmul.mubr.f32.gmra.mxu0 %v36
  %v146 = vpop.f32.mrf.mxu0
  %v147 = vadd.f32 0.0, %v146
  %v148 = vpop.f32.mrf.mxu0
  %149 = vmatprep.mubr.f32.mxu0 0.0
  %150 = vmatmul.mubr.f32.gmra.mxu0 %v37
  %v151 = vpop.f32.mrf.mxu0
  %v152 = vadd.f32 0.0, %v151
  %v153 = vpop.f32.mrf.mxu0
  %154 = vmatprep.mubr.f32.mxu0 0.0
  %155 = vmatmul.mubr.f32.gmra.mxu0 %v38
  %v156 = vpop.f32.mrf.mxu0
  %v157 = vadd.f32 0.0, %v156
  %v158 = vpop.f32.mrf.mxu0
  %159 = vdwg.mxu0
  %v160 = vadd.f32 %v23, %v122
  %v161 = vadd.f32 %v24, %v127
  %v162 = vadd.f32 %v25, %v132
  %v163 = vadd.f32 %v26, %v137
  %v164 = vadd.f32 %v27, %v142
  %v165 = vadd.f32 %v28, %v147
  %v166 = vadd.f32 %v29, %v152
  %v167 = vadd.f32 %v30, %v157
  %168 = vst [vmem:[#allocation2] sm:$0xff] %v160
  %169 = vst [vmem:[#allocation2 + $0x8] sm:$0xff] %v161
  %170 = vst [vmem:[#allocation2 + $0x10] sm:$0xff] %v162
  %171 = vst [vmem:[#allocation2 + $0x18] sm:$0xff] %v163
  %172 = vst [vmem:[#allocation2 + $0x20] sm:$0xff] %v164
  %173 = vst [vmem:[#allocation2 + $0x28] sm:$0xff] %v165
  %174 = vst [vmem:[#allocation2 + $0x30] sm:$0xff] %v166
  %175 = vst [vmem:[#allocation2 + $0x38] sm:$0xff] %v167
  // Predicated region
  $region14: #{_lambda_.15} parent=0 // pred_check
    %p176 = pneg %p11
  $region15: #{_lambda_.15} parent=0 // pred_check_branch
    %178 = sbr.rel (%p176) target = $region17
  $region16: #{_lambda_.15} parent=0 // pred_region
    %v179 = vld [vmem:[#allocation2] sm:$0xff]
    %v180 = vld [vmem:[#allocation2 + $0x8] sm:$0xff]
    %v181 = vld [vmem:[#allocation2 + $0x10] sm:$0xff]
    %v182 = vld [vmem:[#allocation2 + $0x18] sm:$0xff]
    %v183 = vld [vmem:[#allocation2 + $0x20] sm:$0xff]
    %v184 = vld [vmem:[#allocation2 + $0x28] sm:$0xff]
    %v185 = vld [vmem:[#allocation2 + $0x30] sm:$0xff]
    %v186 = vld [vmem:[#allocation2 + $0x38] sm:$0xff]
    %187 = vst [vmem:[%s2] sm:$0xff] %v179
    %188 = vst [vmem:[%s2 + $0x8] sm:$0xff] %v180
    %189 = vst [vmem:[%s2 + $0x10] sm:$0xff] %v181
    %190 = vst [vmem:[%s2 + $0x18] sm:$0xff] %v182
    %191 = vst [vmem:[%s2 + $0x20] sm:$0xff] %v183
    %192 = vst [vmem:[%s2 + $0x28] sm:$0xff] %v184
    %193 = vst [vmem:[%s2 + $0x30] sm:$0xff] %v185
    %194 = vst [vmem:[%s2 + $0x38] sm:$0xff] %v186
  $region17: #{_lambda_.15} parent=0 // pred_fallthru
    _
  // Predicated region
  $region18: #{_lambda_.15} parent=0 // pred_check
    _
  $region19: #{_lambda_.15} parent=0 // pred_check_branch
    %196 = sbr.rel (0) target = $region21
  $region20: #{_lambda_.15} parent=0 // pred_region
    _
  $region21: #{_lambda_.15} parent=0 // pred_fallthru
    _
  // Predicated region
  $region22: #{_lambda_.15} parent=0 // pred_check
    _
  $region23: #{_lambda_.15} parent=0 // pred_check_branch
    %198 = sbr.rel (0) target = $region25
  $region24: #{_lambda_.15} parent=0 // pred_region
    _
  $region25: #{_lambda_.15} parent=0 // pred_fallthru
    _

// kernel: _lambda_.14
$region0: #{_lambda_.14}
  #allocation0 [shape = 'u32[]', space=smem, size = 0x4, offset = 0x4, fixed_abs, tag = 'smem constant byte address 0x4 - core index']
  #allocation1 [shape = 'u32[144,128]{1,0:T(1,128)}', space=vmem, size = 0x12000, scoped, tag = 'internal scratch']
  #allocation2 [shape = 'f32[8,128]{1,0:T(8,128)}', space=vmem, size = 0x1000, scoped, tag = 'scratch operand']
  #allocation3 [shape = 'f32[8,128]{1,0:T(8,128)}', space=vmem, size = 0x1000, scoped, tag = 'scratch operand']
  #allocation4 [shape = 'f32[8,128]{1,0:T(8,128)}', space=vmem, size = 0x1000, scoped, tag = 'scratch operand']
  %s0 = inlined_call_operand.vmem [shape: f32[8,8,512], index: 0, kind: input, shape index: {}]
  %s1 = inlined_call_operand.vmem [shape: f32[128,512], index: 1, kind: input, shape index: {}]
  %s2 = inlined_call_operand.vmem [shape: f32[128,512], index: 2, kind: input, shape index: {}]
  %s3 = inlined_call_operand.vmem [shape: f32[8,8,256], index: 3, kind: input, shape index: {}]
  %s4 = inlined_call_operand.vmem [shape: f32[8,8,128], index: 4, kind: input, shape index: {}]
  %s5 = inlined_call_operand.vmem [shape: f32[128,128], index: 5, kind: input, shape index: {}]
  %s6 = inlined_call_operand.vmem [shape: f32[256,128], index: 6, kind: input, shape index: {}]
  %s7 = inlined_call_operand.vmem [shape: f32[8,128], index: 7, kind: input, shape index: {}]
  %s8 = inlined_call_operand.vmem [shape: f32[8,128], index: 8, kind: input, shape index: {}]
  %s9 = inlined_call_operand.vmem [shape: f32[8,8,128], index: 9, kind: output, shape index: {}]
  %s10 = sld [smem:[#allocation0]]
  $region73: #{_lambda_.14} parent=0
    _
  %s12 = ssub.s32 1, %s10
  %s13 = scalar_select 0, %s12, %s10
  loop: start=0, step=1, limit=10
  $region2: #{_lambda_.14} parent=0 // loop_pre_header
    _
  $region3: #{_lambda_.14} parent=0 // loop_header
    %s15 = sphi 0, %s19
    %p16 = scmp.ge.s32.totalorder %s15, 10
    %s25 = sphi 0, %s27
    %s28 = sphi 0, %s25
    %s29 = sphi 0, %s28
    %s45 = sphi 0, %s29
    %s49 = sphi 0, %s49
    %s51 = sphi 0, %s49
    %s52 = sphi 0, %s51
    %s66 = sphi 0, %s52
    %s70 = sphi 0, %s70
    %s72 = sphi 0, %s70
    %s73 = sphi 0, %s72
    %s87 = sphi 0, %s73
    %s91 = sphi 0, %s91
    %s93 = sphi 0, %s91
    %s94 = sphi 0, %s93
    %s108 = sphi 0, %s94
    %s112 = sphi 0, %s112
    %s114 = sphi 0, %s112
    %s115 = sphi 0, %s114
    %s129 = sphi 0, %s115
    %s133 = sphi 0, %s133
    %s135 = sphi 0, %s133
    %s136 = sphi 0, %s135
    %s150 = sphi 0, %s136
    %s154 = sphi 0, %s154
    %s156 = sphi 0, %s154
    %s157 = sphi 0, %s156
    %s171 = sphi 0, %s157
    %s175 = sphi 0, %s175
    %s177 = sphi 0, %s175
    %s178 = sphi 0, %s177
    %s192 = sphi 0, %s178
    %s196 = sphi 0, %s196
    %s198 = sphi 0, %s196
    %s199 = sphi 0, %s198
    %s213 = sphi 0, %s199
    %s219 = sphi 0, %s221
    %s222 = sphi 0, %s219
    %s223 = sphi 0, %s222
    %s239 = sphi 0, %s223
  $region4: #{_lambda_.14} parent=0 // loop_header_branch
    %18 = sbr.rel (%p16) target = $region8
  $region5: #{_lambda_.14} parent=0 // loop_body
    %s20 = ssub.s32 %s15, 1
    %s21 = ssub.s32 %s15, 2
    %s22 = sadd.s32 %s15, 1
    %s23 = ssub.s32 %s15, %s22
    %p24 = scmp.eq.s32.totalorder %s23, 0
    %s26 = sadd.s32 %s25, 1
    %s27 = scalar_select %p24, %s25, %s26
    %p30 = pneg %p24
    %p31 = scmp.eq.s32.totalorder %s15, 7
    %p32 = por %p30, %p31
    %p33 = scmp.ne.s32.totalorder %s25, %s28
    %p34 = scmp.eq.s32.totalorder %s15, 0
    %p35 = por %p33, %p34
    %p36 = scmp.ne.s32.totalorder %s25, %s28
    %p37 = scmp.eq.s32.totalorder %s20, 7
    %p38 = por %p36, %p37
    %p39 = scmp.ne.s32.totalorder %s28, %s29
    %p40 = scmp.eq.s32.totalorder %s20, 0
    %p41 = por %p39, %p40
    %p42 = scmp.ne.s32.totalorder %s28, %s29
    %p43 = scmp.eq.s32.totalorder %s21, 7
    %p44 = por %p42, %p43
    %p46 = scmp.ne.s32.totalorder %s29, %s45
    %p47 = scmp.eq.s32.totalorder %s21, 0
    %p48 = por %p46, %p47
    %s50 = sadd.s32 %s49, 1
    %p53 = scmp.eq.s32.totalorder %s15, 7
    %p54 = scmp.ne.s32.totalorder %s49, %s51
    %p55 = scmp.eq.s32.totalorder %s15, 0
    %p56 = por %p54, %p55
    %p57 = scmp.ne.s32.totalorder %s49, %s51
    %p58 = scmp.eq.s32.totalorder %s20, 7
    %p59 = por %p57, %p58
    %p60 = scmp.ne.s32.totalorder %s51, %s52
    %p61 = scmp.eq.s32.totalorder %s20, 0
    %p62 = por %p60, %p61
    %p63 = scmp.ne.s32.totalorder %s51, %s52
    %p64 = scmp.eq.s32.totalorder %s21, 7
    %p65 = por %p63, %p64
    %p67 = scmp.ne.s32.totalorder %s52, %s66
    %p68 = scmp.eq.s32.totalorder %s21, 0
    %p69 = por %p67, %p68
    %s71 = sadd.s32 %s70, 1
    %p74 = scmp.eq.s32.totalorder %s15, 7
    %p75 = scmp.ne.s32.totalorder %s70, %s72
    %p76 = scmp.eq.s32.totalorder %s15, 0
    %p77 = por %p75, %p76
    %p78 = scmp.ne.s32.totalorder %s70, %s72
    %p79 = scmp.eq.s32.totalorder %s20, 7
    %p80 = por %p78, %p79
    %p81 = scmp.ne.s32.totalorder %s72, %s73
    %p82 = scmp.eq.s32.totalorder %s20, 0
    %p83 = por %p81, %p82
    %p84 = scmp.ne.s32.totalorder %s72, %s73
    %p85 = scmp.eq.s32.totalorder %s21, 7
    %p86 = por %p84, %p85
    %p88 = scmp.ne.s32.totalorder %s73, %s87
    %p89 = scmp.eq.s32.totalorder %s21, 0
    %p90 = por %p88, %p89
    %s92 = sadd.s32 %s91, 1
    %p95 = scmp.eq.s32.totalorder %s15, 7
    %p96 = scmp.ne.s32.totalorder %s91, %s93
    %p97 = scmp.eq.s32.totalorder %s15, 0
    %p98 = por %p96, %p97
    %p99 = scmp.ne.s32.totalorder %s91, %s93
    %p100 = scmp.eq.s32.totalorder %s20, 7
    %p101 = por %p99, %p100
    %p102 = scmp.ne.s32.totalorder %s93, %s94
    %p103 = scmp.eq.s32.totalorder %s20, 0
    %p104 = por %p102, %p103
    %p105 = scmp.ne.s32.totalorder %s93, %s94
    %p106 = scmp.eq.s32.totalorder %s21, 7
    %p107 = por %p105, %p106
    %p109 = scmp.ne.s32.totalorder %s94, %s108
    %p110 = scmp.eq.s32.totalorder %s21, 0
    %p111 = por %p109, %p110
    %s113 = sadd.s32 %s112, 1
    %p116 = scmp.eq.s32.totalorder %s15, 7
    %p117 = scmp.ne.s32.totalorder %s112, %s114
    %p118 = scmp.eq.s32.totalorder %s15, 0
    %p119 = por %p117, %p118
    %p120 = scmp.ne.s32.totalorder %s112, %s114
    %p121 = scmp.eq.s32.totalorder %s20, 7
    %p122 = por %p120, %p121
    %p123 = scmp.ne.s32.totalorder %s114, %s115
    %p124 = scmp.eq.s32.totalorder %s20, 0
    %p125 = por %p123, %p124
    %p126 = scmp.ne.s32.totalorder %s114, %s115
    %p127 = scmp.eq.s32.totalorder %s21, 7
    %p128 = por %p126, %p127
    %p130 = scmp.ne.s32.totalorder %s115, %s129
    %p131 = scmp.eq.s32.totalorder %s21, 0
    %p132 = por %p130, %p131
    %s134 = sadd.s32 %s133, 1
    %p137 = scmp.eq.s32.totalorder %s15, 7
    %p138 = scmp.ne.s32.totalorder %s133, %s135
    %p139 = scmp.eq.s32.totalorder %s15, 0
    %p140 = por %p138, %p139
    %p141 = scmp.ne.s32.totalorder %s133, %s135
    %p142 = scmp.eq.s32.totalorder %s20, 7
    %p143 = por %p141, %p142
    %p144 = scmp.ne.s32.totalorder %s135, %s136
    %p145 = scmp.eq.s32.totalorder %s20, 0
    %p146 = por %p144, %p145
    %p147 = scmp.ne.s32.totalorder %s135, %s136
    %p148 = scmp.eq.s32.totalorder %s21, 7
    %p149 = por %p147, %p148
    %p151 = scmp.ne.s32.totalorder %s136, %s150
    %p152 = scmp.eq.s32.totalorder %s21, 0
    %p153 = por %p151, %p152
    %s155 = sadd.s32 %s154, 1
    %p158 = scmp.eq.s32.totalorder %s15, 7
    %p159 = scmp.ne.s32.totalorder %s154, %s156
    %p160 = scmp.eq.s32.totalorder %s15, 0
    %p161 = por %p159, %p160
    %p162 = scmp.ne.s32.totalorder %s154, %s156
    %p163 = scmp.eq.s32.totalorder %s20, 7
    %p164 = por %p162, %p163
    %p165 = scmp.ne.s32.totalorder %s156, %s157
    %p166 = scmp.eq.s32.totalorder %s20, 0
    %p167 = por %p165, %p166
    %p168 = scmp.ne.s32.totalorder %s156, %s157
    %p169 = scmp.eq.s32.totalorder %s21, 7
    %p170 = por %p168, %p169
    %p172 = scmp.ne.s32.totalorder %s157, %s171
    %p173 = scmp.eq.s32.totalorder %s21, 0
    %p174 = por %p172, %p173
    %s176 = sadd.s32 %s175, 1
    %p179 = scmp.eq.s32.totalorder %s15, 7
    %p180 = scmp.ne.s32.totalorder %s175, %s177
    %p181 = scmp.eq.s32.totalorder %s15, 0
    %p182 = por %p180, %p181
    %p183 = scmp.ne.s32.totalorder %s175, %s177
    %p184 = scmp.eq.s32.totalorder %s20, 7
    %p185 = por %p183, %p184
    %p186 = scmp.ne.s32.totalorder %s177, %s178
    %p187 = scmp.eq.s32.totalorder %s20, 0
    %p188 = por %p186, %p187
    %p189 = scmp.ne.s32.totalorder %s177, %s178
    %p190 = scmp.eq.s32.totalorder %s21, 7
    %p191 = por %p189, %p190
    %p193 = scmp.ne.s32.totalorder %s178, %s192
    %p194 = scmp.eq.s32.totalorder %s21, 0
    %p195 = por %p193, %p194
    %s197 = sadd.s32 %s196, 1
    %p200 = scmp.eq.s32.totalorder %s15, 7
    %p201 = scmp.ne.s32.totalorder %s196, %s198
    %p202 = scmp.eq.s32.totalorder %s15, 0
    %p203 = por %p201, %p202
    %p204 = scmp.ne.s32.totalorder %s196, %s198
    %p205 = scmp.eq.s32.totalorder %s20, 7
    %p206 = por %p204, %p205
    %p207 = scmp.ne.s32.totalorder %s198, %s199
    %p208 = scmp.eq.s32.totalorder %s20, 0
    %p209 = por %p207, %p208
    %p210 = scmp.ne.s32.totalorder %s198, %s199
    %p211 = scmp.eq.s32.totalorder %s21, 7
    %p212 = por %p210, %p211
    %p214 = scmp.ne.s32.totalorder %s199, %s213
    %p215 = scmp.eq.s32.totalorder %s21, 0
    %p216 = por %p214, %p215
    %s217 = ssub.s32 %s15, %s22
    %p218 = scmp.eq.s32.totalorder %s217, 0
    %s220 = sadd.s32 %s219, 1
    %s221 = scalar_select %p218, %s219, %s220
    %p224 = pneg %p218
    %p225 = scmp.eq.s32.totalorder %s15, 7
    %p226 = por %p224, %p225
    %p227 = scmp.ne.s32.totalorder %s219, %s222
    %p228 = scmp.eq.s32.totalorder %s15, 0
    %p229 = por %p227, %p228
    %p230 = scmp.ne.s32.totalorder %s219, %s222
    %p231 = scmp.eq.s32.totalorder %s20, 7
    %p232 = por %p230, %p231
    %p233 = scmp.ne.s32.totalorder %s222, %s223
    %p234 = scmp.eq.s32.totalorder %s20, 0
    %p235 = por %p233, %p234
    %p236 = scmp.ne.s32.totalorder %s222, %s223
    %p237 = scmp.eq.s32.totalorder %s21, 7
    %p238 = por %p236, %p237
    %p240 = scmp.ne.s32.totalorder %s223, %s239
    %p241 = scmp.eq.s32.totalorder %s21, 0
    %p242 = por %p240, %p241
    %p243 = scmp.le.s32.totalorder 1, %s15
    %p244 = scmp.lt.s32.totalorder %s15, 9
    %p245 = pnand %p243, %p244
    %p246 = pneg %p245
    // Predicated region
    $region9: #{_lambda_.14} parent=5 // pred_check
      _
    $region10: #{_lambda_.14} parent=5 // pred_check_branch
      %248 = sbr.rel (%p245) target = $region12
    $region11: #{_lambda_.14} parent=5 // pred_region
      %s249 = ssub.s32 %s15, 1
      // Predicated region
      $region13: #{_lambda_.14} parent=11 // pred_check
        %p250 = pneg %p62
      $region14: #{_lambda_.14} parent=11 // pred_check_branch
        %252 = sbr.rel (%p250) target = $region16
      $region15: #{_lambda_.14} parent=11 // pred_region
        _
      $region16: #{_lambda_.14} parent=11 // pred_fallthru
        _
      // Predicated region
      $region17: #{_lambda_.14} parent=11 // pred_check
        %p253 = pneg %p83
      $region18: #{_lambda_.14} parent=11 // pred_check_branch
        %255 = sbr.rel (%p253) target = $region20
      $region19: #{_lambda_.14} parent=11 // pred_region
        _
      $region20: #{_lambda_.14} parent=11 // pred_fallthru
        _
      // Predicated region
      $region21: #{_lambda_.14} parent=11 // pred_check
        %p256 = pneg %p104
      $region22: #{_lambda_.14} parent=11 // pred_check_branch
        %258 = sbr.rel (%p256) target = $region24
      $region23: #{_lambda_.14} parent=11 // pred_region
        _
      $region24: #{_lambda_.14} parent=11 // pred_fallthru
        _
      // Predicated region
      $region25: #{_lambda_.14} parent=11 // pred_check
        %p259 = pneg %p125
      $region26: #{_lambda_.14} parent=11 // pred_check_branch
        %261 = sbr.rel (%p259) target = $region28
      $region27: #{_lambda_.14} parent=11 // pred_region
        _
      $region28: #{_lambda_.14} parent=11 // pred_fallthru
        _
      // Predicated region
      $region29: #{_lambda_.14} parent=11 // pred_check
        %p262 = pneg %p146
      $region30: #{_lambda_.14} parent=11 // pred_check_branch
        %264 = sbr.rel (%p262) target = $region32
      $region31: #{_lambda_.14} parent=11 // pred_region
        _
      $region32: #{_lambda_.14} parent=11 // pred_fallthru
        _
      // Predicated region
      $region33: #{_lambda_.14} parent=11 // pred_check
        %p265 = pneg %p167
      $region34: #{_lambda_.14} parent=11 // pred_check_branch
        %267 = sbr.rel (%p265) target = $region36
      $region35: #{_lambda_.14} parent=11 // pred_region
        _
      $region36: #{_lambda_.14} parent=11 // pred_fallthru
        _
      // Predicated region
      $region37: #{_lambda_.14} parent=11 // pred_check
        %p268 = pneg %p188
      $region38: #{_lambda_.14} parent=11 // pred_check_branch
        %270 = sbr.rel (%p268) target = $region40
      $region39: #{_lambda_.14} parent=11 // pred_region
        _
      $region40: #{_lambda_.14} parent=11 // pred_fallthru
        _
      // Predicated region
      $region41: #{_lambda_.14} parent=11 // pred_check
        %p271 = pneg %p209
      $region42: #{_lambda_.14} parent=11 // pred_check_branch
        %273 = sbr.rel (%p271) target = $region44
      $region43: #{_lambda_.14} parent=11 // pred_region
        _
      $region44: #{_lambda_.14} parent=11 // pred_fallthru
        _
    $region12: #{_lambda_.14} parent=5 // pred_fallthru
      _
    %p274 = scmp.lt.s32.totalorder %s15, 8
    // Predicated region
    $region45: #{_lambda_.14} parent=5 // pred_check
      %p275 = pneg %p274
    $region46: #{_lambda_.14} parent=5 // pred_check_branch
      %277 = sbr.rel (%p275) target = $region48
    $region47: #{_lambda_.14} parent=5 // pred_region
      // Predicated region
      $region49: #{_lambda_.14} parent=47 // pred_check
        %p278 = pneg %p35
      $region50: #{_lambda_.14} parent=47 // pred_check_branch
        %280 = sbr.rel (%p278) target = $region52
      $region51: #{_lambda_.14} parent=47 // pred_region
        %p281 = scmp.lt.s32.totalorder %s15, 7
        %s282 = scalar_select %p281, %s15, 7
        %s283 = smul.addr %s282, 4
        %s284 = smul.addr %s283, 8
        %s285 = scalar_lea.vmem %s0, %s284
      $region52: #{_lambda_.14} parent=47 // pred_fallthru
        _
    $region48: #{_lambda_.14} parent=5 // pred_fallthru
      _
    %p286 = scmp.le.s32.totalorder 1, %s15
    %p287 = scmp.lt.s32.totalorder %s15, 9
    %p288 = pnand %p286, %p287
    %p289 = pneg %p288
    // Predicated region
    $region53: #{_lambda_.14} parent=5 // pred_check
      _
    $region54: #{_lambda_.14} parent=5 // pred_check_branch
      %291 = sbr.rel (%p288) target = $region56
    $region55: #{_lambda_.14} parent=5 // pred_region
      %s292 = ssub.s32 %s15, 1
      %p293 = scmp.lt.s32.totalorder %s20, 7
      %s294 = scalar_select %p293, %s20, 7
      %s295 = smul.addr %s294, 4
      %s296 = smul.addr %s295, 8
      %s297 = scalar_lea.vmem %s0, %s296
      %p298 = pneg %p41
      %p299 = pneg %p38
      %p300 = pneg %p62
      %p301 = pneg %p59
      %p302 = pneg %p83
      %p303 = pneg %p80
      %p304 = pneg %p104
      %p305 = pneg %p101
      %p306 = pneg %p125
      %p307 = pneg %p122
      %p308 = pneg %p146
      %p309 = pneg %p143
      %p310 = pneg %p167
      %p311 = pneg %p164
      %p312 = pneg %p188
      %p313 = pneg %p185
      %p314 = pneg %p209
      %p315 = pneg %p206
      %p316 = pneg %p235
      %p317 = pneg %p232
      %p318 = scmp.lt.s32.totalorder %s20, 7
      %s319 = scalar_select %p318, %s20, 7
      %s320 = smul.addr %s319, 8
      %s321 = scalar_lea.vmem %s9, %s320
      %p322 = scmp.lt.s32.totalorder %s20, 7
      %s323 = scalar_select %p322, %s20, 7
      %s324 = smul.addr %s323, 4
      %s325 = smul.addr %s324, 8
      %s326 = scalar_lea.vmem %s0, %s325
      %p327 = scmp.lt.s32.totalorder %s20, 7
      %s328 = scalar_select %p327, %s20, 7
      %s329 = smul.addr %s328, 8
      %s330 = scalar_lea.vmem %s9, %s329
      %p331 = scmp.eq.s32.totalorder %s20, 0
      // Predicated region
      $region57: #{_lambda_.14} parent=55 // pred_check
        %p332 = pneg %p331
      $region58: #{_lambda_.14} parent=55 // pred_check_branch
        %334 = sbr.rel (%p332) target = $region60
      $region59: #{_lambda_.14} parent=55 // pred_region
        %v335 = vld [vmem:[%s7] sm:$0xff]
        %336 = vst [vmem:[#allocation2] sm:$0xff] %v335
        %v337 = vld [vmem:[%s8] sm:$0xff]
        %338 = vst [vmem:[#allocation3] sm:$0xff] %v337
        %339 = vst [vmem:[#allocation4] sm:$0xff] 0.0
      $region60: #{_lambda_.14} parent=55 // pred_fallthru
        _
      %v340 = vld [vmem:[%s326] sm:$0xff]
      %v341 = vld [vmem:[%s326 + $0x8] sm:$0xff]
      %v342 = vld [vmem:[%s326 + $0x10] sm:$0xff]
      %v343 = vld [vmem:[%s326 + $0x18] sm:$0xff]
      %v344 = vld [vmem:[#allocation4] sm:$0xff]
      %v345 = vld [vmem:[%s1] sm:$0xff]
      %v346 = vld [vmem:[%s1 + $0x8] sm:$0xff]
      %v347 = vld [vmem:[%s1 + $0x10] sm:$0xff]
      %v348 = vld [vmem:[%s1 + $0x18] sm:$0xff]
      %v349 = vld [vmem:[%s1 + $0x20] sm:$0xff]
      %v350 = vld [vmem:[%s1 + $0x28] sm:$0xff]
      %v351 = vld [vmem:[%s1 + $0x30] sm:$0xff]
      %v352 = vld [vmem:[%s1 + $0x38] sm:$0xff]
      %v353 = vld [vmem:[%s1 + $0x40] sm:$0xff]
      %v354 = vld [vmem:[%s1 + $0x48] sm:$0xff]
      %v355 = vld [vmem:[%s1 + $0x50] sm:$0xff]
      %v356 = vld [vmem:[%s1 + $0x58] sm:$0xff]
      %v357 = vld [vmem:[%s1 + $0x60] sm:$0xff]
      %v358 = vld [vmem:[%s1 + $0x68] sm:$0xff]
      %v359 = vld [vmem:[%s1 + $0x70] sm:$0xff]
      %v360 = vld [vmem:[%s1 + $0x78] sm:$0xff]
      %v361 = vld [vmem:[%s1 + $0x80] sm:$0xff]
      %v362 = vld [vmem:[%s1 + $0x88] sm:$0xff]
      %v363 = vld [vmem:[%s1 + $0x90] sm:$0xff]
      %v364 = vld [vmem:[%s1 + $0x98] sm:$0xff]
      %v365 = vld [vmem:[%s1 + $0xa0] sm:$0xff]
      %v366 = vld [vmem:[%s1 + $0xa8] sm:$0xff]
      %v367 = vld [vmem:[%s1 + $0xb0] sm:$0xff]
      %v368 = vld [vmem:[%s1 + $0xb8] sm:$0xff]
      %v369 = vld [vmem:[%s1 + $0xc0] sm:$0xff]
      %v370 = vld [vmem:[%s1 + $0xc8] sm:$0xff]
      %v371 = vld [vmem:[%s1 + $0xd0] sm:$0xff]
      %v372 = vld [vmem:[%s1 + $0xd8] sm:$0xff]
      %v373 = vld [vmem:[%s1 + $0xe0] sm:$0xff]
      %v374 = vld [vmem:[%s1 + $0xe8] sm:$0xff]
      %v375 = vld [vmem:[%s1 + $0xf0] sm:$0xff]
      %v376 = vld [vmem:[%s1 + $0xf8] sm:$0xff]
      %v377 = vld [vmem:[%s1 + $0x100] sm:$0xff]
      %v378 = vld [vmem:[%s1 + $0x108] sm:$0xff]
      %v379 = vld [vmem:[%s1 + $0x110] sm:$0xff]
      %v380 = vld [vmem:[%s1 + $0x118] sm:$0xff]
      %v381 = vld [vmem:[%s1 + $0x120] sm:$0xff]
      %v382 = vld [vmem:[%s1 + $0x128] sm:$0xff]
      %v383 = vld [vmem:[%s1 + $0x130] sm:$0xff]
      %v384 = vld [vmem:[%s1 + $0x138] sm:$0xff]
      %v385 = vld [vmem:[%s1 + $0x140] sm:$0xff]
      %v386 = vld [vmem:[%s1 + $0x148] sm:$0xff]
      %v387 = vld [vmem:[%s1 + $0x150] sm:$0xff]
      %v388 = vld [vmem:[%s1 + $0x158] sm:$0xff]
      %v389 = vld [vmem:[%s1 + $0x160] sm:$0xff]
      %v390 = vld [vmem:[%s1 + $0x168] sm:$0xff]
      %v391 = vld [vmem:[%s1 + $0x170] sm:$0xff]
      %v392 = vld [vmem:[%s1 + $0x178] sm:$0xff]
      %v393 = vld [vmem:[%s1 + $0x180] sm:$0xff]
      %v394 = vld [vmem:[%s1 + $0x188] sm:$0xff]
      %v395 = vld [vmem:[%s1 + $0x190] sm:$0xff]
      %v396 = vld [vmem:[%s1 + $0x198] sm:$0xff]
      %v397 = vld [vmem:[%s1 + $0x1a0] sm:$0xff]
      %v398 = vld [vmem:[%s1 + $0x1a8] sm:$0xff]
      %v399 = vld [vmem:[%s1 + $0x1b0] sm:$0xff]
      %v400 = vld [vmem:[%s1 + $0x1b8] sm:$0xff]
      %v401 = vld [vmem:[%s1 + $0x1c0] sm:$0xff]
      %v402 = vld [vmem:[%s1 + $0x1c8] sm:$0xff]
      %v403 = vld [vmem:[%s1 + $0x1d0] sm:$0xff]
      %v404 = vld [vmem:[%s1 + $0x1d8] sm:$0xff]
      %v405 = vld [vmem:[%s1 + $0x1e0] sm:$0xff]
      %v406 = vld [vmem:[%s1 + $0x1e8] sm:$0xff]
      %v407 = vld [vmem:[%s1 + $0x1f0] sm:$0xff]
      %v408 = vld [vmem:[%s1 + $0x1f8] sm:$0xff]
      %409 = vmatprep.subr.mxu0 %v406
      %410 = vmatpush1.msra.mxu0 %v405
      %411 = vmatprep.subr.mxu0 %v402
      %412 = vmatpush1.msra.mxu0 %v401
      %413 = vmatprep.subr.mxu0 %v398
      %414 = vmatpush1.msra.mxu0 %v397
      %415 = vmatprep.subr.mxu0 %v394
      %416 = vmatpush1.msra.mxu0 %v393
      %417 = vmatprep.subr.mxu0 %v390
      %418 = vmatpush1.msra.mxu0 %v389
      %419 = vmatprep.subr.mxu0 %v386
      %420 = vmatpush1.msra.mxu0 %v385
      %421 = vmatprep.subr.mxu0 %v382
      %422 = vmatpush1.msra.mxu0 %v381
      %423 = vmatprep.subr.mxu0 %v378
      %424 = vmatpush1.msra.mxu0 %v377
      %425 = vmatprep.subr.mxu0 %v374
      %426 = vmatpush1.msra.mxu0 %v373
      %427 = vmatprep.subr.mxu0 %v370
      %428 = vmatpush1.msra.mxu0 %v369
      %429 = vmatprep.subr.mxu0 %v366
      %430 = vmatpush1.msra.mxu0 %v365
      %431 = vmatprep.subr.mxu0 %v362
      %432 = vmatpush1.msra.mxu0 %v361
      %433 = vmatprep.subr.mxu0 %v358
      %434 = vmatpush1.msra.mxu0 %v357
      %435 = vmatprep.subr.mxu0 %v354
      %436 = vmatpush1.msra.mxu0 %v353
      %437 = vmatprep.subr.mxu0 %v350
      %438 = vmatpush1.msra.mxu0 %v349
      %439 = vmatprep.subr.mxu0 %v346
      %440 = vmatpush1.msra.mxu0 %v345
      %441 = vmatprep.subr.mxu0 0.0
      %442 = vmatpush2.msra.mxu0 0.0
      %443 = vmatprep.subr.mxu0 0.0
      %444 = vmatpush2.msra.mxu0 0.0
      %445 = vmatprep.subr.mxu0 0.0
      %446 = vmatpush2.msra.mxu0 0.0
      %447 = vmatprep.subr.mxu0 0.0
      %448 = vmatpush2.msra.mxu0 0.0
      %449 = vmatprep.subr.mxu0 0.0
      %450 = vmatpush2.msra.mxu0 0.0
      %451 = vmatprep.subr.mxu0 0.0
      %452 = vmatpush2.msra.mxu0 0.0
      %453 = vmatprep.subr.mxu0 0.0
      %454 = vmatpush2.msra.mxu0 0.0
      %455 = vmatprep.subr.mxu0 0.0
      %456 = vmatpush2.msra.mxu0 0.0
      %457 = vmatprep.subr.mxu0 0.0
      %458 = vmatpush2.msra.mxu0 0.0
      %459 = vmatprep.subr.mxu0 0.0
      %460 = vmatpush2.msra.mxu0 0.0
      %461 = vmatprep.subr.mxu0 0.0
      %462 = vmatpush2.msra.mxu0 0.0
      %463 = vmatprep.subr.mxu0 0.0
      %464 = vmatpush2.msra.mxu0 0.0
      %465 = vmatprep.subr.mxu0 0.0
      %466 = vmatpush2.msra.mxu0 0.0
      %467 = vmatprep.subr.mxu0 0.0
      %468 = vmatpush2.msra.mxu0 0.0
      %469 = vmatprep.subr.mxu0 0.0
      %470 = vmatpush2.msra.mxu0 0.0
      %471 = vmatprep.subr.mxu0 0.0
      %472 = vmatpush2.msra.mxu0 0.0
      %473 = vmatprep.mubr.f32.mxu0 0.0
      %474 = vmatmul.mubr.f32.gmra.mxu0 %v344
      %v475 = vpop.f32.mrf.mxu0
      %v476 = vadd.f32 0.0, %v475
      %v477 = vpop.f32.mrf.mxu0
      %v478 = vadd.f32 0.0, %v477
      %479 = vdwg.mxu0
      %480 = vmatprep.subr.mxu0 %v408
      %481 = vmatpush1.msra.mxu0 %v407
      %482 = vmatprep.subr.mxu0 %v404
      %483 = vmatpush1.msra.mxu0 %v403
      %484 = vmatprep.subr.mxu0 %v400
      %485 = vmatpush1.msra.mxu0 %v399
      %486 = vmatprep.subr.mxu0 %v396
      %487 = vmatpush1.msra.mxu0 %v395
      %488 = vmatprep.subr.mxu0 %v392
      %489 = vmatpush1.msra.mxu0 %v391
      %490 = vmatprep.subr.mxu0 %v388
      %491 = vmatpush1.msra.mxu0 %v387
      %492 = vmatprep.subr.mxu0 %v384
      %493 = vmatpush1.msra.mxu0 %v383
      %494 = vmatprep.subr.mxu0 %v380
      %495 = vmatpush1.msra.mxu0 %v379
      %496 = vmatprep.subr.mxu0 %v376
      %497 = vmatpush1.msra.mxu0 %v375
      %498 = vmatprep.subr.mxu0 %v372
      %499 = vmatpush1.msra.mxu0 %v371
      %500 = vmatprep.subr.mxu0 %v368
      %501 = vmatpush1.msra.mxu0 %v367
      %502 = vmatprep.subr.mxu0 %v364
      %503 = vmatpush1.msra.mxu0 %v363
      %504 = vmatprep.subr.mxu0 %v360
      %505 = vmatpush1.msra.mxu0 %v359
      %506 = vmatprep.subr.mxu0 %v356
      %507 = vmatpush1.msra.mxu0 %v355
      %508 = vmatprep.subr.mxu0 %v352
      %509 = vmatpush1.msra.mxu0 %v351
      %510 = vmatprep.subr.mxu0 %v348
      %511 = vmatpush1.msra.mxu0 %v347
      %512 = vmatprep.subr.mxu0 0.0
      %513 = vmatpush2.msra.mxu0 0.0
      %514 = vmatprep.subr.mxu0 0.0
      %515 = vmatpush2.msra.mxu0 0.0
      %516 = vmatprep.subr.mxu0 0.0
      %517 = vmatpush2.msra.mxu0 0.0
      %518 = vmatprep.subr.mxu0 0.0
      %519 = vmatpush2.msra.mxu0 0.0
      %520 = vmatprep.subr.mxu0 0.0
      %521 = vmatpush2.msra.mxu0 0.0
      %522 = vmatprep.subr.mxu0 0.0
      %523 = vmatpush2.msra.mxu0 0.0
      %524 = vmatprep.subr.mxu0 0.0
      %525 = vmatpush2.msra.mxu0 0.0
      %526 = vmatprep.subr.mxu0 0.0
      %527 = vmatpush2.msra.mxu0 0.0
      %528 = vmatprep.subr.mxu0 0.0
      %529 = vmatpush2.msra.mxu0 0.0
      %530 = vmatprep.subr.mxu0 0.0
      %531 = vmatpush2.msra.mxu0 0.0
      %532 = vmatprep.subr.mxu0 0.0
      %533 = vmatpush2.msra.mxu0 0.0
      %534 = vmatprep.subr.mxu0 0.0
      %535 = vmatpush2.msra.mxu0 0.0
      %536 = vmatprep.subr.mxu0 0.0
      %537 = vmatpush2.msra.mxu0 0.0
      %538 = vmatprep.subr.mxu0 0.0
      %539 = vmatpush2.msra.mxu0 0.0
      %540 = vmatprep.subr.mxu0 0.0
      %541 = vmatpush2.msra.mxu0 0.0
      %542 = vmatprep.subr.mxu0 0.0
      %543 = vmatpush2.msra.mxu0 0.0
      %544 = vmatprep.mubr.f32.mxu0 0.0
      %545 = vmatmul.mubr.f32.gmra.mxu0 %v344
      %v546 = vpop.f32.mrf.mxu0
      %v547 = vadd.f32 0.0, %v546
      %v548 = vpop.f32.mrf.mxu0
      %v549 = vadd.f32 0.0, %v548
      %550 = vdwg.mxu0
      %v551 = vadd.f32 %v340, %v476
      %v552 = vadd.f32 %v341, %v478
      %v553 = vadd.f32 %v342, %v547
      %v554 = vadd.f32 %v343, %v549
      %v555 = vld [vmem:[#allocation2] sm:$0xff]
      %v556 = vld [vmem:[%s2] sm:$0xff]
      %v557 = vld [vmem:[%s2 + $0x8] sm:$0xff]
      %v558 = vld [vmem:[%s2 + $0x10] sm:$0xff]
      %v559 = vld [vmem:[%s2 + $0x18] sm:$0xff]
      %v560 = vld [vmem:[%s2 + $0x20] sm:$0xff]
      %v561 = vld [vmem:[%s2 + $0x28] sm:$0xff]
      %v562 = vld [vmem:[%s2 + $0x30] sm:$0xff]
      %v563 = vld [vmem:[%s2 + $0x38] sm:$0xff]
      %v564 = vld [vmem:[%s2 + $0x40] sm:$0xff]
      %v565 = vld [vmem:[%s2 + $0x48] sm:$0xff]
      %v566 = vld [vmem:[%s2 + $0x50] sm:$0xff]
      %v567 = vld [vmem:[%s2 + $0x58] sm:$0xff]
      %v568 = vld [vmem:[%s2 + $0x60] sm:$0xff]
      %v569 = vld [vmem:[%s2 + $0x68] sm:$0xff]
      %v570 = vld [vmem:[%s2 + $0x70] sm:$0xff]
      %v571 = vld [vmem:[%s2 + $0x78] sm:$0xff]
      %v572 = vld [vmem:[%s2 + $0x80] sm:$0xff]
      %v573 = vld [vmem:[%s2 + $0x88] sm:$0xff]
      %v574 = vld [vmem:[%s2 + $0x90] sm:$0xff]
      %v575 = vld [vmem:[%s2 + $0x98] sm:$0xff]
      %v576 = vld [vmem:[%s2 + $0xa0] sm:$0xff]
      %v577 = vld [vmem:[%s2 + $0xa8] sm:$0xff]
      %v578 = vld [vmem:[%s2 + $0xb0] sm:$0xff]
      %v579 = vld [vmem:[%s2 + $0xb8] sm:$0xff]
      %v580 = vld [vmem:[%s2 + $0xc0] sm:$0xff]
      %v581 = vld [vmem:[%s2 + $0xc8] sm:$0xff]
      %v582 = vld [vmem:[%s2 + $0xd0] sm:$0xff]
      %v583 = vld [vmem:[%s2 + $0xd8] sm:$0xff]
      %v584 = vld [vmem:[%s2 + $0xe0] sm:$0xff]
      %v585 = vld [vmem:[%s2 + $0xe8] sm:$0xff]
      %v586 = vld [vmem:[%s2 + $0xf0] sm:$0xff]
      %v587 = vld [vmem:[%s2 + $0xf8] sm:$0xff]
      %v588 = vld [vmem:[%s2 + $0x100] sm:$0xff]
      %v589 = vld [vmem:[%s2 + $0x108] sm:$0xff]
      %v590 = vld [vmem:[%s2 + $0x110] sm:$0xff]
      %v591 = vld [vmem:[%s2 + $0x118] sm:$0xff]
      %v592 = vld [vmem:[%s2 + $0x120] sm:$0xff]
      %v593 = vld [vmem:[%s2 + $0x128] sm:$0xff]
      %v594 = vld [vmem:[%s2 + $0x130] sm:$0xff]
      %v595 = vld [vmem:[%s2 + $0x138] sm:$0xff]
      %v596 = vld [vmem:[%s2 + $0x140] sm:$0xff]
      %v597 = vld [vmem:[%s2 + $0x148] sm:$0xff]
      %v598 = vld [vmem:[%s2 + $0x150] sm:$0xff]
      %v599 = vld [vmem:[%s2 + $0x158] sm:$0xff]
      %v600 = vld [vmem:[%s2 + $0x160] sm:$0xff]
      %v601 = vld [vmem:[%s2 + $0x168] sm:$0xff]
      %v602 = vld [vmem:[%s2 + $0x170] sm:$0xff]
      %v603 = vld [vmem:[%s2 + $0x178] sm:$0xff]
      %v604 = vld [vmem:[%s2 + $0x180] sm:$0xff]
      %v605 = vld [vmem:[%s2 + $0x188] sm:$0xff]
      %v606 = vld [vmem:[%s2 + $0x190] sm:$0xff]
      %v607 = vld [vmem:[%s2 + $0x198] sm:$0xff]
      %v608 = vld [vmem:[%s2 + $0x1a0] sm:$0xff]
      %v609 = vld [vmem:[%s2 + $0x1a8] sm:$0xff]
      %v610 = vld [vmem:[%s2 + $0x1b0] sm:$0xff]
      %v611 = vld [vmem:[%s2 + $0x1b8] sm:$0xff]
      %v612 = vld [vmem:[%s2 + $0x1c0] sm:$0xff]
      %v613 = vld [vmem:[%s2 + $0x1c8] sm:$0xff]
      %v614 = vld [vmem:[%s2 + $0x1d0] sm:$0xff]
      %v615 = vld [vmem:[%s2 + $0x1d8] sm:$0xff]
      %v616 = vld [vmem:[%s2 + $0x1e0] sm:$0xff]
      %v617 = vld [vmem:[%s2 + $0x1e8] sm:$0xff]
      %v618 = vld [vmem:[%s2 + $0x1f0] sm:$0xff]
      %v619 = vld [vmem:[%s2 + $0x1f8] sm:$0xff]
      %620 = vmatprep.subr.mxu0 %v617
      %621 = vmatpush1.msra.mxu0 %v616
      %622 = vmatprep.subr.mxu0 %v613
      %623 = vmatpush1.msra.mxu0 %v612
      %624 = vmatprep.subr.mxu0 %v609
      %625 = vmatpush1.msra.mxu0 %v608
      %626 = vmatprep.subr.mxu0 %v605
      %627 = vmatpush1.msra.mxu0 %v604
      %628 = vmatprep.subr.mxu0 %v601
      %629 = vmatpush1.msra.mxu0 %v600
      %630 = vmatprep.subr.mxu0 %v597
      %631 = vmatpush1.msra.mxu0 %v596
      %632 = vmatprep.subr.mxu0 %v593
      %633 = vmatpush1.msra.mxu0 %v592
      %634 = vmatprep.subr.mxu0 %v589
      %635 = vmatpush1.msra.mxu0 %v588
      %636 = vmatprep.subr.mxu0 %v585
      %637 = vmatpush1.msra.mxu0 %v584
      %638 = vmatprep.subr.mxu0 %v581
      %639 = vmatpush1.msra.mxu0 %v580
      %640 = vmatprep.subr.mxu0 %v577
      %641 = vmatpush1.msra.mxu0 %v576
      %642 = vmatprep.subr.mxu0 %v573
      %643 = vmatpush1.msra.mxu0 %v572
      %644 = vmatprep.subr.mxu0 %v569
      %645 = vmatpush1.msra.mxu0 %v568
      %646 = vmatprep.subr.mxu0 %v565
      %647 = vmatpush1.msra.mxu0 %v564
      %648 = vmatprep.subr.mxu0 %v561
      %649 = vmatpush1.msra.mxu0 %v560
      %650 = vmatprep.subr.mxu0 %v557
      %651 = vmatpush1.msra.mxu0 %v556
      %652 = vmatprep.subr.mxu0 0.0
      %653 = vmatpush2.msra.mxu0 0.0
      %654 = vmatprep.subr.mxu0 0.0
      %655 = vmatpush2.msra.mxu0 0.0
      %656 = vmatprep.subr.mxu0 0.0
      %657 = vmatpush2.msra.mxu0 0.0
      %658 = vmatprep.subr.mxu0 0.0
      %659 = vmatpush2.msra.mxu0 0.0
      %660 = vmatprep.subr.mxu0 0.0
      %661 = vmatpush2.msra.mxu0 0.0
      %662 = vmatprep.subr.mxu0 0.0
      %663 = vmatpush2.msra.mxu0 0.0
      %664 = vmatprep.subr.mxu0 0.0
      %665 = vmatpush2.msra.mxu0 0.0
      %666 = vmatprep.subr.mxu0 0.0
      %667 = vmatpush2.msra.mxu0 0.0
      %668 = vmatprep.subr.mxu0 0.0
      %669 = vmatpush2.msra.mxu0 0.0
      %670 = vmatprep.subr.mxu0 0.0
      %671 = vmatpush2.msra.mxu0 0.0
      %672 = vmatprep.subr.mxu0 0.0
      %673 = vmatpush2.msra.mxu0 0.0
      %674 = vmatprep.subr.mxu0 0.0
      %675 = vmatpush2.msra.mxu0 0.0
      %676 = vmatprep.subr.mxu0 0.0
      %677 = vmatpush2.msra.mxu0 0.0
      %678 = vmatprep.subr.mxu0 0.0
      %679 = vmatpush2.msra.mxu0 0.0
      %680 = vmatprep.subr.mxu0 0.0
      %681 = vmatpush2.msra.mxu0 0.0
      %682 = vmatprep.subr.mxu0 0.0
      %683 = vmatpush2.msra.mxu0 0.0
      %684 = vmatprep.mubr.f32.mxu0 0.0
      %685 = vmatmul.mubr.f32.gmra.mxu0 %v555
      %v686 = vpop.f32.mrf.mxu0
      %v687 = vadd.f32 0.0, %v686
      %v688 = vpop.f32.mrf.mxu0
      %v689 = vadd.f32 0.0, %v688
      %690 = vdwg.mxu0
      %691 = vmatprep.subr.mxu0 %v619
      %692 = vmatpush1.msra.mxu0 %v618
      %693 = vmatprep.subr.mxu0 %v615
      %694 = vmatpush1.msra.mxu0 %v614
      %695 = vmatprep.subr.mxu0 %v611
      %696 = vmatpush1.msra.mxu0 %v610
      %697 = vmatprep.subr.mxu0 %v607
      %698 = vmatpush1.msra.mxu0 %v606
      %699 = vmatprep.subr.mxu0 %v603
      %700 = vmatpush1.msra.mxu0 %v602
      %701 = vmatprep.subr.mxu0 %v599
      %702 = vmatpush1.msra.mxu0 %v598
      %703 = vmatprep.subr.mxu0 %v595
      %704 = vmatpush1.msra.mxu0 %v594
      %705 = vmatprep.subr.mxu0 %v591
      %706 = vmatpush1.msra.mxu0 %v590
      %707 = vmatprep.subr.mxu0 %v587
      %708 = vmatpush1.msra.mxu0 %v586
      %709 = vmatprep.subr.mxu0 %v583
      %710 = vmatpush1.msra.mxu0 %v582
      %711 = vmatprep.subr.mxu0 %v579
      %712 = vmatpush1.msra.mxu0 %v578
      %713 = vmatprep.subr.mxu0 %v575
      %714 = vmatpush1.msra.mxu0 %v574
      %715 = vmatprep.subr.mxu0 %v571
      %716 = vmatpush1.msra.mxu0 %v570
      %717 = vmatprep.subr.mxu0 %v567
      %718 = vmatpush1.msra.mxu0 %v566
      %719 = vmatprep.subr.mxu0 %v563
      %720 = vmatpush1.msra.mxu0 %v562
      %721 = vmatprep.subr.mxu0 %v559
      %722 = vmatpush1.msra.mxu0 %v558
      %723 = vmatprep.subr.mxu0 0.0
      %724 = vmatpush2.msra.mxu0 0.0
      %725 = vmatprep.subr.mxu0 0.0
      %726 = vmatpush2.msra.mxu0 0.0
      %727 = vmatprep.subr.mxu0 0.0
      %728 = vmatpush2.msra.mxu0 0.0
      %729 = vmatprep.subr.mxu0 0.0
      %730 = vmatpush2.msra.mxu0 0.0
      %731 = vmatprep.subr.mxu0 0.0
      %732 = vmatpush2.msra.mxu0 0.0
      %733 = vmatprep.subr.mxu0 0.0
      %734 = vmatpush2.msra.mxu0 0.0
      %735 = vmatprep.subr.mxu0 0.0
      %736 = vmatpush2.msra.mxu0 0.0
      %737 = vmatprep.subr.mxu0 0.0
      %738 = vmatpush2.msra.mxu0 0.0
      %739 = vmatprep.subr.mxu0 0.0
      %740 = vmatpush2.msra.mxu0 0.0
      %741 = vmatprep.subr.mxu0 0.0
      %742 = vmatpush2.msra.mxu0 0.0
      %743 = vmatprep.subr.mxu0 0.0
      %744 = vmatpush2.msra.mxu0 0.0
      %745 = vmatprep.subr.mxu0 0.0
      %746 = vmatpush2.msra.mxu0 0.0
      %747 = vmatprep.subr.mxu0 0.0
      %748 = vmatpush2.msra.mxu0 0.0
      %749 = vmatprep.subr.mxu0 0.0
      %750 = vmatpush2.msra.mxu0 0.0
      %751 = vmatprep.subr.mxu0 0.0
      %752 = vmatpush2.msra.mxu0 0.0
      %753 = vmatprep.subr.mxu0 0.0
      %754 = vmatpush2.msra.mxu0 0.0
      %755 = vmatprep.mubr.f32.mxu0 0.0
      %756 = vmatmul.mubr.f32.gmra.mxu0 %v555
      %v757 = vpop.f32.mrf.mxu0
      %v758 = vadd.f32 0.0, %v757
      %v759 = vpop.f32.mrf.mxu0
      %v760 = vadd.f32 0.0, %v759
      %761 = vdwg.mxu0
      %v762 = vadd.f32 %v551, %v687
      %v763 = vadd.f32 %v552, %v689
      %v764 = vadd.f32 %v553, %v758
      %v765 = vadd.f32 %v554, %v760
      %v766 = vxor.u32 %v762, 2147483648
      %v767 = vmul.f32 %v766, 1.442695
      %v768 = vpow.pop %v767
      %v769 = vadd.f32 %v768, 1.0
      %v770 = vrcp.pop %v769
      %v771 = vmul.f32 1.0, %v770
      %v772 = vxor.u32 %v763, 2147483648
      %v773 = vmul.f32 %v772, 1.442695
      %v774 = vpow.pop %v773
      %v775 = vadd.f32 %v774, 1.0
      %v776 = vrcp.pop %v775
      %v777 = vmul.f32 1.0, %v776
      %v778 = vtanh.pop %v764
      %v779 = vxor.u32 %v765, 2147483648
      %v780 = vmul.f32 %v779, 1.442695
      %v781 = vpow.pop %v780
      %v782 = vadd.f32 %v781, 1.0
      %v783 = vrcp.pop %v782
      %v784 = vmul.f32 1.0, %v783
      %v785 = vld [vmem:[#allocation3] sm:$0xff]
      %v786 = vmul.f32 %v777, %v785
      %v787 = vmul.f32 %v771, %v778
      %v788 = vadd.f32 %v786, %v787
      %v789 = vtanh.pop %v788
      %v790 = vmul.f32 %v784, %v789
      %v792 = vcombine.high %v790, %v790
      %v794 = vunpack.c.l.s4 1966171168
      %v795 = vunpack.c.0.s8 %v794
      %v796 = vlaneseq
      %v797 = vshrl.u32 %v796, 7
      %v798 = vsub.s32 %v795, %v797
      %v799 = vrot.slane %v790, %v798
      %v801 = vunpack.c.l.s4 1966171168
      %v802 = vunpack.c.0.s8 %v801
      %v803 = vlaneseq
      %v804 = vshrl.u32 %v803, 7
      %v805 = vsub.s32 %v802, %v804
      %v806 = vrot.slane %v792, %v805
      %v807 = vcombine.high %v799, %v799
      %v808 = vcombine.high %v806, %v806
      %v810 = vunpack.c.l.s4 1966171168
      %v811 = vunpack.c.0.s8 %v810
      %v812 = vlaneseq
      %v813 = vshrl.u32 %v812, 7
      %v814 = vsub.s32 %v811, %v813
      %v815 = vrot.slane %v799, %v814
      %v817 = vunpack.c.l.s4 1966171168
      %v818 = vunpack.c.0.s8 %v817
      %v819 = vlaneseq
      %v820 = vshrl.u32 %v819, 7
      %v821 = vsub.s32 %v818, %v820
      %v822 = vrot.slane %v806, %v821
      %v824 = vunpack.c.l.s4 1966171168
      %v825 = vunpack.c.0.s8 %v824
      %v826 = vlaneseq
      %v827 = vshrl.u32 %v826, 7
      %v828 = vsub.s32 %v825, %v827
      %v829 = vrot.slane %v807, %v828
      %v831 = vunpack.c.l.s4 1966171168
      %v832 = vunpack.c.0.s8 %v831
      %v833 = vlaneseq
      %v834 = vshrl.u32 %v833, 7
      %v835 = vsub.s32 %v832, %v834
      %v836 = vrot.slane %v808, %v835
      %v837 = vcombine.high %v815, %v815
      %v838 = vcombine.high %v822, %v822
      %v839 = vcombine.high %v829, %v829
      %v840 = vcombine.high %v836, %v836
      %v849 = vld [vmem:[%s4] sm:$0xff]
      %v850 = vld [vmem:[%s4 + $0x8] sm:$0xff]
      %v851 = vld [vmem:[%s4 + $0x10] sm:$0xff]
      %v852 = vld [vmem:[%s4 + $0x18] sm:$0xff]
      %v853 = vld [vmem:[%s4 + $0x20] sm:$0xff]
      %v854 = vld [vmem:[%s4 + $0x28] sm:$0xff]
      %v855 = vld [vmem:[%s4 + $0x30] sm:$0xff]
      %v856 = vld [vmem:[%s4 + $0x38] sm:$0xff]
      %857 = vmatprep.subr.mxu0 0.0
      %858 = vmatpush1.xpose.msra.mxu0 0.0
      %859 = vmatprep.subr.mxu0 0.0
      %860 = vmatpush1.xpose.msra.mxu0 0.0
      %861 = vmatprep.subr.mxu0 0.0
      %862 = vmatpush1.xpose.msra.mxu0 0.0
      %863 = vmatprep.subr.mxu0 0.0
      %864 = vmatpush1.xpose.msra.mxu0 0.0
      %865 = vmatprep.subr.mxu0 0.0
      %866 = vmatpush1.xpose.msra.mxu0 0.0
      %867 = vmatprep.subr.mxu0 0.0
      %868 = vmatpush1.xpose.msra.mxu0 0.0
      %869 = vmatprep.subr.mxu0 0.0
      %870 = vmatpush1.xpose.msra.mxu0 0.0
      %871 = vmatprep.subr.mxu0 0.0
      %872 = vmatpush1.xpose.msra.mxu0 0.0
      %873 = vmatprep.subr.mxu0 0.0
      %874 = vmatpush1.xpose.msra.mxu0 0.0
      %875 = vmatprep.subr.mxu0 0.0
      %876 = vmatpush1.xpose.msra.mxu0 0.0
      %877 = vmatprep.subr.mxu0 0.0
      %878 = vmatpush1.xpose.msra.mxu0 0.0
      %879 = vmatprep.subr.mxu0 0.0
      %880 = vmatpush1.xpose.msra.mxu0 0.0
      %881 = vmatprep.subr.mxu0 0.0
      %882 = vmatpush1.xpose.msra.mxu0 0.0
      %883 = vmatprep.subr.mxu0 0.0
      %884 = vmatpush1.xpose.msra.mxu0 0.0
      %885 = vmatprep.subr.mxu0 0.0
      %886 = vmatpush1.xpose.msra.mxu0 0.0
      %887 = vmatprep.subr.mxu0 0.0
      %888 = vmatpush1.xpose.msra.mxu0 %v849
      %889 = vmatprep.subr.mxu0 0.0
      %890 = vmatpush2.xpose.msra.mxu0 0.0
      %891 = vmatprep.subr.mxu0 0.0
      %892 = vmatpush2.xpose.msra.mxu0 0.0
      %893 = vmatprep.subr.mxu0 0.0
      %894 = vmatpush2.xpose.msra.mxu0 0.0
      %895 = vmatprep.subr.mxu0 0.0
      %896 = vmatpush2.xpose.msra.mxu0 0.0
      %897 = vmatprep.subr.mxu0 0.0
      %898 = vmatpush2.xpose.msra.mxu0 0.0
      %899 = vmatprep.subr.mxu0 0.0
      %900 = vmatpush2.xpose.msra.mxu0 0.0
      %901 = vmatprep.subr.mxu0 0.0
      %902 = vmatpush2.xpose.msra.mxu0 0.0
      %903 = vmatprep.subr.mxu0 0.0
      %904 = vmatpush2.xpose.msra.mxu0 0.0
      %905 = vmatprep.subr.mxu0 0.0
      %906 = vmatpush2.xpose.msra.mxu0 0.0
      %907 = vmatprep.subr.mxu0 0.0
      %908 = vmatpush2.xpose.msra.mxu0 0.0
      %909 = vmatprep.subr.mxu0 0.0
      %910 = vmatpush2.xpose.msra.mxu0 0.0
      %911 = vmatprep.subr.mxu0 0.0
      %912 = vmatpush2.xpose.msra.mxu0 0.0
      %913 = vmatprep.subr.mxu0 0.0
      %914 = vmatpush2.xpose.msra.mxu0 0.0
      %915 = vmatprep.subr.mxu0 0.0
      %916 = vmatpush2.xpose.msra.mxu0 0.0
      %917 = vmatprep.subr.mxu0 0.0
      %918 = vmatpush2.xpose.msra.mxu0 0.0
      %919 = vmatprep.subr.mxu0 0.0
      %920 = vmatpush2.xpose.msra.mxu0 0.0
      %921 = vmatprep.mubr.f32.mxu0 0.0
      %922 = vmatmul.mubr.f32.gmra.mxu0 %v815
      %v923 = vpop.f32.mrf.mxu0
      %v924 = vadd.f32 0.0, %v923
      %v925 = vpop.f32.mrf.mxu0
      %926 = vdwg.mxu0
      %927 = vmatprep.subr.mxu0 0.0
      %928 = vmatpush1.xpose.msra.mxu0 0.0
      %929 = vmatprep.subr.mxu0 0.0
      %930 = vmatpush1.xpose.msra.mxu0 0.0
      %931 = vmatprep.subr.mxu0 0.0
      %932 = vmatpush1.xpose.msra.mxu0 0.0
      %933 = vmatprep.subr.mxu0 0.0
      %934 = vmatpush1.xpose.msra.mxu0 0.0
      %935 = vmatprep.subr.mxu0 0.0
      %936 = vmatpush1.xpose.msra.mxu0 0.0
      %937 = vmatprep.subr.mxu0 0.0
      %938 = vmatpush1.xpose.msra.mxu0 0.0
      %939 = vmatprep.subr.mxu0 0.0
      %940 = vmatpush1.xpose.msra.mxu0 0.0
      %941 = vmatprep.subr.mxu0 0.0
      %942 = vmatpush1.xpose.msra.mxu0 0.0
      %943 = vmatprep.subr.mxu0 0.0
      %944 = vmatpush1.xpose.msra.mxu0 0.0
      %945 = vmatprep.subr.mxu0 0.0
      %946 = vmatpush1.xpose.msra.mxu0 0.0
      %947 = vmatprep.subr.mxu0 0.0
      %948 = vmatpush1.xpose.msra.mxu0 0.0
      %949 = vmatprep.subr.mxu0 0.0
      %950 = vmatpush1.xpose.msra.mxu0 0.0
      %951 = vmatprep.subr.mxu0 0.0
      %952 = vmatpush1.xpose.msra.mxu0 0.0
      %953 = vmatprep.subr.mxu0 0.0
      %954 = vmatpush1.xpose.msra.mxu0 0.0
      %955 = vmatprep.subr.mxu0 0.0
      %956 = vmatpush1.xpose.msra.mxu0 0.0
      %957 = vmatprep.subr.mxu0 0.0
      %958 = vmatpush1.xpose.msra.mxu0 %v850
      %959 = vmatprep.subr.mxu0 0.0
      %960 = vmatpush2.xpose.msra.mxu0 0.0
      %961 = vmatprep.subr.mxu0 0.0
      %962 = vmatpush2.xpose.msra.mxu0 0.0
      %963 = vmatprep.subr.mxu0 0.0
      %964 = vmatpush2.xpose.msra.mxu0 0.0
      %965 = vmatprep.subr.mxu0 0.0
      %966 = vmatpush2.xpose.msra.mxu0 0.0
      %967 = vmatprep.subr.mxu0 0.0
      %968 = vmatpush2.xpose.msra.mxu0 0.0
      %969 = vmatprep.subr.mxu0 0.0
      %970 = vmatpush2.xpose.msra.mxu0 0.0
      %971 = vmatprep.subr.mxu0 0.0
      %972 = vmatpush2.xpose.msra.mxu0 0.0
      %973 = vmatprep.subr.mxu0 0.0
      %974 = vmatpush2.xpose.msra.mxu0 0.0
      %975 = vmatprep.subr.mxu0 0.0
      %976 = vmatpush2.xpose.msra.mxu0 0.0
      %977 = vmatprep.subr.mxu0 0.0
      %978 = vmatpush2.xpose.msra.mxu0 0.0
      %979 = vmatprep.subr.mxu0 0.0
      %980 = vmatpush2.xpose.msra.mxu0 0.0
      %981 = vmatprep.subr.mxu0 0.0
      %982 = vmatpush2.xpose.msra.mxu0 0.0
      %983 = vmatprep.subr.mxu0 0.0
      %984 = vmatpush2.xpose.msra.mxu0 0.0
      %985 = vmatprep.subr.mxu0 0.0
      %986 = vmatpush2.xpose.msra.mxu0 0.0
      %987 = vmatprep.subr.mxu0 0.0
      %988 = vmatpush2.xpose.msra.mxu0 0.0
      %989 = vmatprep.subr.mxu0 0.0
      %990 = vmatpush2.xpose.msra.mxu0 0.0
      %991 = vmatprep.mubr.f32.mxu0 0.0
      %992 = vmatmul.mubr.f32.gmra.mxu0 %v829
      %v993 = vpop.f32.mrf.mxu0
      %v994 = vadd.f32 0.0, %v993
      %v995 = vpop.f32.mrf.mxu0
      %996 = vdwg.mxu0
      %997 = vmatprep.subr.mxu0 0.0
      %998 = vmatpush1.xpose.msra.mxu0 0.0
      %999 = vmatprep.subr.mxu0 0.0
      %1000 = vmatpush1.xpose.msra.mxu0 0.0
      %1001 = vmatprep.subr.mxu0 0.0
      %1002 = vmatpush1.xpose.msra.mxu0 0.0
      %1003 = vmatprep.subr.mxu0 0.0
      %1004 = vmatpush1.xpose.msra.mxu0 0.0
      %1005 = vmatprep.subr.mxu0 0.0
      %1006 = vmatpush1.xpose.msra.mxu0 0.0
      %1007 = vmatprep.subr.mxu0 0.0
      %1008 = vmatpush1.xpose.msra.mxu0 0.0
      %1009 = vmatprep.subr.mxu0 0.0
      %1010 = vmatpush1.xpose.msra.mxu0 0.0
      %1011 = vmatprep.subr.mxu0 0.0
      %1012 = vmatpush1.xpose.msra.mxu0 0.0
      %1013 = vmatprep.subr.mxu0 0.0
      %1014 = vmatpush1.xpose.msra.mxu0 0.0
      %1015 = vmatprep.subr.mxu0 0.0
      %1016 = vmatpush1.xpose.msra.mxu0 0.0
      %1017 = vmatprep.subr.mxu0 0.0
      %1018 = vmatpush1.xpose.msra.mxu0 0.0
      %1019 = vmatprep.subr.mxu0 0.0
      %1020 = vmatpush1.xpose.msra.mxu0 0.0
      %1021 = vmatprep.subr.mxu0 0.0
      %1022 = vmatpush1.xpose.msra.mxu0 0.0
      %1023 = vmatprep.subr.mxu0 0.0
      %1024 = vmatpush1.xpose.msra.mxu0 0.0
      %1025 = vmatprep.subr.mxu0 0.0
      %1026 = vmatpush1.xpose.msra.mxu0 0.0
      %1027 = vmatprep.subr.mxu0 0.0
      %1028 = vmatpush1.xpose.msra.mxu0 %v851
      %1029 = vmatprep.subr.mxu0 0.0
      %1030 = vmatpush2.xpose.msra.mxu0 0.0
      %1031 = vmatprep.subr.mxu0 0.0
      %1032 = vmatpush2.xpose.msra.mxu0 0.0
      %1033 = vmatprep.subr.mxu0 0.0
      %1034 = vmatpush2.xpose.msra.mxu0 0.0
      %1035 = vmatprep.subr.mxu0 0.0
      %1036 = vmatpush2.xpose.msra.mxu0 0.0
      %1037 = vmatprep.subr.mxu0 0.0
      %1038 = vmatpush2.xpose.msra.mxu0 0.0
      %1039 = vmatprep.subr.mxu0 0.0
      %1040 = vmatpush2.xpose.msra.mxu0 0.0
      %1041 = vmatprep.subr.mxu0 0.0
      %1042 = vmatpush2.xpose.msra.mxu0 0.0
      %1043 = vmatprep.subr.mxu0 0.0
      %1044 = vmatpush2.xpose.msra.mxu0 0.0
      %1045 = vmatprep.subr.mxu0 0.0
      %1046 = vmatpush2.xpose.msra.mxu0 0.0
      %1047 = vmatprep.subr.mxu0 0.0
      %1048 = vmatpush2.xpose.msra.mxu0 0.0
      %1049 = vmatprep.subr.mxu0 0.0
      %1050 = vmatpush2.xpose.msra.mxu0 0.0
      %1051 = vmatprep.subr.mxu0 0.0
      %1052 = vmatpush2.xpose.msra.mxu0 0.0
      %1053 = vmatprep.subr.mxu0 0.0
      %1054 = vmatpush2.xpose.msra.mxu0 0.0
      %1055 = vmatprep.subr.mxu0 0.0
      %1056 = vmatpush2.xpose.msra.mxu0 0.0
      %1057 = vmatprep.subr.mxu0 0.0
      %1058 = vmatpush2.xpose.msra.mxu0 0.0
      %1059 = vmatprep.subr.mxu0 0.0
      %1060 = vmatpush2.xpose.msra.mxu0 0.0
      %1061 = vmatprep.mubr.f32.mxu0 0.0
      %1062 = vmatmul.mubr.f32.gmra.mxu0 %v837
      %v1063 = vpop.f32.mrf.mxu0
      %v1064 = vadd.f32 0.0, %v1063
      %v1065 = vpop.f32.mrf.mxu0
      %1066 = vdwg.mxu0
      %1067 = vmatprep.subr.mxu0 0.0
      %1068 = vmatpush1.xpose.msra.mxu0 0.0
      %1069 = vmatprep.subr.mxu0 0.0
      %1070 = vmatpush1.xpose.msra.mxu0 0.0
      %1071 = vmatprep.subr.mxu0 0.0
      %1072 = vmatpush1.xpose.msra.mxu0 0.0
      %1073 = vmatprep.subr.mxu0 0.0
      %1074 = vmatpush1.xpose.msra.mxu0 0.0
      %1075 = vmatprep.subr.mxu0 0.0
      %1076 = vmatpush1.xpose.msra.mxu0 0.0
      %1077 = vmatprep.subr.mxu0 0.0
      %1078 = vmatpush1.xpose.msra.mxu0 0.0
      %1079 = vmatprep.subr.mxu0 0.0
      %1080 = vmatpush1.xpose.msra.mxu0 0.0
      %1081 = vmatprep.subr.mxu0 0.0
      %1082 = vmatpush1.xpose.msra.mxu0 0.0
      %1083 = vmatprep.subr.mxu0 0.0
      %1084 = vmatpush1.xpose.msra.mxu0 0.0
      %1085 = vmatprep.subr.mxu0 0.0
      %1086 = vmatpush1.xpose.msra.mxu0 0.0
      %1087 = vmatprep.subr.mxu0 0.0
      %1088 = vmatpush1.xpose.msra.mxu0 0.0
      %1089 = vmatprep.subr.mxu0 0.0
      %1090 = vmatpush1.xpose.msra.mxu0 0.0
      %1091 = vmatprep.subr.mxu0 0.0
      %1092 = vmatpush1.xpose.msra.mxu0 0.0
      %1093 = vmatprep.subr.mxu0 0.0
      %1094 = vmatpush1.xpose.msra.mxu0 0.0
      %1095 = vmatprep.subr.mxu0 0.0
      %1096 = vmatpush1.xpose.msra.mxu0 0.0
      %1097 = vmatprep.subr.mxu0 0.0
      %1098 = vmatpush1.xpose.msra.mxu0 %v852
      %1099 = vmatprep.subr.mxu0 0.0
      %1100 = vmatpush2.xpose.msra.mxu0 0.0
      %1101 = vmatprep.subr.mxu0 0.0
      %1102 = vmatpush2.xpose.msra.mxu0 0.0
      %1103 = vmatprep.subr.mxu0 0.0
      %1104 = vmatpush2.xpose.msra.mxu0 0.0
      %1105 = vmatprep.subr.mxu0 0.0
      %1106 = vmatpush2.xpose.msra.mxu0 0.0
      %1107 = vmatprep.subr.mxu0 0.0
      %1108 = vmatpush2.xpose.msra.mxu0 0.0
      %1109 = vmatprep.subr.mxu0 0.0
      %1110 = vmatpush2.xpose.msra.mxu0 0.0
      %1111 = vmatprep.subr.mxu0 0.0
      %1112 = vmatpush2.xpose.msra.mxu0 0.0
      %1113 = vmatprep.subr.mxu0 0.0
      %1114 = vmatpush2.xpose.msra.mxu0 0.0
      %1115 = vmatprep.subr.mxu0 0.0
      %1116 = vmatpush2.xpose.msra.mxu0 0.0
      %1117 = vmatprep.subr.mxu0 0.0
      %1118 = vmatpush2.xpose.msra.mxu0 0.0
      %1119 = vmatprep.subr.mxu0 0.0
      %1120 = vmatpush2.xpose.msra.mxu0 0.0
      %1121 = vmatprep.subr.mxu0 0.0
      %1122 = vmatpush2.xpose.msra.mxu0 0.0
      %1123 = vmatprep.subr.mxu0 0.0
      %1124 = vmatpush2.xpose.msra.mxu0 0.0
      %1125 = vmatprep.subr.mxu0 0.0
      %1126 = vmatpush2.xpose.msra.mxu0 0.0
      %1127 = vmatprep.subr.mxu0 0.0
      %1128 = vmatpush2.xpose.msra.mxu0 0.0
      %1129 = vmatprep.subr.mxu0 0.0
      %1130 = vmatpush2.xpose.msra.mxu0 0.0
      %1131 = vmatprep.mubr.f32.mxu0 0.0
      %1132 = vmatmul.mubr.f32.gmra.mxu0 %v839
      %v1133 = vpop.f32.mrf.mxu0
      %v1134 = vadd.f32 0.0, %v1133
      %v1135 = vpop.f32.mrf.mxu0
      %1136 = vdwg.mxu0
      %1137 = vmatprep.subr.mxu0 0.0
      %1138 = vmatpush1.xpose.msra.mxu0 0.0
      %1139 = vmatprep.subr.mxu0 0.0
      %1140 = vmatpush1.xpose.msra.mxu0 0.0
      %1141 = vmatprep.subr.mxu0 0.0
      %1142 = vmatpush1.xpose.msra.mxu0 0.0
      %1143 = vmatprep.subr.mxu0 0.0
      %1144 = vmatpush1.xpose.msra.mxu0 0.0
      %1145 = vmatprep.subr.mxu0 0.0
      %1146 = vmatpush1.xpose.msra.mxu0 0.0
      %1147 = vmatprep.subr.mxu0 0.0
      %1148 = vmatpush1.xpose.msra.mxu0 0.0
      %1149 = vmatprep.subr.mxu0 0.0
      %1150 = vmatpush1.xpose.msra.mxu0 0.0
      %1151 = vmatprep.subr.mxu0 0.0
      %1152 = vmatpush1.xpose.msra.mxu0 0.0
      %1153 = vmatprep.subr.mxu0 0.0
      %1154 = vmatpush1.xpose.msra.mxu0 0.0
      %1155 = vmatprep.subr.mxu0 0.0
      %1156 = vmatpush1.xpose.msra.mxu0 0.0
      %1157 = vmatprep.subr.mxu0 0.0
      %1158 = vmatpush1.xpose.msra.mxu0 0.0
      %1159 = vmatprep.subr.mxu0 0.0
      %1160 = vmatpush1.xpose.msra.mxu0 0.0
      %1161 = vmatprep.subr.mxu0 0.0
      %1162 = vmatpush1.xpose.msra.mxu0 0.0
      %1163 = vmatprep.subr.mxu0 0.0
      %1164 = vmatpush1.xpose.msra.mxu0 0.0
      %1165 = vmatprep.subr.mxu0 0.0
      %1166 = vmatpush1.xpose.msra.mxu0 0.0
      %1167 = vmatprep.subr.mxu0 0.0
      %1168 = vmatpush1.xpose.msra.mxu0 %v853
      %1169 = vmatprep.subr.mxu0 0.0
      %1170 = vmatpush2.xpose.msra.mxu0 0.0
      %1171 = vmatprep.subr.mxu0 0.0
      %1172 = vmatpush2.xpose.msra.mxu0 0.0
      %1173 = vmatprep.subr.mxu0 0.0
      %1174 = vmatpush2.xpose.msra.mxu0 0.0
      %1175 = vmatprep.subr.mxu0 0.0
      %1176 = vmatpush2.xpose.msra.mxu0 0.0
      %1177 = vmatprep.subr.mxu0 0.0
      %1178 = vmatpush2.xpose.msra.mxu0 0.0
      %1179 = vmatprep.subr.mxu0 0.0
      %1180 = vmatpush2.xpose.msra.mxu0 0.0
      %1181 = vmatprep.subr.mxu0 0.0
      %1182 = vmatpush2.xpose.msra.mxu0 0.0
      %1183 = vmatprep.subr.mxu0 0.0
      %1184 = vmatpush2.xpose.msra.mxu0 0.0
      %1185 = vmatprep.subr.mxu0 0.0
      %1186 = vmatpush2.xpose.msra.mxu0 0.0
      %1187 = vmatprep.subr.mxu0 0.0
      %1188 = vmatpush2.xpose.msra.mxu0 0.0
      %1189 = vmatprep.subr.mxu0 0.0
      %1190 = vmatpush2.xpose.msra.mxu0 0.0
      %1191 = vmatprep.subr.mxu0 0.0
      %1192 = vmatpush2.xpose.msra.mxu0 0.0
      %1193 = vmatprep.subr.mxu0 0.0
      %1194 = vmatpush2.xpose.msra.mxu0 0.0
      %1195 = vmatprep.subr.mxu0 0.0
      %1196 = vmatpush2.xpose.msra.mxu0 0.0
      %1197 = vmatprep.subr.mxu0 0.0
      %1198 = vmatpush2.xpose.msra.mxu0 0.0
      %1199 = vmatprep.subr.mxu0 0.0
      %1200 = vmatpush2.xpose.msra.mxu0 0.0
      %1201 = vmatprep.mubr.f32.mxu0 0.0
      %1202 = vmatmul.mubr.f32.gmra.mxu0 %v822
      %v1203 = vpop.f32.mrf.mxu0
      %v1204 = vadd.f32 0.0, %v1203
      %v1205 = vpop.f32.mrf.mxu0
      %1206 = vdwg.mxu0
      %1207 = vmatprep.subr.mxu0 0.0
      %1208 = vmatpush1.xpose.msra.mxu0 0.0
      %1209 = vmatprep.subr.mxu0 0.0
      %1210 = vmatpush1.xpose.msra.mxu0 0.0
      %1211 = vmatprep.subr.mxu0 0.0
      %1212 = vmatpush1.xpose.msra.mxu0 0.0
      %1213 = vmatprep.subr.mxu0 0.0
      %1214 = vmatpush1.xpose.msra.mxu0 0.0
      %1215 = vmatprep.subr.mxu0 0.0
      %1216 = vmatpush1.xpose.msra.mxu0 0.0
      %1217 = vmatprep.subr.mxu0 0.0
      %1218 = vmatpush1.xpose.msra.mxu0 0.0
      %1219 = vmatprep.subr.mxu0 0.0
      %1220 = vmatpush1.xpose.msra.mxu0 0.0
      %1221 = vmatprep.subr.mxu0 0.0
      %1222 = vmatpush1.xpose.msra.mxu0 0.0
      %1223 = vmatprep.subr.mxu0 0.0
      %1224 = vmatpush1.xpose.msra.mxu0 0.0
      %1225 = vmatprep.subr.mxu0 0.0
      %1226 = vmatpush1.xpose.msra.mxu0 0.0
      %1227 = vmatprep.subr.mxu0 0.0
      %1228 = vmatpush1.xpose.msra.mxu0 0.0
      %1229 = vmatprep.subr.mxu0 0.0
      %1230 = vmatpush1.xpose.msra.mxu0 0.0
      %1231 = vmatprep.subr.mxu0 0.0
      %1232 = vmatpush1.xpose.msra.mxu0 0.0
      %1233 = vmatprep.subr.mxu0 0.0
      %1234 = vmatpush1.xpose.msra.mxu0 0.0
      %1235 = vmatprep.subr.mxu0 0.0
      %1236 = vmatpush1.xpose.msra.mxu0 0.0
      %1237 = vmatprep.subr.mxu0 0.0
      %1238 = vmatpush1.xpose.msra.mxu0 %v854
      %1239 = vmatprep.subr.mxu0 0.0
      %1240 = vmatpush2.xpose.msra.mxu0 0.0
      %1241 = vmatprep.subr.mxu0 0.0
      %1242 = vmatpush2.xpose.msra.mxu0 0.0
      %1243 = vmatprep.subr.mxu0 0.0
      %1244 = vmatpush2.xpose.msra.mxu0 0.0
      %1245 = vmatprep.subr.mxu0 0.0
      %1246 = vmatpush2.xpose.msra.mxu0 0.0
      %1247 = vmatprep.subr.mxu0 0.0
      %1248 = vmatpush2.xpose.msra.mxu0 0.0
      %1249 = vmatprep.subr.mxu0 0.0
      %1250 = vmatpush2.xpose.msra.mxu0 0.0
      %1251 = vmatprep.subr.mxu0 0.0
      %1252 = vmatpush2.xpose.msra.mxu0 0.0
      %1253 = vmatprep.subr.mxu0 0.0
      %1254 = vmatpush2.xpose.msra.mxu0 0.0
      %1255 = vmatprep.subr.mxu0 0.0
      %1256 = vmatpush2.xpose.msra.mxu0 0.0
      %1257 = vmatprep.subr.mxu0 0.0
      %1258 = vmatpush2.xpose.msra.mxu0 0.0
      %1259 = vmatprep.subr.mxu0 0.0
      %1260 = vmatpush2.xpose.msra.mxu0 0.0
      %1261 = vmatprep.subr.mxu0 0.0
      %1262 = vmatpush2.xpose.msra.mxu0 0.0
      %1263 = vmatprep.subr.mxu0 0.0
      %1264 = vmatpush2.xpose.msra.mxu0 0.0
      %1265 = vmatprep.subr.mxu0 0.0
      %1266 = vmatpush2.xpose.msra.mxu0 0.0
      %1267 = vmatprep.subr.mxu0 0.0
      %1268 = vmatpush2.xpose.msra.mxu0 0.0
      %1269 = vmatprep.subr.mxu0 0.0
      %1270 = vmatpush2.xpose.msra.mxu0 0.0
      %1271 = vmatprep.mubr.f32.mxu0 0.0
      %1272 = vmatmul.mubr.f32.gmra.mxu0 %v836
      %v1273 = vpop.f32.mrf.mxu0
      %v1274 = vadd.f32 0.0, %v1273
      %v1275 = vpop.f32.mrf.mxu0
      %1276 = vdwg.mxu0
      %1277 = vmatprep.subr.mxu0 0.0
      %1278 = vmatpush1.xpose.msra.mxu0 0.0
      %1279 = vmatprep.subr.mxu0 0.0
      %1280 = vmatpush1.xpose.msra.mxu0 0.0
      %1281 = vmatprep.subr.mxu0 0.0
      %1282 = vmatpush1.xpose.msra.mxu0 0.0
      %1283 = vmatprep.subr.mxu0 0.0
      %1284 = vmatpush1.xpose.msra.mxu0 0.0
      %1285 = vmatprep.subr.mxu0 0.0
      %1286 = vmatpush1.xpose.msra.mxu0 0.0
      %1287 = vmatprep.subr.mxu0 0.0
      %1288 = vmatpush1.xpose.msra.mxu0 0.0
      %1289 = vmatprep.subr.mxu0 0.0
      %1290 = vmatpush1.xpose.msra.mxu0 0.0
      %1291 = vmatprep.subr.mxu0 0.0
      %1292 = vmatpush1.xpose.msra.mxu0 0.0
      %1293 = vmatprep.subr.mxu0 0.0
      %1294 = vmatpush1.xpose.msra.mxu0 0.0
      %1295 = vmatprep.subr.mxu0 0.0
      %1296 = vmatpush1.xpose.msra.mxu0 0.0
      %1297 = vmatprep.subr.mxu0 0.0
      %1298 = vmatpush1.xpose.msra.mxu0 0.0
      %1299 = vmatprep.subr.mxu0 0.0
      %1300 = vmatpush1.xpose.msra.mxu0 0.0
      %1301 = vmatprep.subr.mxu0 0.0
      %1302 = vmatpush1.xpose.msra.mxu0 0.0
      %1303 = vmatprep.subr.mxu0 0.0
      %1304 = vmatpush1.xpose.msra.mxu0 0.0
      %1305 = vmatprep.subr.mxu0 0.0
      %1306 = vmatpush1.xpose.msra.mxu0 0.0
      %1307 = vmatprep.subr.mxu0 0.0
      %1308 = vmatpush1.xpose.msra.mxu0 %v855
      %1309 = vmatprep.subr.mxu0 0.0
      %1310 = vmatpush2.xpose.msra.mxu0 0.0
      %1311 = vmatprep.subr.mxu0 0.0
      %1312 = vmatpush2.xpose.msra.mxu0 0.0
      %1313 = vmatprep.subr.mxu0 0.0
      %1314 = vmatpush2.xpose.msra.mxu0 0.0
      %1315 = vmatprep.subr.mxu0 0.0
      %1316 = vmatpush2.xpose.msra.mxu0 0.0
      %1317 = vmatprep.subr.mxu0 0.0
      %1318 = vmatpush2.xpose.msra.mxu0 0.0
      %1319 = vmatprep.subr.mxu0 0.0
      %1320 = vmatpush2.xpose.msra.mxu0 0.0
      %1321 = vmatprep.subr.mxu0 0.0
      %1322 = vmatpush2.xpose.msra.mxu0 0.0
      %1323 = vmatprep.subr.mxu0 0.0
      %1324 = vmatpush2.xpose.msra.mxu0 0.0
      %1325 = vmatprep.subr.mxu0 0.0
      %1326 = vmatpush2.xpose.msra.mxu0 0.0
      %1327 = vmatprep.subr.mxu0 0.0
      %1328 = vmatpush2.xpose.msra.mxu0 0.0
      %1329 = vmatprep.subr.mxu0 0.0
      %1330 = vmatpush2.xpose.msra.mxu0 0.0
      %1331 = vmatprep.subr.mxu0 0.0
      %1332 = vmatpush2.xpose.msra.mxu0 0.0
      %1333 = vmatprep.subr.mxu0 0.0
      %1334 = vmatpush2.xpose.msra.mxu0 0.0
      %1335 = vmatprep.subr.mxu0 0.0
      %1336 = vmatpush2.xpose.msra.mxu0 0.0
      %1337 = vmatprep.subr.mxu0 0.0
      %1338 = vmatpush2.xpose.msra.mxu0 0.0
      %1339 = vmatprep.subr.mxu0 0.0
      %1340 = vmatpush2.xpose.msra.mxu0 0.0
      %1341 = vmatprep.mubr.f32.mxu0 0.0
      %1342 = vmatmul.mubr.f32.gmra.mxu0 %v838
      %v1343 = vpop.f32.mrf.mxu0
      %v1344 = vadd.f32 0.0, %v1343
      %v1345 = vpop.f32.mrf.mxu0
      %1346 = vdwg.mxu0
      %1347 = vmatprep.subr.mxu0 0.0
      %1348 = vmatpush1.xpose.msra.mxu0 0.0
      %1349 = vmatprep.subr.mxu0 0.0
      %1350 = vmatpush1.xpose.msra.mxu0 0.0
      %1351 = vmatprep.subr.mxu0 0.0
      %1352 = vmatpush1.xpose.msra.mxu0 0.0
      %1353 = vmatprep.subr.mxu0 0.0
      %1354 = vmatpush1.xpose.msra.mxu0 0.0
      %1355 = vmatprep.subr.mxu0 0.0
      %1356 = vmatpush1.xpose.msra.mxu0 0.0
      %1357 = vmatprep.subr.mxu0 0.0
      %1358 = vmatpush1.xpose.msra.mxu0 0.0
      %1359 = vmatprep.subr.mxu0 0.0
      %1360 = vmatpush1.xpose.msra.mxu0 0.0
      %1361 = vmatprep.subr.mxu0 0.0
      %1362 = vmatpush1.xpose.msra.mxu0 0.0
      %1363 = vmatprep.subr.mxu0 0.0
      %1364 = vmatpush1.xpose.msra.mxu0 0.0
      %1365 = vmatprep.subr.mxu0 0.0
      %1366 = vmatpush1.xpose.msra.mxu0 0.0
      %1367 = vmatprep.subr.mxu0 0.0
      %1368 = vmatpush1.xpose.msra.mxu0 0.0
      %1369 = vmatprep.subr.mxu0 0.0
      %1370 = vmatpush1.xpose.msra.mxu0 0.0
      %1371 = vmatprep.subr.mxu0 0.0
      %1372 = vmatpush1.xpose.msra.mxu0 0.0
      %1373 = vmatprep.subr.mxu0 0.0
      %1374 = vmatpush1.xpose.msra.mxu0 0.0
      %1375 = vmatprep.subr.mxu0 0.0
      %1376 = vmatpush1.xpose.msra.mxu0 0.0
      %1377 = vmatprep.subr.mxu0 0.0
      %1378 = vmatpush1.xpose.msra.mxu0 %v856
      %1379 = vmatprep.subr.mxu0 0.0
      %1380 = vmatpush2.xpose.msra.mxu0 0.0
      %1381 = vmatprep.subr.mxu0 0.0
      %1382 = vmatpush2.xpose.msra.mxu0 0.0
      %1383 = vmatprep.subr.mxu0 0.0
      %1384 = vmatpush2.xpose.msra.mxu0 0.0
      %1385 = vmatprep.subr.mxu0 0.0
      %1386 = vmatpush2.xpose.msra.mxu0 0.0
      %1387 = vmatprep.subr.mxu0 0.0
      %1388 = vmatpush2.xpose.msra.mxu0 0.0
      %1389 = vmatprep.subr.mxu0 0.0
      %1390 = vmatpush2.xpose.msra.mxu0 0.0
      %1391 = vmatprep.subr.mxu0 0.0
      %1392 = vmatpush2.xpose.msra.mxu0 0.0
      %1393 = vmatprep.subr.mxu0 0.0
      %1394 = vmatpush2.xpose.msra.mxu0 0.0
      %1395 = vmatprep.subr.mxu0 0.0
      %1396 = vmatpush2.xpose.msra.mxu0 0.0
      %1397 = vmatprep.subr.mxu0 0.0
      %1398 = vmatpush2.xpose.msra.mxu0 0.0
      %1399 = vmatprep.subr.mxu0 0.0
      %1400 = vmatpush2.xpose.msra.mxu0 0.0
      %1401 = vmatprep.subr.mxu0 0.0
      %1402 = vmatpush2.xpose.msra.mxu0 0.0
      %1403 = vmatprep.subr.mxu0 0.0
      %1404 = vmatpush2.xpose.msra.mxu0 0.0
      %1405 = vmatprep.subr.mxu0 0.0
      %1406 = vmatpush2.xpose.msra.mxu0 0.0
      %1407 = vmatprep.subr.mxu0 0.0
      %1408 = vmatpush2.xpose.msra.mxu0 0.0
      %1409 = vmatprep.subr.mxu0 0.0
      %1410 = vmatpush2.xpose.msra.mxu0 0.0
      %1411 = vmatprep.mubr.f32.mxu0 0.0
      %1412 = vmatmul.mubr.f32.gmra.mxu0 %v840
      %v1413 = vpop.f32.mrf.mxu0
      %v1414 = vadd.f32 0.0, %v1413
      %v1415 = vpop.f32.mrf.mxu0
      %1416 = vdwg.mxu0
      %vm1417 = vcmask 57344
      %v1418 = vsel %vm1417, %v924, -inf
      %1419 = vmax.xlane.f32.xlu0 %v1418
      %v1420 = vpop.xlane.xlu0 %1419
      %v1421 = vsel %vm1417, %v994, -inf
      %1422 = vmax.xlane.f32.xlu0 %v1421
      %v1423 = vpop.xlane.xlu0 %1422
      %v1424 = vsel %vm1417, %v1064, -inf
      %1425 = vmax.xlane.f32.xlu0 %v1424
      %v1426 = vpop.xlane.xlu0 %1425
      %v1427 = vsel %vm1417, %v1134, -inf
      %1428 = vmax.xlane.f32.xlu0 %v1427
      %v1429 = vpop.xlane.xlu0 %1428
      %v1430 = vsel %vm1417, %v1204, -inf
      %1431 = vmax.xlane.f32.xlu0 %v1430
      %v1432 = vpop.xlane.xlu0 %1431
      %v1433 = vsel %vm1417, %v1274, -inf
      %1434 = vmax.xlane.f32.xlu0 %v1433
      %v1435 = vpop.xlane.xlu0 %1434
      %v1436 = vsel %vm1417, %v1344, -inf
      %1437 = vmax.xlane.f32.xlu0 %v1436
      %v1438 = vpop.xlane.xlu0 %1437
      %v1439 = vsel %vm1417, %v1414, -inf
      %1440 = vmax.xlane.f32.xlu0 %v1439
      %v1441 = vpop.xlane.xlu0 %1440
      %v1442 = vsub.f32 %v924, %v1420
      %v1443 = vsub.f32 %v994, %v1423
      %v1444 = vsub.f32 %v1064, %v1426
      %v1445 = vsub.f32 %v1134, %v1429
      %v1446 = vsub.f32 %v1204, %v1432
      %v1447 = vsub.f32 %v1274, %v1435
      %v1448 = vsub.f32 %v1344, %v1438
      %v1449 = vsub.f32 %v1414, %v1441
      %v1450 = vmul.f32 %v1442, 1.442695
      %v1451 = vpow.pop %v1450
      %v1452 = vmul.f32 %v1443, 1.442695
      %v1453 = vpow.pop %v1452
      %v1454 = vmul.f32 %v1444, 1.442695
      %v1455 = vpow.pop %v1454
      %v1456 = vmul.f32 %v1445, 1.442695
      %v1457 = vpow.pop %v1456
      %v1458 = vmul.f32 %v1446, 1.442695
      %v1459 = vpow.pop %v1458
      %v1460 = vmul.f32 %v1447, 1.442695
      %v1461 = vpow.pop %v1460
      %v1462 = vmul.f32 %v1448, 1.442695
      %v1463 = vpow.pop %v1462
      %v1464 = vmul.f32 %v1449, 1.442695
      %v1465 = vpow.pop %v1464
      %v1466 = vsel %vm1417, %v1451, 0.0
      %1467 = vadd.xlane.f32.xlu0 %v1466
      %v1468 = vpop.xlane.xlu0 %1467
      %v1469 = vsel %vm1417, %v1453, 0.0
      %1470 = vadd.xlane.f32.xlu0 %v1469
      %v1471 = vpop.xlane.xlu0 %1470
      %v1472 = vsel %vm1417, %v1455, 0.0
      %1473 = vadd.xlane.f32.xlu0 %v1472
      %v1474 = vpop.xlane.xlu0 %1473
      %v1475 = vsel %vm1417, %v1457, 0.0
      %1476 = vadd.xlane.f32.xlu0 %v1475
      %v1477 = vpop.xlane.xlu0 %1476
      %v1478 = vsel %vm1417, %v1459, 0.0
      %1479 = vadd.xlane.f32.xlu0 %v1478
      %v1480 = vpop.xlane.xlu0 %1479
      %v1481 = vsel %vm1417, %v1461, 0.0
      %1482 = vadd.xlane.f32.xlu0 %v1481
      %v1483 = vpop.xlane.xlu0 %1482
      %v1484 = vsel %vm1417, %v1463, 0.0
      %1485 = vadd.xlane.f32.xlu0 %v1484
      %v1486 = vpop.xlane.xlu0 %1485
      %v1487 = vsel %vm1417, %v1465, 0.0
      %1488 = vadd.xlane.f32.xlu0 %v1487
      %v1489 = vpop.xlane.xlu0 %1488
      %v1490 = vrcp.pop %v1468
      %v1491 = vrcp.pop %v1471
      %v1492 = vrcp.pop %v1474
      %v1493 = vrcp.pop %v1477
      %v1494 = vrcp.pop %v1480
      %v1495 = vrcp.pop %v1483
      %v1496 = vrcp.pop %v1486
      %v1497 = vrcp.pop %v1489
      %v1498 = vmul.f32 %v1451, %v1490
      %v1499 = vmul.f32 %v1453, %v1491
      %v1500 = vmul.f32 %v1455, %v1492
      %v1501 = vmul.f32 %v1457, %v1493
      %v1502 = vmul.f32 %v1459, %v1494
      %v1503 = vmul.f32 %v1461, %v1495
      %v1504 = vmul.f32 %v1463, %v1496
      %v1505 = vmul.f32 %v1465, %v1497
      %v1506 = vld [vmem:[%s3] sm:$0xff]
      %v1507 = vld [vmem:[%s3 + $0x8] sm:$0xff]
      %v1508 = vld [vmem:[%s3 + $0x10] sm:$0xff]
      %v1509 = vld [vmem:[%s3 + $0x18] sm:$0xff]
      %v1510 = vld [vmem:[%s3 + $0x20] sm:$0xff]
      %v1511 = vld [vmem:[%s3 + $0x28] sm:$0xff]
      %v1512 = vld [vmem:[%s3 + $0x30] sm:$0xff]
      %v1513 = vld [vmem:[%s3 + $0x38] sm:$0xff]
      %v1514 = vld [vmem:[%s3 + $0x40] sm:$0xff]
      %v1515 = vld [vmem:[%s3 + $0x48] sm:$0xff]
      %v1516 = vld [vmem:[%s3 + $0x50] sm:$0xff]
      %v1517 = vld [vmem:[%s3 + $0x58] sm:$0xff]
      %v1518 = vld [vmem:[%s3 + $0x60] sm:$0xff]
      %v1519 = vld [vmem:[%s3 + $0x68] sm:$0xff]
      %v1520 = vld [vmem:[%s3 + $0x70] sm:$0xff]
      %v1521 = vld [vmem:[%s3 + $0x78] sm:$0xff]
      %vm1522 = vcmask 64512
      %v1524 = vsel %vm1522, %v1498, 0
      %1526 = vmatprep.subr.mxu0 0.0
      %1527 = vmatpush1.msra.mxu0 0.0
      %1528 = vmatprep.subr.mxu0 0.0
      %1529 = vmatpush1.msra.mxu0 0.0
      %1530 = vmatprep.subr.mxu0 0.0
      %1531 = vmatpush1.msra.mxu0 0.0
      %1532 = vmatprep.subr.mxu0 0.0
      %1533 = vmatpush1.msra.mxu0 0.0
      %1534 = vmatprep.subr.mxu0 0.0
      %1535 = vmatpush1.msra.mxu0 0.0
      %1536 = vmatprep.subr.mxu0 0.0
      %1537 = vmatpush1.msra.mxu0 0.0
      %1538 = vmatprep.subr.mxu0 0.0
      %1539 = vmatpush1.msra.mxu0 0.0
      %1540 = vmatprep.subr.mxu0 0.0
      %1541 = vmatpush1.msra.mxu0 0.0
      %1542 = vmatprep.subr.mxu0 0.0
      %1543 = vmatpush1.msra.mxu0 0.0
      %1544 = vmatprep.subr.mxu0 0.0
      %1545 = vmatpush1.msra.mxu0 0.0
      %1546 = vmatprep.subr.mxu0 0.0
      %1547 = vmatpush1.msra.mxu0 0.0
      %1548 = vmatprep.subr.mxu0 0.0
      %1549 = vmatpush1.msra.mxu0 0.0
      %1550 = vmatprep.subr.mxu0 0.0
      %1551 = vmatpush1.msra.mxu0 0.0
      %1552 = vmatprep.subr.mxu0 0.0
      %1553 = vmatpush1.msra.mxu0 0.0
      %1554 = vmatprep.subr.mxu0 0.0
      %1555 = vmatpush1.msra.mxu0 0.0
      %1556 = vmatprep.subr.mxu0 %v1507
      %1557 = vmatpush1.msra.mxu0 %v1506
      %1558 = vmatprep.subr.mxu0 0.0
      %1559 = vmatpush2.msra.mxu0 0.0
      %1560 = vmatprep.subr.mxu0 0.0
      %1561 = vmatpush2.msra.mxu0 0.0
      %1562 = vmatprep.subr.mxu0 0.0
      %1563 = vmatpush2.msra.mxu0 0.0
      %1564 = vmatprep.subr.mxu0 0.0
      %1565 = vmatpush2.msra.mxu0 0.0
      %1566 = vmatprep.subr.mxu0 0.0
      %1567 = vmatpush2.msra.mxu0 0.0
      %1568 = vmatprep.subr.mxu0 0.0
      %1569 = vmatpush2.msra.mxu0 0.0
      %1570 = vmatprep.subr.mxu0 0.0
      %1571 = vmatpush2.msra.mxu0 0.0
      %1572 = vmatprep.subr.mxu0 0.0
      %1573 = vmatpush2.msra.mxu0 0.0
      %1574 = vmatprep.subr.mxu0 0.0
      %1575 = vmatpush2.msra.mxu0 0.0
      %1576 = vmatprep.subr.mxu0 0.0
      %1577 = vmatpush2.msra.mxu0 0.0
      %1578 = vmatprep.subr.mxu0 0.0
      %1579 = vmatpush2.msra.mxu0 0.0
      %1580 = vmatprep.subr.mxu0 0.0
      %1581 = vmatpush2.msra.mxu0 0.0
      %1582 = vmatprep.subr.mxu0 0.0
      %1583 = vmatpush2.msra.mxu0 0.0
      %1584 = vmatprep.subr.mxu0 0.0
      %1585 = vmatpush2.msra.mxu0 0.0
      %1586 = vmatprep.subr.mxu0 0.0
      %1587 = vmatpush2.msra.mxu0 0.0
      %1588 = vmatprep.subr.mxu0 0.0
      %1589 = vmatpush2.msra.mxu0 0.0
      %1590 = vmatprep.mubr.f32.mxu0 0.0
      %1591 = vmatmul.mubr.f32.gmra.mxu0 %v1524
      %v1592 = vpop.f32.mrf.mxu0
      %v1593 = vadd.f32 0.0, %v1592
      %v1594 = vpop.f32.mrf.mxu0
      %v1595 = vadd.f32 0.0, %v1594
      %1596 = vdwg.mxu0
      %v1598 = vsel %vm1522, %v1499, 0
      %1600 = vmatprep.subr.mxu0 0.0
      %1601 = vmatpush1.msra.mxu0 0.0
      %1602 = vmatprep.subr.mxu0 0.0
      %1603 = vmatpush1.msra.mxu0 0.0
      %1604 = vmatprep.subr.mxu0 0.0
      %1605 = vmatpush1.msra.mxu0 0.0
      %1606 = vmatprep.subr.mxu0 0.0
      %1607 = vmatpush1.msra.mxu0 0.0
      %1608 = vmatprep.subr.mxu0 0.0
      %1609 = vmatpush1.msra.mxu0 0.0
      %1610 = vmatprep.subr.mxu0 0.0
      %1611 = vmatpush1.msra.mxu0 0.0
      %1612 = vmatprep.subr.mxu0 0.0
      %1613 = vmatpush1.msra.mxu0 0.0
      %1614 = vmatprep.subr.mxu0 0.0
      %1615 = vmatpush1.msra.mxu0 0.0
      %1616 = vmatprep.subr.mxu0 0.0
      %1617 = vmatpush1.msra.mxu0 0.0
      %1618 = vmatprep.subr.mxu0 0.0
      %1619 = vmatpush1.msra.mxu0 0.0
      %1620 = vmatprep.subr.mxu0 0.0
      %1621 = vmatpush1.msra.mxu0 0.0
      %1622 = vmatprep.subr.mxu0 0.0
      %1623 = vmatpush1.msra.mxu0 0.0
      %1624 = vmatprep.subr.mxu0 0.0
      %1625 = vmatpush1.msra.mxu0 0.0
      %1626 = vmatprep.subr.mxu0 0.0
      %1627 = vmatpush1.msra.mxu0 0.0
      %1628 = vmatprep.subr.mxu0 0.0
      %1629 = vmatpush1.msra.mxu0 0.0
      %1630 = vmatprep.subr.mxu0 %v1509
      %1631 = vmatpush1.msra.mxu0 %v1508
      %1632 = vmatprep.subr.mxu0 0.0
      %1633 = vmatpush2.msra.mxu0 0.0
      %1634 = vmatprep.subr.mxu0 0.0
      %1635 = vmatpush2.msra.mxu0 0.0
      %1636 = vmatprep.subr.mxu0 0.0
      %1637 = vmatpush2.msra.mxu0 0.0
      %1638 = vmatprep.subr.mxu0 0.0
      %1639 = vmatpush2.msra.mxu0 0.0
      %1640 = vmatprep.subr.mxu0 0.0
      %1641 = vmatpush2.msra.mxu0 0.0
      %1642 = vmatprep.subr.mxu0 0.0
      %1643 = vmatpush2.msra.mxu0 0.0
      %1644 = vmatprep.subr.mxu0 0.0
      %1645 = vmatpush2.msra.mxu0 0.0
      %1646 = vmatprep.subr.mxu0 0.0
      %1647 = vmatpush2.msra.mxu0 0.0
      %1648 = vmatprep.subr.mxu0 0.0
      %1649 = vmatpush2.msra.mxu0 0.0
      %1650 = vmatprep.subr.mxu0 0.0
      %1651 = vmatpush2.msra.mxu0 0.0
      %1652 = vmatprep.subr.mxu0 0.0
      %1653 = vmatpush2.msra.mxu0 0.0
      %1654 = vmatprep.subr.mxu0 0.0
      %1655 = vmatpush2.msra.mxu0 0.0
      %1656 = vmatprep.subr.mxu0 0.0
      %1657 = vmatpush2.msra.mxu0 0.0
      %1658 = vmatprep.subr.mxu0 0.0
      %1659 = vmatpush2.msra.mxu0 0.0
      %1660 = vmatprep.subr.mxu0 0.0
      %1661 = vmatpush2.msra.mxu0 0.0
      %1662 = vmatprep.subr.mxu0 0.0
      %1663 = vmatpush2.msra.mxu0 0.0
      %1664 = vmatprep.mubr.f32.mxu0 0.0
      %1665 = vmatmul.mubr.f32.gmra.mxu0 %v1598
      %v1666 = vpop.f32.mrf.mxu0
      %v1667 = vadd.f32 0.0, %v1666
      %v1668 = vpop.f32.mrf.mxu0
      %v1669 = vadd.f32 0.0, %v1668
      %1670 = vdwg.mxu0
      %v1672 = vsel %vm1522, %v1500, 0
      %1674 = vmatprep.subr.mxu0 0.0
      %1675 = vmatpush1.msra.mxu0 0.0
      %1676 = vmatprep.subr.mxu0 0.0
      %1677 = vmatpush1.msra.mxu0 0.0
      %1678 = vmatprep.subr.mxu0 0.0
      %1679 = vmatpush1.msra.mxu0 0.0
      %1680 = vmatprep.subr.mxu0 0.0
      %1681 = vmatpush1.msra.mxu0 0.0
      %1682 = vmatprep.subr.mxu0 0.0
      %1683 = vmatpush1.msra.mxu0 0.0
      %1684 = vmatprep.subr.mxu0 0.0
      %1685 = vmatpush1.msra.mxu0 0.0
      %1686 = vmatprep.subr.mxu0 0.0
      %1687 = vmatpush1.msra.mxu0 0.0
      %1688 = vmatprep.subr.mxu0 0.0
      %1689 = vmatpush1.msra.mxu0 0.0
      %1690 = vmatprep.subr.mxu0 0.0
      %1691 = vmatpush1.msra.mxu0 0.0
      %1692 = vmatprep.subr.mxu0 0.0
      %1693 = vmatpush1.msra.mxu0 0.0
      %1694 = vmatprep.subr.mxu0 0.0
      %1695 = vmatpush1.msra.mxu0 0.0
      %1696 = vmatprep.subr.mxu0 0.0
      %1697 = vmatpush1.msra.mxu0 0.0
      %1698 = vmatprep.subr.mxu0 0.0
      %1699 = vmatpush1.msra.mxu0 0.0
      %1700 = vmatprep.subr.mxu0 0.0
      %1701 = vmatpush1.msra.mxu0 0.0
      %1702 = vmatprep.subr.mxu0 0.0
      %1703 = vmatpush1.msra.mxu0 0.0
      %1704 = vmatprep.subr.mxu0 %v1511
      %1705 = vmatpush1.msra.mxu0 %v1510
      %1706 = vmatprep.subr.mxu0 0.0
      %1707 = vmatpush2.msra.mxu0 0.0
      %1708 = vmatprep.subr.mxu0 0.0
      %1709 = vmatpush2.msra.mxu0 0.0
      %1710 = vmatprep.subr.mxu0 0.0
      %1711 = vmatpush2.msra.mxu0 0.0
      %1712 = vmatprep.subr.mxu0 0.0
      %1713 = vmatpush2.msra.mxu0 0.0
      %1714 = vmatprep.subr.mxu0 0.0
      %1715 = vmatpush2.msra.mxu0 0.0
      %1716 = vmatprep.subr.mxu0 0.0
      %1717 = vmatpush2.msra.mxu0 0.0
      %1718 = vmatprep.subr.mxu0 0.0
      %1719 = vmatpush2.msra.mxu0 0.0
      %1720 = vmatprep.subr.mxu0 0.0
      %1721 = vmatpush2.msra.mxu0 0.0
      %1722 = vmatprep.subr.mxu0 0.0
      %1723 = vmatpush2.msra.mxu0 0.0
      %1724 = vmatprep.subr.mxu0 0.0
      %1725 = vmatpush2.msra.mxu0 0.0
      %1726 = vmatprep.subr.mxu0 0.0
      %1727 = vmatpush2.msra.mxu0 0.0
      %1728 = vmatprep.subr.mxu0 0.0
      %1729 = vmatpush2.msra.mxu0 0.0
      %1730 = vmatprep.subr.mxu0 0.0
      %1731 = vmatpush2.msra.mxu0 0.0
      %1732 = vmatprep.subr.mxu0 0.0
      %1733 = vmatpush2.msra.mxu0 0.0
      %1734 = vmatprep.subr.mxu0 0.0
      %1735 = vmatpush2.msra.mxu0 0.0
      %1736 = vmatprep.subr.mxu0 0.0
      %1737 = vmatpush2.msra.mxu0 0.0
      %1738 = vmatprep.mubr.f32.mxu0 0.0
      %1739 = vmatmul.mubr.f32.gmra.mxu0 %v1672
      %v1740 = vpop.f32.mrf.mxu0
      %v1741 = vadd.f32 0.0, %v1740
      %v1742 = vpop.f32.mrf.mxu0
      %v1743 = vadd.f32 0.0, %v1742
      %1744 = vdwg.mxu0
      %v1746 = vsel %vm1522, %v1501, 0
      %1748 = vmatprep.subr.mxu0 0.0
      %1749 = vmatpush1.msra.mxu0 0.0
      %1750 = vmatprep.subr.mxu0 0.0
      %1751 = vmatpush1.msra.mxu0 0.0
      %1752 = vmatprep.subr.mxu0 0.0
      %1753 = vmatpush1.msra.mxu0 0.0
      %1754 = vmatprep.subr.mxu0 0.0
      %1755 = vmatpush1.msra.mxu0 0.0
      %1756 = vmatprep.subr.mxu0 0.0
      %1757 = vmatpush1.msra.mxu0 0.0
      %1758 = vmatprep.subr.mxu0 0.0
      %1759 = vmatpush1.msra.mxu0 0.0
      %1760 = vmatprep.subr.mxu0 0.0
      %1761 = vmatpush1.msra.mxu0 0.0
      %1762 = vmatprep.subr.mxu0 0.0
      %1763 = vmatpush1.msra.mxu0 0.0
      %1764 = vmatprep.subr.mxu0 0.0
      %1765 = vmatpush1.msra.mxu0 0.0
      %1766 = vmatprep.subr.mxu0 0.0
      %1767 = vmatpush1.msra.mxu0 0.0
      %1768 = vmatprep.subr.mxu0 0.0
      %1769 = vmatpush1.msra.mxu0 0.0
      %1770 = vmatprep.subr.mxu0 0.0
      %1771 = vmatpush1.msra.mxu0 0.0
      %1772 = vmatprep.subr.mxu0 0.0
      %1773 = vmatpush1.msra.mxu0 0.0
      %1774 = vmatprep.subr.mxu0 0.0
      %1775 = vmatpush1.msra.mxu0 0.0
      %1776 = vmatprep.subr.mxu0 0.0
      %1777 = vmatpush1.msra.mxu0 0.0
      %1778 = vmatprep.subr.mxu0 %v1513
      %1779 = vmatpush1.msra.mxu0 %v1512
      %1780 = vmatprep.subr.mxu0 0.0
      %1781 = vmatpush2.msra.mxu0 0.0
      %1782 = vmatprep.subr.mxu0 0.0
      %1783 = vmatpush2.msra.mxu0 0.0
      %1784 = vmatprep.subr.mxu0 0.0
      %1785 = vmatpush2.msra.mxu0 0.0
      %1786 = vmatprep.subr.mxu0 0.0
      %1787 = vmatpush2.msra.mxu0 0.0
      %1788 = vmatprep.subr.mxu0 0.0
      %1789 = vmatpush2.msra.mxu0 0.0
      %1790 = vmatprep.subr.mxu0 0.0
      %1791 = vmatpush2.msra.mxu0 0.0
      %1792 = vmatprep.subr.mxu0 0.0
      %1793 = vmatpush2.msra.mxu0 0.0
      %1794 = vmatprep.subr.mxu0 0.0
      %1795 = vmatpush2.msra.mxu0 0.0
      %1796 = vmatprep.subr.mxu0 0.0
      %1797 = vmatpush2.msra.mxu0 0.0
      %1798 = vmatprep.subr.mxu0 0.0
      %1799 = vmatpush2.msra.mxu0 0.0
      %1800 = vmatprep.subr.mxu0 0.0
      %1801 = vmatpush2.msra.mxu0 0.0
      %1802 = vmatprep.subr.mxu0 0.0
      %1803 = vmatpush2.msra.mxu0 0.0
      %1804 = vmatprep.subr.mxu0 0.0
      %1805 = vmatpush2.msra.mxu0 0.0
      %1806 = vmatprep.subr.mxu0 0.0
      %1807 = vmatpush2.msra.mxu0 0.0
      %1808 = vmatprep.subr.mxu0 0.0
      %1809 = vmatpush2.msra.mxu0 0.0
      %1810 = vmatprep.subr.mxu0 0.0
      %1811 = vmatpush2.msra.mxu0 0.0
      %1812 = vmatprep.mubr.f32.mxu0 0.0
      %1813 = vmatmul.mubr.f32.gmra.mxu0 %v1746
      %v1814 = vpop.f32.mrf.mxu0
      %v1815 = vadd.f32 0.0, %v1814
      %v1816 = vpop.f32.mrf.mxu0
      %v1817 = vadd.f32 0.0, %v1816
      %1818 = vdwg.mxu0
      %v1820 = vsel %vm1522, %v1502, 0
      %1822 = vmatprep.subr.mxu0 0.0
      %1823 = vmatpush1.msra.mxu0 0.0
      %1824 = vmatprep.subr.mxu0 0.0
      %1825 = vmatpush1.msra.mxu0 0.0
      %1826 = vmatprep.subr.mxu0 0.0
      %1827 = vmatpush1.msra.mxu0 0.0
      %1828 = vmatprep.subr.mxu0 0.0
      %1829 = vmatpush1.msra.mxu0 0.0
      %1830 = vmatprep.subr.mxu0 0.0
      %1831 = vmatpush1.msra.mxu0 0.0
      %1832 = vmatprep.subr.mxu0 0.0
      %1833 = vmatpush1.msra.mxu0 0.0
      %1834 = vmatprep.subr.mxu0 0.0
      %1835 = vmatpush1.msra.mxu0 0.0
      %1836 = vmatprep.subr.mxu0 0.0
      %1837 = vmatpush1.msra.mxu0 0.0
      %1838 = vmatprep.subr.mxu0 0.0
      %1839 = vmatpush1.msra.mxu0 0.0
      %1840 = vmatprep.subr.mxu0 0.0
      %1841 = vmatpush1.msra.mxu0 0.0
      %1842 = vmatprep.subr.mxu0 0.0
      %1843 = vmatpush1.msra.mxu0 0.0
      %1844 = vmatprep.subr.mxu0 0.0
      %1845 = vmatpush1.msra.mxu0 0.0
      %1846 = vmatprep.subr.mxu0 0.0
      %1847 = vmatpush1.msra.mxu0 0.0
      %1848 = vmatprep.subr.mxu0 0.0
      %1849 = vmatpush1.msra.mxu0 0.0
      %1850 = vmatprep.subr.mxu0 0.0
      %1851 = vmatpush1.msra.mxu0 0.0
      %1852 = vmatprep.subr.mxu0 %v1515
      %1853 = vmatpush1.msra.mxu0 %v1514
      %1854 = vmatprep.subr.mxu0 0.0
      %1855 = vmatpush2.msra.mxu0 0.0
      %1856 = vmatprep.subr.mxu0 0.0
      %1857 = vmatpush2.msra.mxu0 0.0
      %1858 = vmatprep.subr.mxu0 0.0
      %1859 = vmatpush2.msra.mxu0 0.0
      %1860 = vmatprep.subr.mxu0 0.0
      %1861 = vmatpush2.msra.mxu0 0.0
      %1862 = vmatprep.subr.mxu0 0.0
      %1863 = vmatpush2.msra.mxu0 0.0
      %1864 = vmatprep.subr.mxu0 0.0
      %1865 = vmatpush2.msra.mxu0 0.0
      %1866 = vmatprep.subr.mxu0 0.0
      %1867 = vmatpush2.msra.mxu0 0.0
      %1868 = vmatprep.subr.mxu0 0.0
      %1869 = vmatpush2.msra.mxu0 0.0
      %1870 = vmatprep.subr.mxu0 0.0
      %1871 = vmatpush2.msra.mxu0 0.0
      %1872 = vmatprep.subr.mxu0 0.0
      %1873 = vmatpush2.msra.mxu0 0.0
      %1874 = vmatprep.subr.mxu0 0.0
      %1875 = vmatpush2.msra.mxu0 0.0
      %1876 = vmatprep.subr.mxu0 0.0
      %1877 = vmatpush2.msra.mxu0 0.0
      %1878 = vmatprep.subr.mxu0 0.0
      %1879 = vmatpush2.msra.mxu0 0.0
      %1880 = vmatprep.subr.mxu0 0.0
      %1881 = vmatpush2.msra.mxu0 0.0
      %1882 = vmatprep.subr.mxu0 0.0
      %1883 = vmatpush2.msra.mxu0 0.0
      %1884 = vmatprep.subr.mxu0 0.0
      %1885 = vmatpush2.msra.mxu0 0.0
      %1886 = vmatprep.mubr.f32.mxu0 0.0
      %1887 = vmatmul.mubr.f32.gmra.mxu0 %v1820
      %v1888 = vpop.f32.mrf.mxu0
      %v1889 = vadd.f32 0.0, %v1888
      %v1890 = vpop.f32.mrf.mxu0
      %v1891 = vadd.f32 0.0, %v1890
      %1892 = vdwg.mxu0
      %v1894 = vsel %vm1522, %v1503, 0
      %1896 = vmatprep.subr.mxu0 0.0
      %1897 = vmatpush1.msra.mxu0 0.0
      %1898 = vmatprep.subr.mxu0 0.0
      %1899 = vmatpush1.msra.mxu0 0.0
      %1900 = vmatprep.subr.mxu0 0.0
      %1901 = vmatpush1.msra.mxu0 0.0
      %1902 = vmatprep.subr.mxu0 0.0
      %1903 = vmatpush1.msra.mxu0 0.0
      %1904 = vmatprep.subr.mxu0 0.0
      %1905 = vmatpush1.msra.mxu0 0.0
      %1906 = vmatprep.subr.mxu0 0.0
      %1907 = vmatpush1.msra.mxu0 0.0
      %1908 = vmatprep.subr.mxu0 0.0
      %1909 = vmatpush1.msra.mxu0 0.0
      %1910 = vmatprep.subr.mxu0 0.0
      %1911 = vmatpush1.msra.mxu0 0.0
      %1912 = vmatprep.subr.mxu0 0.0
      %1913 = vmatpush1.msra.mxu0 0.0
      %1914 = vmatprep.subr.mxu0 0.0
      %1915 = vmatpush1.msra.mxu0 0.0
      %1916 = vmatprep.subr.mxu0 0.0
      %1917 = vmatpush1.msra.mxu0 0.0
      %1918 = vmatprep.subr.mxu0 0.0
      %1919 = vmatpush1.msra.mxu0 0.0
      %1920 = vmatprep.subr.mxu0 0.0
      %1921 = vmatpush1.msra.mxu0 0.0
      %1922 = vmatprep.subr.mxu0 0.0
      %1923 = vmatpush1.msra.mxu0 0.0
      %1924 = vmatprep.subr.mxu0 0.0
      %1925 = vmatpush1.msra.mxu0 0.0
      %1926 = vmatprep.subr.mxu0 %v1517
      %1927 = vmatpush1.msra.mxu0 %v1516
      %1928 = vmatprep.subr.mxu0 0.0
      %1929 = vmatpush2.msra.mxu0 0.0
      %1930 = vmatprep.subr.mxu0 0.0
      %1931 = vmatpush2.msra.mxu0 0.0
      %1932 = vmatprep.subr.mxu0 0.0
      %1933 = vmatpush2.msra.mxu0 0.0
      %1934 = vmatprep.subr.mxu0 0.0
      %1935 = vmatpush2.msra.mxu0 0.0
      %1936 = vmatprep.subr.mxu0 0.0
      %1937 = vmatpush2.msra.mxu0 0.0
      %1938 = vmatprep.subr.mxu0 0.0
      %1939 = vmatpush2.msra.mxu0 0.0
      %1940 = vmatprep.subr.mxu0 0.0
      %1941 = vmatpush2.msra.mxu0 0.0
      %1942 = vmatprep.subr.mxu0 0.0
      %1943 = vmatpush2.msra.mxu0 0.0
      %1944 = vmatprep.subr.mxu0 0.0
      %1945 = vmatpush2.msra.mxu0 0.0
      %1946 = vmatprep.subr.mxu0 0.0
      %1947 = vmatpush2.msra.mxu0 0.0
      %1948 = vmatprep.subr.mxu0 0.0
      %1949 = vmatpush2.msra.mxu0 0.0
      %1950 = vmatprep.subr.mxu0 0.0
      %1951 = vmatpush2.msra.mxu0 0.0
      %1952 = vmatprep.subr.mxu0 0.0
      %1953 = vmatpush2.msra.mxu0 0.0
      %1954 = vmatprep.subr.mxu0 0.0
      %1955 = vmatpush2.msra.mxu0 0.0
      %1956 = vmatprep.subr.mxu0 0.0
      %1957 = vmatpush2.msra.mxu0 0.0
      %1958 = vmatprep.subr.mxu0 0.0
      %1959 = vmatpush2.msra.mxu0 0.0
      %1960 = vmatprep.mubr.f32.mxu0 0.0
      %1961 = vmatmul.mubr.f32.gmra.mxu0 %v1894
      %v1962 = vpop.f32.mrf.mxu0
      %v1963 = vadd.f32 0.0, %v1962
      %v1964 = vpop.f32.mrf.mxu0
      %v1965 = vadd.f32 0.0, %v1964
      %1966 = vdwg.mxu0
      %v1968 = vsel %vm1522, %v1504, 0
      %1970 = vmatprep.subr.mxu0 0.0
      %1971 = vmatpush1.msra.mxu0 0.0
      %1972 = vmatprep.subr.mxu0 0.0
      %1973 = vmatpush1.msra.mxu0 0.0
      %1974 = vmatprep.subr.mxu0 0.0
      %1975 = vmatpush1.msra.mxu0 0.0
      %1976 = vmatprep.subr.mxu0 0.0
      %1977 = vmatpush1.msra.mxu0 0.0
      %1978 = vmatprep.subr.mxu0 0.0
      %1979 = vmatpush1.msra.mxu0 0.0
      %1980 = vmatprep.subr.mxu0 0.0
      %1981 = vmatpush1.msra.mxu0 0.0
      %1982 = vmatprep.subr.mxu0 0.0
      %1983 = vmatpush1.msra.mxu0 0.0
      %1984 = vmatprep.subr.mxu0 0.0
      %1985 = vmatpush1.msra.mxu0 0.0
      %1986 = vmatprep.subr.mxu0 0.0
      %1987 = vmatpush1.msra.mxu0 0.0
      %1988 = vmatprep.subr.mxu0 0.0
      %1989 = vmatpush1.msra.mxu0 0.0
      %1990 = vmatprep.subr.mxu0 0.0
      %1991 = vmatpush1.msra.mxu0 0.0
      %1992 = vmatprep.subr.mxu0 0.0
      %1993 = vmatpush1.msra.mxu0 0.0
      %1994 = vmatprep.subr.mxu0 0.0
      %1995 = vmatpush1.msra.mxu0 0.0
      %1996 = vmatprep.subr.mxu0 0.0
      %1997 = vmatpush1.msra.mxu0 0.0
      %1998 = vmatprep.subr.mxu0 0.0
      %1999 = vmatpush1.msra.mxu0 0.0
      %2000 = vmatprep.subr.mxu0 %v1519
      %2001 = vmatpush1.msra.mxu0 %v1518
      %2002 = vmatprep.subr.mxu0 0.0
      %2003 = vmatpush2.msra.mxu0 0.0
      %2004 = vmatprep.subr.mxu0 0.0
      %2005 = vmatpush2.msra.mxu0 0.0
      %2006 = vmatprep.subr.mxu0 0.0
      %2007 = vmatpush2.msra.mxu0 0.0
      %2008 = vmatprep.subr.mxu0 0.0
      %2009 = vmatpush2.msra.mxu0 0.0
      %2010 = vmatprep.subr.mxu0 0.0
      %2011 = vmatpush2.msra.mxu0 0.0
      %2012 = vmatprep.subr.mxu0 0.0
      %2013 = vmatpush2.msra.mxu0 0.0
      %2014 = vmatprep.subr.mxu0 0.0
      %2015 = vmatpush2.msra.mxu0 0.0
      %2016 = vmatprep.subr.mxu0 0.0
      %2017 = vmatpush2.msra.mxu0 0.0
      %2018 = vmatprep.subr.mxu0 0.0
      %2019 = vmatpush2.msra.mxu0 0.0
      %2020 = vmatprep.subr.mxu0 0.0
      %2021 = vmatpush2.msra.mxu0 0.0
      %2022 = vmatprep.subr.mxu0 0.0
      %2023 = vmatpush2.msra.mxu0 0.0
      %2024 = vmatprep.subr.mxu0 0.0
      %2025 = vmatpush2.msra.mxu0 0.0
      %2026 = vmatprep.subr.mxu0 0.0
      %2027 = vmatpush2.msra.mxu0 0.0
      %2028 = vmatprep.subr.mxu0 0.0
      %2029 = vmatpush2.msra.mxu0 0.0
      %2030 = vmatprep.subr.mxu0 0.0
      %2031 = vmatpush2.msra.mxu0 0.0
      %2032 = vmatprep.subr.mxu0 0.0
      %2033 = vmatpush2.msra.mxu0 0.0
      %2034 = vmatprep.mubr.f32.mxu0 0.0
      %2035 = vmatmul.mubr.f32.gmra.mxu0 %v1968
      %v2036 = vpop.f32.mrf.mxu0
      %v2037 = vadd.f32 0.0, %v2036
      %v2038 = vpop.f32.mrf.mxu0
      %v2039 = vadd.f32 0.0, %v2038
      %2040 = vdwg.mxu0
      %v2042 = vsel %vm1522, %v1505, 0
      %2044 = vmatprep.subr.mxu0 0.0
      %2045 = vmatpush1.msra.mxu0 0.0
      %2046 = vmatprep.subr.mxu0 0.0
      %2047 = vmatpush1.msra.mxu0 0.0
      %2048 = vmatprep.subr.mxu0 0.0
      %2049 = vmatpush1.msra.mxu0 0.0
      %2050 = vmatprep.subr.mxu0 0.0
      %2051 = vmatpush1.msra.mxu0 0.0
      %2052 = vmatprep.subr.mxu0 0.0
      %2053 = vmatpush1.msra.mxu0 0.0
      %2054 = vmatprep.subr.mxu0 0.0
      %2055 = vmatpush1.msra.mxu0 0.0
      %2056 = vmatprep.subr.mxu0 0.0
      %2057 = vmatpush1.msra.mxu0 0.0
      %2058 = vmatprep.subr.mxu0 0.0
      %2059 = vmatpush1.msra.mxu0 0.0
      %2060 = vmatprep.subr.mxu0 0.0
      %2061 = vmatpush1.msra.mxu0 0.0
      %2062 = vmatprep.subr.mxu0 0.0
      %2063 = vmatpush1.msra.mxu0 0.0
      %2064 = vmatprep.subr.mxu0 0.0
      %2065 = vmatpush1.msra.mxu0 0.0
      %2066 = vmatprep.subr.mxu0 0.0
      %2067 = vmatpush1.msra.mxu0 0.0
      %2068 = vmatprep.subr.mxu0 0.0
      %2069 = vmatpush1.msra.mxu0 0.0
      %2070 = vmatprep.subr.mxu0 0.0
      %2071 = vmatpush1.msra.mxu0 0.0
      %2072 = vmatprep.subr.mxu0 0.0
      %2073 = vmatpush1.msra.mxu0 0.0
      %2074 = vmatprep.subr.mxu0 %v1521
      %2075 = vmatpush1.msra.mxu0 %v1520
      %2076 = vmatprep.subr.mxu0 0.0
      %2077 = vmatpush2.msra.mxu0 0.0
      %2078 = vmatprep.subr.mxu0 0.0
      %2079 = vmatpush2.msra.mxu0 0.0
      %2080 = vmatprep.subr.mxu0 0.0
      %2081 = vmatpush2.msra.mxu0 0.0
      %2082 = vmatprep.subr.mxu0 0.0
      %2083 = vmatpush2.msra.mxu0 0.0
      %2084 = vmatprep.subr.mxu0 0.0
      %2085 = vmatpush2.msra.mxu0 0.0
      %2086 = vmatprep.subr.mxu0 0.0
      %2087 = vmatpush2.msra.mxu0 0.0
      %2088 = vmatprep.subr.mxu0 0.0
      %2089 = vmatpush2.msra.mxu0 0.0
      %2090 = vmatprep.subr.mxu0 0.0
      %2091 = vmatpush2.msra.mxu0 0.0
      %2092 = vmatprep.subr.mxu0 0.0
      %2093 = vmatpush2.msra.mxu0 0.0
      %2094 = vmatprep.subr.mxu0 0.0
      %2095 = vmatpush2.msra.mxu0 0.0
      %2096 = vmatprep.subr.mxu0 0.0
      %2097 = vmatpush2.msra.mxu0 0.0
      %2098 = vmatprep.subr.mxu0 0.0
      %2099 = vmatpush2.msra.mxu0 0.0
      %2100 = vmatprep.subr.mxu0 0.0
      %2101 = vmatpush2.msra.mxu0 0.0
      %2102 = vmatprep.subr.mxu0 0.0
      %2103 = vmatpush2.msra.mxu0 0.0
      %2104 = vmatprep.subr.mxu0 0.0
      %2105 = vmatpush2.msra.mxu0 0.0
      %2106 = vmatprep.subr.mxu0 0.0
      %2107 = vmatpush2.msra.mxu0 0.0
      %2108 = vmatprep.mubr.f32.mxu0 0.0
      %2109 = vmatmul.mubr.f32.gmra.mxu0 %v2042
      %v2110 = vpop.f32.mrf.mxu0
      %v2111 = vadd.f32 0.0, %v2110
      %v2112 = vpop.f32.mrf.mxu0
      %v2113 = vadd.f32 0.0, %v2112
      %2114 = vdwg.mxu0
      %v2115 = vld [vmem:[%s5] sm:$0xff]
      %v2116 = vld [vmem:[%s5 + $0x8] sm:$0xff]
      %v2117 = vld [vmem:[%s5 + $0x10] sm:$0xff]
      %v2118 = vld [vmem:[%s5 + $0x18] sm:$0xff]
      %v2119 = vld [vmem:[%s5 + $0x20] sm:$0xff]
      %v2120 = vld [vmem:[%s5 + $0x28] sm:$0xff]
      %v2121 = vld [vmem:[%s5 + $0x30] sm:$0xff]
      %v2122 = vld [vmem:[%s5 + $0x38] sm:$0xff]
      %v2123 = vld [vmem:[%s5 + $0x40] sm:$0xff]
      %v2124 = vld [vmem:[%s5 + $0x48] sm:$0xff]
      %v2125 = vld [vmem:[%s5 + $0x50] sm:$0xff]
      %v2126 = vld [vmem:[%s5 + $0x58] sm:$0xff]
      %v2127 = vld [vmem:[%s5 + $0x60] sm:$0xff]
      %v2128 = vld [vmem:[%s5 + $0x68] sm:$0xff]
      %v2129 = vld [vmem:[%s5 + $0x70] sm:$0xff]
      %v2130 = vld [vmem:[%s5 + $0x78] sm:$0xff]
      %v2131 = vld [vmem:[%s6] sm:$0xff]
      %v2132 = vld [vmem:[%s6 + $0x8] sm:$0xff]
      %v2133 = vld [vmem:[%s6 + $0x10] sm:$0xff]
      %v2134 = vld [vmem:[%s6 + $0x18] sm:$0xff]
      %v2135 = vld [vmem:[%s6 + $0x20] sm:$0xff]
      %v2136 = vld [vmem:[%s6 + $0x28] sm:$0xff]
      %v2137 = vld [vmem:[%s6 + $0x30] sm:$0xff]
      %v2138 = vld [vmem:[%s6 + $0x38] sm:$0xff]
      %v2139 = vld [vmem:[%s6 + $0x40] sm:$0xff]
      %v2140 = vld [vmem:[%s6 + $0x48] sm:$0xff]
      %v2141 = vld [vmem:[%s6 + $0x50] sm:$0xff]
      %v2142 = vld [vmem:[%s6 + $0x58] sm:$0xff]
      %v2143 = vld [vmem:[%s6 + $0x60] sm:$0xff]
      %v2144 = vld [vmem:[%s6 + $0x68] sm:$0xff]
      %v2145 = vld [vmem:[%s6 + $0x70] sm:$0xff]
      %v2146 = vld [vmem:[%s6 + $0x78] sm:$0xff]
      %v2147 = vld [vmem:[%s6 + $0x80] sm:$0xff]
      %v2148 = vld [vmem:[%s6 + $0x88] sm:$0xff]
      %v2149 = vld [vmem:[%s6 + $0x90] sm:$0xff]
      %v2150 = vld [vmem:[%s6 + $0x98] sm:$0xff]
      %v2151 = vld [vmem:[%s6 + $0xa0] sm:$0xff]
      %v2152 = vld [vmem:[%s6 + $0xa8] sm:$0xff]
      %v2153 = vld [vmem:[%s6 + $0xb0] sm:$0xff]
      %v2154 = vld [vmem:[%s6 + $0xb8] sm:$0xff]
      %v2155 = vld [vmem:[%s6 + $0xc0] sm:$0xff]
      %v2156 = vld [vmem:[%s6 + $0xc8] sm:$0xff]
      %v2157 = vld [vmem:[%s6 + $0xd0] sm:$0xff]
      %v2158 = vld [vmem:[%s6 + $0xd8] sm:$0xff]
      %v2159 = vld [vmem:[%s6 + $0xe0] sm:$0xff]
      %v2160 = vld [vmem:[%s6 + $0xe8] sm:$0xff]
      %v2161 = vld [vmem:[%s6 + $0xf0] sm:$0xff]
      %v2162 = vld [vmem:[%s6 + $0xf8] sm:$0xff]
      %v2179 = vrot.slane %v1667, 7
      %vm2180 = vcmask 1041409
      %v2181 = vsel %vm2180, %v2179, %v1593
      %v2182 = vrot.slane %v1741, 6
      %vm2183 = vcmask 1042434
      %v2184 = vsel %vm2183, %v2182, %v2181
      %v2185 = vrot.slane %v1815, 5
      %vm2186 = vcmask 1043459
      %v2187 = vsel %vm2186, %v2185, %v2184
      %v2188 = vrot.slane %v1889, 4
      %vm2189 = vcmask 1044484
      %v2190 = vsel %vm2189, %v2188, %v2187
      %v2191 = vrot.slane %v1963, 3
      %vm2192 = vcmask 1045509
      %v2193 = vsel %vm2192, %v2191, %v2190
      %v2194 = vrot.slane %v2037, 2
      %vm2195 = vcmask 1046534
      %v2196 = vsel %vm2195, %v2194, %v2193
      %v2197 = vrot.slane %v2111, 1
      %vm2198 = vcmask 1047559
      %v2199 = vsel %vm2198, %v2197, %v2196
      %v2200 = vrot.slane %v1669, 7
      %v2201 = vsel %vm2180, %v2200, %v1595
      %v2202 = vrot.slane %v1743, 6
      %v2203 = vsel %vm2183, %v2202, %v2201
      %v2204 = vrot.slane %v1817, 5
      %v2205 = vsel %vm2186, %v2204, %v2203
      %v2206 = vrot.slane %v1891, 4
      %v2207 = vsel %vm2189, %v2206, %v2205
      %v2208 = vrot.slane %v1965, 3
      %v2209 = vsel %vm2192, %v2208, %v2207
      %v2210 = vrot.slane %v2039, 2
      %v2211 = vsel %vm2195, %v2210, %v2209
      %v2212 = vrot.slane %v2113, 1
      %v2213 = vsel %vm2198, %v2212, %v2211
      %2216 = vmatprep.subr.mxu0 0.0
      %2217 = vmatpush1.msra.mxu0 %v2146
      %2218 = vmatprep.subr.mxu0 0.0
      %2219 = vmatpush1.msra.mxu0 %v2145
      %2220 = vmatprep.subr.mxu0 0.0
      %2221 = vmatpush1.msra.mxu0 %v2144
      %2222 = vmatprep.subr.mxu0 0.0
      %2223 = vmatpush1.msra.mxu0 %v2143
      %2224 = vmatprep.subr.mxu0 0.0
      %2225 = vmatpush1.msra.mxu0 %v2142
      %2226 = vmatprep.subr.mxu0 0.0
      %2227 = vmatpush1.msra.mxu0 %v2141
      %2228 = vmatprep.subr.mxu0 0.0
      %2229 = vmatpush1.msra.mxu0 %v2140
      %2230 = vmatprep.subr.mxu0 0.0
      %2231 = vmatpush1.msra.mxu0 %v2139
      %2232 = vmatprep.subr.mxu0 0.0
      %2233 = vmatpush1.msra.mxu0 %v2138
      %2234 = vmatprep.subr.mxu0 0.0
      %2235 = vmatpush1.msra.mxu0 %v2137
      %2236 = vmatprep.subr.mxu0 0.0
      %2237 = vmatpush1.msra.mxu0 %v2136
      %2238 = vmatprep.subr.mxu0 0.0
      %2239 = vmatpush1.msra.mxu0 %v2135
      %2240 = vmatprep.subr.mxu0 0.0
      %2241 = vmatpush1.msra.mxu0 %v2134
      %2242 = vmatprep.subr.mxu0 0.0
      %2243 = vmatpush1.msra.mxu0 %v2133
      %2244 = vmatprep.subr.mxu0 0.0
      %2245 = vmatpush1.msra.mxu0 %v2132
      %2246 = vmatprep.subr.mxu0 0.0
      %2247 = vmatpush1.msra.mxu0 %v2131
      %2248 = vmatprep.subr.mxu0 0.0
      %2249 = vmatpush2.msra.mxu0 %v2162
      %2250 = vmatprep.subr.mxu0 0.0
      %2251 = vmatpush2.msra.mxu0 %v2161
      %2252 = vmatprep.subr.mxu0 0.0
      %2253 = vmatpush2.msra.mxu0 %v2160
      %2254 = vmatprep.subr.mxu0 0.0
      %2255 = vmatpush2.msra.mxu0 %v2159
      %2256 = vmatprep.subr.mxu0 0.0
      %2257 = vmatpush2.msra.mxu0 %v2158
      %2258 = vmatprep.subr.mxu0 0.0
      %2259 = vmatpush2.msra.mxu0 %v2157
      %2260 = vmatprep.subr.mxu0 0.0
      %2261 = vmatpush2.msra.mxu0 %v2156
      %2262 = vmatprep.subr.mxu0 0.0
      %2263 = vmatpush2.msra.mxu0 %v2155
      %2264 = vmatprep.subr.mxu0 0.0
      %2265 = vmatpush2.msra.mxu0 %v2154
      %2266 = vmatprep.subr.mxu0 0.0
      %2267 = vmatpush2.msra.mxu0 %v2153
      %2268 = vmatprep.subr.mxu0 0.0
      %2269 = vmatpush2.msra.mxu0 %v2152
      %2270 = vmatprep.subr.mxu0 0.0
      %2271 = vmatpush2.msra.mxu0 %v2151
      %2272 = vmatprep.subr.mxu0 0.0
      %2273 = vmatpush2.msra.mxu0 %v2150
      %2274 = vmatprep.subr.mxu0 0.0
      %2275 = vmatpush2.msra.mxu0 %v2149
      %2276 = vmatprep.subr.mxu0 0.0
      %2277 = vmatpush2.msra.mxu0 %v2148
      %2278 = vmatprep.subr.mxu0 0.0
      %2279 = vmatpush2.msra.mxu0 %v2147
      %2280 = vmatprep.mubr.f32.mxu0 %v2213
      %2281 = vmatmul.mubr.f32.gmra.mxu0 %v2199
      %v2282 = vpop.f32.mrf.mxu0
      %v2283 = vadd.f32 0.0, %v2282
      %v2284 = vpop.f32.mrf.mxu0
      %2285 = vdwg.mxu0
      %2286 = vmatprep.subr.mxu0 0.0
      %2287 = vmatpush1.msra.mxu0 %v2130
      %2288 = vmatprep.subr.mxu0 0.0
      %2289 = vmatpush1.msra.mxu0 %v2129
      %2290 = vmatprep.subr.mxu0 0.0
      %2291 = vmatpush1.msra.mxu0 %v2128
      %2292 = vmatprep.subr.mxu0 0.0
      %2293 = vmatpush1.msra.mxu0 %v2127
      %2294 = vmatprep.subr.mxu0 0.0
      %2295 = vmatpush1.msra.mxu0 %v2126
      %2296 = vmatprep.subr.mxu0 0.0
      %2297 = vmatpush1.msra.mxu0 %v2125
      %2298 = vmatprep.subr.mxu0 0.0
      %2299 = vmatpush1.msra.mxu0 %v2124
      %2300 = vmatprep.subr.mxu0 0.0
      %2301 = vmatpush1.msra.mxu0 %v2123
      %2302 = vmatprep.subr.mxu0 0.0
      %2303 = vmatpush1.msra.mxu0 %v2122
      %2304 = vmatprep.subr.mxu0 0.0
      %2305 = vmatpush1.msra.mxu0 %v2121
      %2306 = vmatprep.subr.mxu0 0.0
      %2307 = vmatpush1.msra.mxu0 %v2120
      %2308 = vmatprep.subr.mxu0 0.0
      %2309 = vmatpush1.msra.mxu0 %v2119
      %2310 = vmatprep.subr.mxu0 0.0
      %2311 = vmatpush1.msra.mxu0 %v2118
      %2312 = vmatprep.subr.mxu0 0.0
      %2313 = vmatpush1.msra.mxu0 %v2117
      %2314 = vmatprep.subr.mxu0 0.0
      %2315 = vmatpush1.msra.mxu0 %v2116
      %2316 = vmatprep.subr.mxu0 0.0
      %2317 = vmatpush1.msra.mxu0 %v2115
      %2318 = vmatprep.subr.mxu0 0.0
      %2319 = vmatpush2.msra.mxu0 0.0
      %2320 = vmatprep.subr.mxu0 0.0
      %2321 = vmatpush2.msra.mxu0 0.0
      %2322 = vmatprep.subr.mxu0 0.0
      %2323 = vmatpush2.msra.mxu0 0.0
      %2324 = vmatprep.subr.mxu0 0.0
      %2325 = vmatpush2.msra.mxu0 0.0
      %2326 = vmatprep.subr.mxu0 0.0
      %2327 = vmatpush2.msra.mxu0 0.0
      %2328 = vmatprep.subr.mxu0 0.0
      %2329 = vmatpush2.msra.mxu0 0.0
      %2330 = vmatprep.subr.mxu0 0.0
      %2331 = vmatpush2.msra.mxu0 0.0
      %2332 = vmatprep.subr.mxu0 0.0
      %2333 = vmatpush2.msra.mxu0 0.0
      %2334 = vmatprep.subr.mxu0 0.0
      %2335 = vmatpush2.msra.mxu0 0.0
      %2336 = vmatprep.subr.mxu0 0.0
      %2337 = vmatpush2.msra.mxu0 0.0
      %2338 = vmatprep.subr.mxu0 0.0
      %2339 = vmatpush2.msra.mxu0 0.0
      %2340 = vmatprep.subr.mxu0 0.0
      %2341 = vmatpush2.msra.mxu0 0.0
      %2342 = vmatprep.subr.mxu0 0.0
      %2343 = vmatpush2.msra.mxu0 0.0
      %2344 = vmatprep.subr.mxu0 0.0
      %2345 = vmatpush2.msra.mxu0 0.0
      %2346 = vmatprep.subr.mxu0 0.0
      %2347 = vmatpush2.msra.mxu0 0.0
      %2348 = vmatprep.subr.mxu0 0.0
      %2349 = vmatpush2.msra.mxu0 0.0
      %2350 = vmatprep.mubr.f32.mxu0 0.0
      %2351 = vmatmul.mubr.f32.gmra.mxu0 %v790
      %v2352 = vpop.f32.mrf.mxu0
      %v2353 = vadd.f32 %v2283, %v2352
      %v2354 = vpop.f32.mrf.mxu0
      %2355 = vdwg.mxu0
      %v2356 = vtanh.pop %v2353
      %2357 = vst [vmem:[#allocation2] sm:$0xff] %v790
      %2358 = vst [vmem:[#allocation3] sm:$0xff] %v788
      %2359 = vst [vmem:[#allocation4] sm:$0xff] %v2356
      %2360 = vst [vmem:[%s330] sm:$0xff] %v2356
      %p2361 = scmp.lt.s32.totalorder %s20, 7
      %s2362 = scalar_select %p2361, %s20, 7
      %s2363 = smul.addr %s2362, 8
      %s2364 = scalar_lea.vmem %s9, %s2363
      // Predicated region
      $region61: #{_lambda_.14} parent=55 // pred_check
        %p2365 = pneg %p232
      $region62: #{_lambda_.14} parent=55 // pred_check_branch
        %2367 = sbr.rel (%p2365) target = $region64
      $region63: #{_lambda_.14} parent=55 // pred_region
        _
      $region64: #{_lambda_.14} parent=55 // pred_fallthru
        _
    $region56: #{_lambda_.14} parent=5 // pred_fallthru
      _
    %p2368 = scmp.le.s32.totalorder 2, %s15
    // Predicated region
    $region65: #{_lambda_.14} parent=5 // pred_check
      %p2369 = pneg %p2368
    $region66: #{_lambda_.14} parent=5 // pred_check_branch
      %2371 = sbr.rel (%p2369) target = $region68
    $region67: #{_lambda_.14} parent=5 // pred_region
      %s2372 = ssub.s32 %s15, 2
      // Predicated region
      $region69: #{_lambda_.14} parent=67 // pred_check
        %p2373 = pneg %p238
      $region70: #{_lambda_.14} parent=67 // pred_check_branch
        %2375 = sbr.rel (%p2373) target = $region72
      $region71: #{_lambda_.14} parent=67 // pred_region
        %p2376 = scmp.lt.s32.totalorder %s21, 7
        %s2377 = scalar_select %p2376, %s21, 7
        %s2378 = smul.addr %s2377, 8
        %s2379 = scalar_lea.vmem %s9, %s2378
      $region72: #{_lambda_.14} parent=67 // pred_fallthru
        _
    $region68: #{_lambda_.14} parent=5 // pred_fallthru
      _
  $region6: #{_lambda_.14} parent=0 // loop_footer
    %s19 = sadd.s32 1, %s15
  $region7: #{_lambda_.14} parent=0 // loop_footer_branch
    %14 = sbr.rel target = $region3
  $region8: #{_lambda_.14} parent=0 // loop_exit
    _

</llo_original>
